<compile_context>
chip_gen: v5e
topology: v5e:2x2
jax: 0.10.0
libtpu: 0.0.40
codegen_flags: <defaults>
</compile_context>

<pallas_src>
import jax
import jax.numpy as jnp
from jax.experimental import pallas as pl
from jax.experimental.pallas import tpu as pltpu

HIDDEN = 768          # BERT hidden size
FC1_OUT = 2742        # text_fc1_out (logical)
FC2_OUT = 32          # text_fc2_out (logical)

FC1_PAD = 2816        # 22 * 128  — lane/sublane-aligned storage for fc1 out
FC2_PAD = 128         # lane-aligned storage for fc2 out
TN = 1408             # fc1-output / fc2-contraction tile (2816 / 1408 = 2 steps)
B_SUB = 8             # f32 sublane tile for the batch dimension


def _round_up(x, m):
    return (x + m - 1) // m * m


def _text_head_kernel(pooled_ref, w1_ref, b1_ref, w2_ref, b2_ref, out_ref):
    """Fused fc1 -> ReLU -> (dropout: identity) -> fc2 -> ReLU.

    Grid axis k tiles the fc1 output columns == fc2 contraction rows.
    out_ref (f32, revisited across k) is the resident accumulator for the
    (Bp, FC2_PAD) fc2 partial sums.
    """
    k = pl.program_id(0)

    @pl.when(k == 0)
    def _():
        out_ref[...] = jnp.zeros_like(out_ref)

    x = pooled_ref[...]                                                  # (Bp, 768) bf16
    h1 = jnp.dot(x, w1_ref[...], preferred_element_type=jnp.float32)     # (Bp, TN) f32
    h1 = jnp.maximum(h1 + b1_ref[...], 0.0)                              # fc1 bias + ReLU
    # dropout(p=0.4): identity in eval mode.
    out_ref[...] += jnp.dot(h1.astype(jnp.bfloat16), w2_ref[...],
                            preferred_element_type=jnp.float32)          # (Bp, FC2_PAD)

    @pl.when(k == pl.num_programs(0) - 1)
    def _():
        out_ref[...] = jnp.maximum(out_ref[...] + b2_ref[...], 0.0)      # fc2 bias + ReLU


def text_head(pooled, w1, b1, w2, b2):
    """pooled: (B, 768) f32 -> (B, 32) f32 via the fused, tiled Pallas kernel.

    w1: (768, FC1_PAD) bf16, b1: (1, FC1_PAD) f32,
    w2: (FC1_PAD, FC2_PAD) bf16, b2: (1, FC2_PAD) f32 — zero-padded beyond the
    logical 2742 / 32 extents.
    """
    B = pooled.shape[0]
    Bp = _round_up(max(B, 1), B_SUB)
    pooled_p = jnp.zeros((Bp, HIDDEN), jnp.bfloat16).at[:B].set(
        pooled.astype(jnp.bfloat16))

    out = pl.pallas_call(
        _text_head_kernel,
        out_shape=jax.ShapeDtypeStruct((Bp, FC2_PAD), jnp.float32),
        grid_spec=pltpu.PrefetchScalarGridSpec(
            num_scalar_prefetch=0,
            grid=(FC1_PAD // TN,),
            in_specs=[
                pl.BlockSpec((Bp, HIDDEN), lambda k: (0, 0)),    # pooled (resident)
                pl.BlockSpec((HIDDEN, TN), lambda k: (0, k)),    # w1 column stream
                pl.BlockSpec((1, TN), lambda k: (0, k)),         # b1 column stream
                pl.BlockSpec((TN, FC2_PAD), lambda k: (k, 0)),   # w2 row stream
                pl.BlockSpec((1, FC2_PAD), lambda k: (0, 0)),    # b2 (resident)
            ],
            out_specs=pl.BlockSpec((Bp, FC2_PAD), lambda k: (0, 0)),
        ),
        compiler_params=pltpu.CompilerParams(
            dimension_semantics=("arbitrary",),       # contraction / accumulator axis
            vmem_limit_bytes=16 << 20,
        ),
    )(pooled_p, w1, b1, w2, b2)
    return out[:B, :FC2_OUT]


def synthetic_bert_pooler(input_ids, attention_mask, emb, pool_w, pool_b):
    """Deterministic stand-in for BertModel(...)['pooler_output'].

    # TODO(synk): the pretrained 12-layer BERT encoder is not translatable
    # in-script; this uses embedding lookup + attention-masked mean pooling
    # + dense + tanh to produce a (B, 768) pooler_output with the same
    # shape/dtype contract.
    """
    tok = emb[input_ids]                                           # (B, L, 768)
    mask = attention_mask[..., None].astype(tok.dtype)             # (B, L, 1)
    summed = (tok * mask).sum(axis=1)
    denom = jnp.maximum(mask.sum(axis=1), 1.0)
    mean = summed / denom                                          # (B, 768)
    return jnp.tanh(mean @ pool_w + pool_b)                        # (B, 768)


@jax.jit
def text_encoder_forward(input_ids, attention_mask, params):
    pooled = synthetic_bert_pooler(
        input_ids, attention_mask,
        params["emb"], params["pool_w"], params["pool_b"])
    return text_head(pooled, params["w1"], params["b1"],
                     params["w2"], params["b2"])


def init_params(key, vocab_size=100):
    ks = jax.random.split(key, 4)
    scale = 0.02

    # Logical (unpadded, f32) parameters mirroring the torch module.
    w1 = scale * jax.random.normal(ks[2], (HIDDEN, FC1_OUT), jnp.float32)
    b1 = 0.01 * jnp.ones((FC1_OUT,), jnp.float32)
    w2 = scale * jax.random.normal(ks[3], (FC1_OUT, FC2_OUT), jnp.float32)
    b2 = 0.01 * jnp.ones((FC2_OUT,), jnp.float32)

    # Zero-pad to lane/sublane-aligned storage (padding entries MUST be zero so
    # they are inert through ReLU and the second matmul); weights in bf16.
    w1_p = jnp.zeros((HIDDEN, FC1_PAD), jnp.bfloat16).at[:, :FC1_OUT].set(
        w1.astype(jnp.bfloat16))
    b1_p = jnp.zeros((1, FC1_PAD), jnp.float32).at[:, :FC1_OUT].set(b1)
    w2_p = jnp.zeros((FC1_PAD, FC2_PAD), jnp.bfloat16).at[:FC1_OUT, :FC2_OUT].set(
        w2.astype(jnp.bfloat16))
    b2_p = jnp.zeros((1, FC2_PAD), jnp.float32).at[:, :FC2_OUT].set(b2)

    return {
        # stand-in BERT pooler params
        "emb":    scale * jax.random.normal(ks[0], (vocab_size, HIDDEN), jnp.float32),
        "pool_w": scale * jax.random.normal(ks[1], (HIDDEN, HIDDEN), jnp.float32),
        "pool_b": jnp.zeros((HIDDEN,), jnp.float32),
        # text_enc_fc1 / text_enc_fc2, stored [in, out], zero-padded, bf16
        "w1": w1_p, "b1": b1_p,
        "w2": w2_p, "b2": b2_p,
    }


if __name__ == "__main__":
    key = jax.random.PRNGKey(0)
    kp, kid, kmask = jax.random.split(key, 3)

    batch, seq_len, vocab = 2, 8, 100
    params = init_params(kp, vocab_size=vocab)

    input_ids = jax.random.randint(kid, (batch, seq_len), 0, vocab, dtype=jnp.int32)
    attention_mask = (jax.random.uniform(kmask, (batch, seq_len)) > 0.2).astype(jnp.int32)

    out = text_encoder_forward(input_ids, attention_mask, params)
    out = jax.block_until_ready(out)

    assert out.shape == (batch, FC2_OUT)
    assert out.dtype == jnp.float32

    # Pure-JAX reference of the head, mimicking the kernel's bf16 casts.
    pooled = synthetic_bert_pooler(input_ids, attention_mask,
                                   params["emb"], params["pool_w"], params["pool_b"])
    pooled_bf = pooled.astype(jnp.bfloat16).astype(jnp.float32)
    w1f = params["w1"][:, :FC1_OUT].astype(jnp.float32)
    w2f = params["w2"][:FC1_OUT, :FC2_OUT].astype(jnp.float32)
    h1 = jnp.maximum(
        jnp.dot(pooled_bf, w1f, precision=jax.lax.Precision.HIGHEST)
        + params["b1"][:, :FC1_OUT], 0.0)
    h1 = h1.astype(jnp.bfloat16).astype(jnp.float32)
    ref = jnp.maximum(
        jnp.dot(h1, w2f, precision=jax.lax.Precision.HIGHEST)
        + params["b2"][:, :FC2_OUT], 0.0)

    assert jnp.allclose(out, ref, atol=1e-3, rtol=1e-2), (
        float(jnp.max(jnp.abs(out - ref))))

    print("KERNEL_OK")
</pallas_src>

<mosaic_0001>
module attributes {stable_mosaic.version = 11 : i64} {
  func.func @_text_head_kernel(%arg0: i32, %arg1: memref<8x768xbf16, #tpu.memory_space<vmem>>, %arg2: memref<768x1408xbf16, #tpu.memory_space<vmem>>, %arg3: memref<1x1408xf32, #tpu.memory_space<vmem>>, %arg4: memref<1408x128xbf16, #tpu.memory_space<vmem>>, %arg5: memref<1x128xf32, #tpu.memory_space<vmem>>, %arg6: memref<8x128xf32, #tpu.memory_space<vmem>>) attributes {dimension_semantics = [#tpu.dimension_semantics<arbitrary>], iteration_bounds = array<i64: 2>, scalar_prefetch = 0 : i64, scratch_operands = 0 : i64, tpu.core_type = #tpu.core_type<tc>, window_params = [{pipeline_mode = #tpu.pipeline_mode<synchronous>, transform_indices = @transform_0, window_bounds = array<i64: 8, 768>}, {transform_indices = @transform_1, window_bounds = array<i64: 768, 1408>}, {transform_indices = @transform_2, window_bounds = array<i64: 1, 1408>}, {transform_indices = @transform_3, window_bounds = array<i64: 1408, 128>}, {pipeline_mode = #tpu.pipeline_mode<synchronous>, transform_indices = @transform_4, window_bounds = array<i64: 1, 128>}, {pipeline_mode = #tpu.pipeline_mode<synchronous>, transform_indices = @transform_5, window_bounds = array<i64: 8, 128>}]} {
    %c0_i32 = arith.constant 0 : i32
    %0 = arith.cmpi eq, %arg0, %c0_i32 : i32
    %1 = arith.extui %0 : i1 to i32
    %c0_i32_0 = arith.constant 0 : i32
    %2 = arith.cmpi ne, %1, %c0_i32_0 : i32
    scf.if %2 {
      %cst_15 = arith.constant 0.000000e+00 : f32
      %20 = vector.broadcast %cst_15 : f32 to vector<8x128xf32>
      %c0_16 = arith.constant 0 : index
      %c0_17 = arith.constant 0 : index
      %21 = vector.load %arg6[%c0_16, %c0_17] : memref<8x128xf32, #tpu.memory_space<vmem>>, vector<8x128xf32>
      tpu.vector_store %arg6[%c0_16, %c0_17], %20 {strides = array<i32>} : memref<8x128xf32, #tpu.memory_space<vmem>>, vector<8x128xf32>,
    } else {
    }
    %c0 = arith.constant 0 : index
    %c0_1 = arith.constant 0 : index
    %3 = vector.load %arg1[%c0, %c0_1] : memref<8x768xbf16, #tpu.memory_space<vmem>>, vector<8x768xbf16>
    %c0_2 = arith.constant 0 : index
    %c0_3 = arith.constant 0 : index
    %4 = vector.load %arg2[%c0_2, %c0_3] : memref<768x1408xbf16, #tpu.memory_space<vmem>>, vector<768x1408xbf16>
    %cst = arith.constant dense<0.000000e+00> : vector<8x1408xf32>
    %5 = tpu.matmul %3, %4, %cst {dimension_numbers = #tpu.dot_dimension_numbers<[1], [0], [0], [1], [0, 0, 1, 1], [], []>} : vector<8x768xbf16>, vector<768x1408xbf16>, vector<8x1408xf32> -> vector<8x1408xf32>
    %c0_4 = arith.constant 0 : index
    %c0_5 = arith.constant 0 : index
    %6 = vector.load %arg3[%c0_4, %c0_5] : memref<1x1408xf32, #tpu.memory_space<vmem>>, vector<1x1408xf32>
    %7 = vector.broadcast %6 : vector<1x1408xf32> to vector<8x1408xf32>
    %8 = arith.addf %5, %7 : vector<8x1408xf32>
    %cst_6 = arith.constant 0.000000e+00 : f32
    %9 = vector.broadcast %cst_6 : f32 to vector<8x1408xf32>
    %10 = arith.maximumf %8, %9 : vector<8x1408xf32>
    %c0_7 = arith.constant 0 : index
    %c0_8 = arith.constant 0 : index
    %11 = vector.load %arg6[%c0_7, %c0_8] : memref<8x128xf32, #tpu.memory_space<vmem>>, vector<8x128xf32>
    %12 = arith.truncf %10 : vector<8x1408xf32> to vector<8x1408xbf16>
    %c0_9 = arith.constant 0 : index
    %c0_10 = arith.constant 0 : index
    %13 = vector.load %arg4[%c0_9, %c0_10] : memref<1408x128xbf16, #tpu.memory_space<vmem>>, vector<1408x128xbf16>
    %cst_11 = arith.constant dense<0.000000e+00> : vector<8x128xf32>
    %14 = tpu.matmul %12, %13, %cst_11 {dimension_numbers = #tpu.dot_dimension_numbers<[1], [0], [0], [1], [0, 0, 1, 1], [], []>} : vector<8x1408xbf16>, vector<1408x128xbf16>, vector<8x128xf32> -> vector<8x128xf32>
    %15 = arith.addf %11, %14 : vector<8x128xf32>
    %c0_12 = arith.constant 0 : index
    %c0_13 = arith.constant 0 : index
    %16 = vector.load %arg6[%c0_12, %c0_13] : memref<8x128xf32, #tpu.memory_space<vmem>>, vector<8x128xf32>
    tpu.vector_store %arg6[%c0_12, %c0_13], %15 {strides = array<i32>} : memref<8x128xf32, #tpu.memory_space<vmem>>, vector<8x128xf32>,
    %c1_i32 = arith.constant 1 : i32
    %17 = arith.cmpi eq, %arg0, %c1_i32 : i32
    %18 = arith.extui %17 : i1 to i32
    %c0_i32_14 = arith.constant 0 : i32
    %19 = arith.cmpi ne, %18, %c0_i32_14 : i32
    scf.if %19 {
      %c0_15 = arith.constant 0 : index
      %c0_16 = arith.constant 0 : index
      %20 = vector.load %arg6[%c0_15, %c0_16] : memref<8x128xf32, #tpu.memory_space<vmem>>, vector<8x128xf32>
      %c0_17 = arith.constant 0 : index
      %c0_18 = arith.constant 0 : index
      %21 = vector.load %arg5[%c0_17, %c0_18] : memref<1x128xf32, #tpu.memory_space<vmem>>, vector<1x128xf32>
      %22 = vector.broadcast %21 : vector<1x128xf32> to vector<8x128xf32>
      %23 = arith.addf %20, %22 : vector<8x128xf32>
      %cst_19 = arith.constant 0.000000e+00 : f32
      %24 = vector.broadcast %cst_19 : f32 to vector<8x128xf32>
      %25 = arith.maximumf %23, %24 : vector<8x128xf32>
      %c0_20 = arith.constant 0 : index
      %c0_21 = arith.constant 0 : index
      %26 = vector.load %arg6[%c0_20, %c0_21] : memref<8x128xf32, #tpu.memory_space<vmem>>, vector<8x128xf32>
      tpu.vector_store %arg6[%c0_20, %c0_21], %25 {strides = array<i32>} : memref<8x128xf32, #tpu.memory_space<vmem>>, vector<8x128xf32>,
    } else {
    }
    return
  }
  func.func @transform_0(%arg0: i32) -> (i32, i32) {
    %c0_i32 = arith.constant 0 : i32
    %c0_i32_0 = arith.constant 0 : i32
    %c0_i32_1 = arith.constant 0 : i32
    return %c0_i32, %c0_i32_0 : i32, i32
  }
  func.func @transform_1(%arg0: i32) -> (i32, i32) {
    %c0_i32 = arith.constant 0 : i32
    %c0_i32_0 = arith.constant 0 : i32
    return %c0_i32, %arg0 : i32, i32
  }
  func.func @transform_2(%arg0: i32) -> (i32, i32) {
    %c0_i32 = arith.constant 0 : i32
    %c0_i32_0 = arith.constant 0 : i32
    return %c0_i32, %arg0 : i32, i32
  }
  func.func @transform_3(%arg0: i32) -> (i32, i32) {
    %c0_i32 = arith.constant 0 : i32
    %c0_i32_0 = arith.constant 0 : i32
    return %arg0, %c0_i32 : i32, i32
  }
  func.func @transform_4(%arg0: i32) -> (i32, i32) {
    %c0_i32 = arith.constant 0 : i32
    %c0_i32_0 = arith.constant 0 : i32
    %c0_i32_1 = arith.constant 0 : i32
    return %c0_i32, %c0_i32_0 : i32, i32
  }
  func.func @transform_5(%arg0: i32) -> (i32, i32) {
    %c0_i32 = arith.constant 0 : i32
    %c0_i32_0 = arith.constant 0 : i32
    %c0_i32_1 = arith.constant 0 : i32
    return %c0_i32, %c0_i32_0 : i32, i32
  }
}

</mosaic_0001>

<llo_original>
// kernel: text_encoder_forward.1
$region0: #{text_encoder_forward.1}
  #allocation0 [shape = 'u32[]', space=smem, size = 0x4, offset = 0x4, fixed_abs, tag = 'smem constant byte address 0x4 - core index']
  #allocation1 [shape = 'u32[72,128]{1,0:T(1,128)}', space=vmem, size = 0x9000, scoped, tag = 'internal scratch']
  %s0 = inlined_call_operand.vmem [shape: bf16[8,768], index: 0, kind: input, shape index: {}]
  %s1 = inlined_call_operand.hbm [shape: bf16[768,2816], index: 1, kind: input, shape index: {}]
  %s2 = inlined_call_operand.vmem [shape: f32[1,2816], index: 2, kind: input, shape index: {}]
  %s3 = inlined_call_operand.vmem [shape: bf16[2816,128], index: 3, kind: input, shape index: {}]
  %s4 = inlined_call_operand.vmem [shape: f32[1,128], index: 4, kind: input, shape index: {}]
  %s5 = inlined_call_operand.vmem [shape: f32[8,128], index: 5, kind: output, shape index: {}]
  %s6 = sld [smem:[#allocation0]]
  $region65: #{text_encoder_forward.1} parent=0
    _
  %s8 = ssub.s32 1, %s6
  %s9 = scalar_select 0, %s8, %s6
  $region1: #{text_encoder_forward.1} parent=0
    #allocation2 [shape = 'u8[4325376]{0}', space=vmem, size = 0x420000, scoped, tag = 'input window, operand 1']
    #allocation3 [shape = 's32[2]{0}', space=sflag, size = 0x8, scoped, tag = 'scoped memory for text_encoder_forward.1']
    %10 = vsyncpa [#allocation3], 0
    %s11 = scalar_lea.sflag [#allocation3], 1
    %12 = vsyncpa %s11, 0
    loop: start=0, step=1, limit=4
    $region2: #{text_encoder_forward.1} parent=1 // loop_pre_header
      _
    $region3: #{text_encoder_forward.1} parent=1 // loop_header
      %s14 = sphi 0, %s18
      %p15 = scmp.ge.s32.totalorder %s14, 4
      %s22 = sphi 0, %s22
      %s24 = sphi 0, %s22
      %s25 = sphi 0, %s24
      %s39 = sphi 0, %s25
      %s45 = sphi 0, %s47
      %s48 = sphi 0, %s45
      %s49 = sphi 0, %s48
      %s65 = sphi 0, %s49
      %s71 = sphi 0, %s73
      %s74 = sphi 0, %s71
      %s75 = sphi 0, %s74
      %s91 = sphi 0, %s75
      %s97 = sphi 0, %s99
      %s100 = sphi 0, %s97
      %s101 = sphi 0, %s100
      %s117 = sphi 0, %s101
      %s121 = sphi 0, %s121
      %s123 = sphi 0, %s121
      %s124 = sphi 0, %s123
      %s138 = sphi 0, %s124
      %s142 = sphi 0, %s142
      %s144 = sphi 0, %s142
      %s145 = sphi 0, %s144
      %s159 = sphi 0, %s145
    $region4: #{text_encoder_forward.1} parent=1 // loop_header_branch
      %17 = sbr.rel (%p15) target = $region8
    $region5: #{text_encoder_forward.1} parent=1 // loop_body
      %s19 = ssub.s32 %s14, 1
      %s20 = ssub.s32 %s14, 2
      %s21 = sadd.s32 %s14, 1
      %s23 = sadd.s32 %s22, 1
      %p26 = scmp.eq.s32.totalorder %s14, 1
      %p27 = scmp.ne.s32.totalorder %s22, %s24
      %p28 = scmp.eq.s32.totalorder %s14, 0
      %p29 = por %p27, %p28
      %p30 = scmp.ne.s32.totalorder %s22, %s24
      %p31 = scmp.eq.s32.totalorder %s19, 1
      %p32 = por %p30, %p31
      %p33 = scmp.ne.s32.totalorder %s24, %s25
      %p34 = scmp.eq.s32.totalorder %s19, 0
      %p35 = por %p33, %p34
      %p36 = scmp.ne.s32.totalorder %s24, %s25
      %p37 = scmp.eq.s32.totalorder %s20, 1
      %p38 = por %p36, %p37
      %p40 = scmp.ne.s32.totalorder %s25, %s39
      %p41 = scmp.eq.s32.totalorder %s20, 0
      %p42 = por %p40, %p41
      %s43 = ssub.s32 %s14, %s21
      %p44 = scmp.eq.s32.totalorder %s43, 0
      %s46 = sadd.s32 %s45, 1
      %s47 = scalar_select %p44, %s45, %s46
      %p50 = pneg %p44
      %p51 = scmp.eq.s32.totalorder %s14, 1
      %p52 = por %p50, %p51
      %p53 = scmp.ne.s32.totalorder %s45, %s48
      %p54 = scmp.eq.s32.totalorder %s14, 0
      %p55 = por %p53, %p54
      %p56 = scmp.ne.s32.totalorder %s45, %s48
      %p57 = scmp.eq.s32.totalorder %s19, 1
      %p58 = por %p56, %p57
      %p59 = scmp.ne.s32.totalorder %s48, %s49
      %p60 = scmp.eq.s32.totalorder %s19, 0
      %p61 = por %p59, %p60
      %p62 = scmp.ne.s32.totalorder %s48, %s49
      %p63 = scmp.eq.s32.totalorder %s20, 1
      %p64 = por %p62, %p63
      %p66 = scmp.ne.s32.totalorder %s49, %s65
      %p67 = scmp.eq.s32.totalorder %s20, 0
      %p68 = por %p66, %p67
      %s69 = ssub.s32 %s14, %s21
      %p70 = scmp.eq.s32.totalorder %s69, 0
      %s72 = sadd.s32 %s71, 1
      %s73 = scalar_select %p70, %s71, %s72
      %p76 = pneg %p70
      %p77 = scmp.eq.s32.totalorder %s14, 1
      %p78 = por %p76, %p77
      %p79 = scmp.ne.s32.totalorder %s71, %s74
      %p80 = scmp.eq.s32.totalorder %s14, 0
      %p81 = por %p79, %p80
      %p82 = scmp.ne.s32.totalorder %s71, %s74
      %p83 = scmp.eq.s32.totalorder %s19, 1
      %p84 = por %p82, %p83
      %p85 = scmp.ne.s32.totalorder %s74, %s75
      %p86 = scmp.eq.s32.totalorder %s19, 0
      %p87 = por %p85, %p86
      %p88 = scmp.ne.s32.totalorder %s74, %s75
      %p89 = scmp.eq.s32.totalorder %s20, 1
      %p90 = por %p88, %p89
      %p92 = scmp.ne.s32.totalorder %s75, %s91
      %p93 = scmp.eq.s32.totalorder %s20, 0
      %p94 = por %p92, %p93
      %s95 = ssub.s32 %s14, %s21
      %p96 = scmp.eq.s32.totalorder %s95, 0
      %s98 = sadd.s32 %s97, 1
      %s99 = scalar_select %p96, %s97, %s98
      %p102 = pneg %p96
      %p103 = scmp.eq.s32.totalorder %s14, 1
      %p104 = por %p102, %p103
      %p105 = scmp.ne.s32.totalorder %s97, %s100
      %p106 = scmp.eq.s32.totalorder %s14, 0
      %p107 = por %p105, %p106
      %p108 = scmp.ne.s32.totalorder %s97, %s100
      %p109 = scmp.eq.s32.totalorder %s19, 1
      %p110 = por %p108, %p109
      %p111 = scmp.ne.s32.totalorder %s100, %s101
      %p112 = scmp.eq.s32.totalorder %s19, 0
      %p113 = por %p111, %p112
      %p114 = scmp.ne.s32.totalorder %s100, %s101
      %p115 = scmp.eq.s32.totalorder %s20, 1
      %p116 = por %p114, %p115
      %p118 = scmp.ne.s32.totalorder %s101, %s117
      %p119 = scmp.eq.s32.totalorder %s20, 0
      %p120 = por %p118, %p119
      %s122 = sadd.s32 %s121, 1
      %p125 = scmp.eq.s32.totalorder %s14, 1
      %p126 = scmp.ne.s32.totalorder %s121, %s123
      %p127 = scmp.eq.s32.totalorder %s14, 0
      %p128 = por %p126, %p127
      %p129 = scmp.ne.s32.totalorder %s121, %s123
      %p130 = scmp.eq.s32.totalorder %s19, 1
      %p131 = por %p129, %p130
      %p132 = scmp.ne.s32.totalorder %s123, %s124
      %p133 = scmp.eq.s32.totalorder %s19, 0
      %p134 = por %p132, %p133
      %p135 = scmp.ne.s32.totalorder %s123, %s124
      %p136 = scmp.eq.s32.totalorder %s20, 1
      %p137 = por %p135, %p136
      %p139 = scmp.ne.s32.totalorder %s124, %s138
      %p140 = scmp.eq.s32.totalorder %s20, 0
      %p141 = por %p139, %p140
      %s143 = sadd.s32 %s142, 1
      %p146 = scmp.eq.s32.totalorder %s14, 1
      %p147 = scmp.ne.s32.totalorder %s142, %s144
      %p148 = scmp.eq.s32.totalorder %s14, 0
      %p149 = por %p147, %p148
      %p150 = scmp.ne.s32.totalorder %s142, %s144
      %p151 = scmp.eq.s32.totalorder %s19, 1
      %p152 = por %p150, %p151
      %p153 = scmp.ne.s32.totalorder %s144, %s145
      %p154 = scmp.eq.s32.totalorder %s19, 0
      %p155 = por %p153, %p154
      %p156 = scmp.ne.s32.totalorder %s144, %s145
      %p157 = scmp.eq.s32.totalorder %s20, 1
      %p158 = por %p156, %p157
      %p160 = scmp.ne.s32.totalorder %s145, %s159
      %p161 = scmp.eq.s32.totalorder %s20, 0
      %p162 = por %p160, %p161
      %p163 = scmp.le.s32.totalorder 1, %s14
      %p164 = scmp.lt.s32.totalorder %s14, 3
      %p165 = pnand %p163, %p164
      %p166 = pneg %p165
      // Predicated region
      $region9: #{text_encoder_forward.1} parent=5 // pred_check
        _
      $region10: #{text_encoder_forward.1} parent=5 // pred_check_branch
        %168 = sbr.rel (%p165) target = $region12
      $region11: #{text_encoder_forward.1} parent=5 // pred_region
        %s169 = ssub.s32 %s14, 1
        // Predicated region
        $region13: #{text_encoder_forward.1} parent=11 // pred_check
          %p170 = pneg %p35
        $region14: #{text_encoder_forward.1} parent=11 // pred_check_branch
          %172 = sbr.rel (%p170) target = $region16
        $region15: #{text_encoder_forward.1} parent=11 // pred_region
          _
        $region16: #{text_encoder_forward.1} parent=11 // pred_fallthru
          _
        // Predicated region
        $region17: #{text_encoder_forward.1} parent=11 // pred_check
          %p173 = pneg %p134
        $region18: #{text_encoder_forward.1} parent=11 // pred_check_branch
          %175 = sbr.rel (%p173) target = $region20
        $region19: #{text_encoder_forward.1} parent=11 // pred_region
          _
        $region20: #{text_encoder_forward.1} parent=11 // pred_fallthru
          _
      $region12: #{text_encoder_forward.1} parent=5 // pred_fallthru
        _
      %p176 = scmp.lt.s32.totalorder %s14, 2
      // Predicated region
      $region21: #{text_encoder_forward.1} parent=5 // pred_check
        %p177 = pneg %p176
      $region22: #{text_encoder_forward.1} parent=5 // pred_check_branch
        %179 = sbr.rel (%p177) target = $region24
      $region23: #{text_encoder_forward.1} parent=5 // pred_region
        // Predicated region
        $region25: #{text_encoder_forward.1} parent=23 // pred_check
          %p180 = pneg %p55
        $region26: #{text_encoder_forward.1} parent=23 // pred_check_branch
          %182 = sbr.rel (%p180) target = $region28
        $region27: #{text_encoder_forward.1} parent=23 // pred_region
          %s183 = sand.u32 %s45, 1
          %s184 = scalar_lea.sflag [#allocation3], %s183
          %s185 = sand.u32 %s45, 1
          %s186 = smul.addr %s185, 4224
          %s187 = scalar_lea.vmem [#allocation2], %s186
          %s188 = smul.u32 11, %s14
          %190 = vsyncadd %s184, 0
          %s191 = smul.addr %s188, 4
          %s192 = scalar_lea.hbm %s1, %s191
          %s193 = sshll.u32 %s192, 4
          %s194 = int_to_ptr.hbm [resolvable:$true] %s193
          %s195 = sshll.u32 %s187, 4
          %s196 = int_to_ptr.vmem [resolvable:$true] %s195
          %201 = dma.hbm_to_vmem [thread:$0]  %s194, 67584, %s196, %s184, 1408, 704, 44
        $region28: #{text_encoder_forward.1} parent=23 // pred_fallthru
          _
        // Predicated region
        $region29: #{text_encoder_forward.1} parent=23 // pred_check
          %p202 = pneg %p81
        $region30: #{text_encoder_forward.1} parent=23 // pred_check_branch
          %204 = sbr.rel (%p202) target = $region32
        $region31: #{text_encoder_forward.1} parent=23 // pred_region
          %s205 = smul.u32 11, %s14
          %p206 = scmp.lt.s32.totalorder %s205, 21
          %s207 = scalar_select %p206, %s205, 21
          %s208 = scalar_lea.vmem %s2, %s207
          %s209 = smul.u32 11, %s14
        $region32: #{text_encoder_forward.1} parent=23 // pred_fallthru
          _
        // Predicated region
        $region33: #{text_encoder_forward.1} parent=23 // pred_check
          %p210 = pneg %p107
        $region34: #{text_encoder_forward.1} parent=23 // pred_check_branch
          %212 = sbr.rel (%p210) target = $region36
        $region35: #{text_encoder_forward.1} parent=23 // pred_region
          %s213 = smul.u32 176, %s14
          %p214 = scmp.lt.s32.totalorder %s213, 351
          %s215 = scalar_select %p214, %s213, 351
          %s216 = smul.addr %s215, 4
          %s217 = scalar_lea.vmem %s3, %s216
          %s218 = smul.u32 176, %s14
        $region36: #{text_encoder_forward.1} parent=23 // pred_fallthru
          _
      $region24: #{text_encoder_forward.1} parent=5 // pred_fallthru
        _
      %p219 = scmp.le.s32.totalorder 1, %s14
      %p220 = scmp.lt.s32.totalorder %s14, 3
      %p221 = pnand %p219, %p220
      %p222 = pneg %p221
      // Predicated region
      $region37: #{text_encoder_forward.1} parent=5 // pred_check
        _
      $region38: #{text_encoder_forward.1} parent=5 // pred_check_branch
        %224 = sbr.rel (%p221) target = $region40
      $region39: #{text_encoder_forward.1} parent=5 // pred_region
        %s225 = ssub.s32 %s14, 1
        %s226 = sand.u32 %s48, 1
        %s227 = scalar_lea.sflag [#allocation3], %s226
        %s228 = sand.u32 %s48, 1
        %s229 = smul.addr %s228, 4224
        %s230 = scalar_lea.vmem [#allocation2], %s229
        // Predicated region
        $region41: #{text_encoder_forward.1} parent=39 // pred_check
          %p231 = pneg %p61
        $region42: #{text_encoder_forward.1} parent=39 // pred_check_branch
          %233 = sbr.rel (%p231) target = $region44
        $region43: #{text_encoder_forward.1} parent=39 // pred_region
          %235 = dma.done %s227, 67584
        $region44: #{text_encoder_forward.1} parent=39 // pred_fallthru
          _
        %p236 = pneg %p35
        %p237 = pneg %p32
        %s238 = sand.u32 %s48, 1
        %s239 = scalar_lea.sflag [#allocation3], %s238
        %s240 = sand.u32 %s48, 1
        %s241 = smul.addr %s240, 4224
        %s242 = scalar_lea.vmem [#allocation2], %s241
        %p243 = pneg %p61
        %p244 = pneg %p58
        %s245 = smul.u32 11, %s19
        %p246 = scmp.lt.s32.totalorder %s245, 21
        %s247 = scalar_select %p246, %s245, 21
        %s248 = scalar_lea.vmem %s2, %s247
        %p249 = pneg %p87
        %p250 = pneg %p84
        %s251 = smul.u32 176, %s19
        %p252 = scmp.lt.s32.totalorder %s251, 351
        %s253 = scalar_select %p252, %s251, 351
        %s254 = smul.addr %s253, 4
        %s255 = scalar_lea.vmem %s3, %s254
        %p256 = pneg %p113
        %p257 = pneg %p110
        %p258 = pneg %p134
        %p259 = pneg %p131
        %p260 = pneg %p155
        %p261 = pneg %p152
        %s262 = smul.u32 11, %s19
        %s263 = smul.u32 11, %s19
        %p264 = scmp.lt.s32.totalorder %s263, 21
        %s265 = scalar_select %p264, %s263, 21
        %s266 = scalar_lea.vmem %s2, %s265
        %s267 = smul.u32 11, %s19
        %s268 = smul.u32 176, %s19
        %p269 = scmp.lt.s32.totalorder %s268, 351
        %s270 = scalar_select %p269, %s268, 351
        %s271 = smul.addr %s270, 4
        %s272 = scalar_lea.vmem %s3, %s271
        %s273 = smul.u32 176, %s19
        %p274 = scmp.eq.s32.totalorder %s19, 0
        // Predicated region
        $region45: #{text_encoder_forward.1} parent=39 // pred_check
          %p275 = pneg %p274
        $region46: #{text_encoder_forward.1} parent=39 // pred_check_branch
          %277 = sbr.rel (%p275) target = $region48
        $region47: #{text_encoder_forward.1} parent=39 // pred_region
          %278 = vst [vmem:[%s5] sm:$0xff] 0.0
        $region48: #{text_encoder_forward.1} parent=39 // pred_fallthru
          _
        %v279 = vld [vmem:[%s0] sm:$0xff]
        %v280 = vld [vmem:[%s0 + $0x8] sm:$0xff]
        %v281 = vld [vmem:[%s0 + $0x10] sm:$0xff]
        %v282 = vld [vmem:[%s230] sm:$0xff]
        %v283 = vld [vmem:[%s230 + $0x8] sm:$0xff]
        %v284 = vld [vmem:[%s230 + $0x10] sm:$0xff]
        %v285 = vld [vmem:[%s230 + $0x18] sm:$0xff]
        %v286 = vld [vmem:[%s230 + $0x20] sm:$0xff]
        %v287 = vld [vmem:[%s230 + $0x28] sm:$0xf]
        %v288 = vld [vmem:[%s230 + $0x2c] sm:$0xff]
        %v289 = vld [vmem:[%s230 + $0x34] sm:$0xff]
        %v290 = vld [vmem:[%s230 + $0x3c] sm:$0xff]
        %v291 = vld [vmem:[%s230 + $0x44] sm:$0xff]
        %v292 = vld [vmem:[%s230 + $0x4c] sm:$0xff]
        %v293 = vld [vmem:[%s230 + $0x54] sm:$0xf]
        %v294 = vld [vmem:[%s230 + $0x58] sm:$0xff]
        %v295 = vld [vmem:[%s230 + $0x60] sm:$0xff]
        %v296 = vld [vmem:[%s230 + $0x68] sm:$0xff]
        %v297 = vld [vmem:[%s230 + $0x70] sm:$0xff]
        %v298 = vld [vmem:[%s230 + $0x78] sm:$0xff]
        %v299 = vld [vmem:[%s230 + $0x80] sm:$0xf]
        %v300 = vld [vmem:[%s230 + $0x84] sm:$0xff]
        %v301 = vld [vmem:[%s230 + $0x8c] sm:$0xff]
        %v302 = vld [vmem:[%s230 + $0x94] sm:$0xff]
        %v303 = vld [vmem:[%s230 + $0x9c] sm:$0xff]
        %v304 = vld [vmem:[%s230 + $0xa4] sm:$0xff]
        %v305 = vld [vmem:[%s230 + $0xac] sm:$0xf]
        %v306 = vld [vmem:[%s230 + $0xb0] sm:$0xff]
        %v307 = vld [vmem:[%s230 + $0xb8] sm:$0xff]
        %v308 = vld [vmem:[%s230 + $0xc0] sm:$0xff]
        %v309 = vld [vmem:[%s230 + $0xc8] sm:$0xff]
        %v310 = vld [vmem:[%s230 + $0xd0] sm:$0xff]
        %v311 = vld [vmem:[%s230 + $0xd8] sm:$0xf]
        %v312 = vld [vmem:[%s230 + $0xdc] sm:$0xff]
        %v313 = vld [vmem:[%s230 + $0xe4] sm:$0xff]
        %v314 = vld [vmem:[%s230 + $0xec] sm:$0xff]
        %v315 = vld [vmem:[%s230 + $0xf4] sm:$0xff]
        %v316 = vld [vmem:[%s230 + $0xfc] sm:$0xff]
        %v317 = vld [vmem:[%s230 + $0x104] sm:$0xf]
        %v318 = vld [vmem:[%s230 + $0x108] sm:$0xff]
        %v319 = vld [vmem:[%s230 + $0x110] sm:$0xff]
        %v320 = vld [vmem:[%s230 + $0x118] sm:$0xff]
        %v321 = vld [vmem:[%s230 + $0x120] sm:$0xff]
        %v322 = vld [vmem:[%s230 + $0x128] sm:$0xff]
        %v323 = vld [vmem:[%s230 + $0x130] sm:$0xf]
        %v324 = vld [vmem:[%s230 + $0x134] sm:$0xff]
        %v325 = vld [vmem:[%s230 + $0x13c] sm:$0xff]
        %v326 = vld [vmem:[%s230 + $0x144] sm:$0xff]
        %v327 = vld [vmem:[%s230 + $0x14c] sm:$0xff]
        %v328 = vld [vmem:[%s230 + $0x154] sm:$0xff]
        %v329 = vld [vmem:[%s230 + $0x15c] sm:$0xf]
        %v330 = vld [vmem:[%s230 + $0x160] sm:$0xff]
        %v331 = vld [vmem:[%s230 + $0x168] sm:$0xff]
        %v332 = vld [vmem:[%s230 + $0x170] sm:$0xff]
        %v333 = vld [vmem:[%s230 + $0x178] sm:$0xff]
        %v334 = vld [vmem:[%s230 + $0x180] sm:$0xff]
        %v335 = vld [vmem:[%s230 + $0x188] sm:$0xf]
        %v336 = vld [vmem:[%s230 + $0x18c] sm:$0xff]
        %v337 = vld [vmem:[%s230 + $0x194] sm:$0xff]
        %v338 = vld [vmem:[%s230 + $0x19c] sm:$0xff]
        %v339 = vld [vmem:[%s230 + $0x1a4] sm:$0xff]
        %v340 = vld [vmem:[%s230 + $0x1ac] sm:$0xff]
        %v341 = vld [vmem:[%s230 + $0x1b4] sm:$0xf]
        %v342 = vld [vmem:[%s230 + $0x1b8] sm:$0xff]
        %v343 = vld [vmem:[%s230 + $0x1c0] sm:$0xff]
        %v344 = vld [vmem:[%s230 + $0x1c8] sm:$0xff]
        %v345 = vld [vmem:[%s230 + $0x1d0] sm:$0xff]
        %v346 = vld [vmem:[%s230 + $0x1d8] sm:$0xff]
        %v347 = vld [vmem:[%s230 + $0x1e0] sm:$0xf]
        %v348 = vld [vmem:[%s230 + $0x1e4] sm:$0xff]
        %v349 = vld [vmem:[%s230 + $0x1ec] sm:$0xff]
        %v350 = vld [vmem:[%s230 + $0x1f4] sm:$0xff]
        %v351 = vld [vmem:[%s230 + $0x1fc] sm:$0xff]
        %v352 = vld [vmem:[%s230 + $0x204] sm:$0xff]
        %v353 = vld [vmem:[%s230 + $0x20c] sm:$0xf]
        %v354 = vld [vmem:[%s230 + $0x210] sm:$0xff]
        %v355 = vld [vmem:[%s230 + $0x218] sm:$0xff]
        %v356 = vld [vmem:[%s230 + $0x220] sm:$0xff]
        %v357 = vld [vmem:[%s230 + $0x228] sm:$0xff]
        %v358 = vld [vmem:[%s230 + $0x230] sm:$0xff]
        %v359 = vld [vmem:[%s230 + $0x238] sm:$0xf]
        %v360 = vld [vmem:[%s230 + $0x23c] sm:$0xff]
        %v361 = vld [vmem:[%s230 + $0x244] sm:$0xff]
        %v362 = vld [vmem:[%s230 + $0x24c] sm:$0xff]
        %v363 = vld [vmem:[%s230 + $0x254] sm:$0xff]
        %v364 = vld [vmem:[%s230 + $0x25c] sm:$0xff]
        %v365 = vld [vmem:[%s230 + $0x264] sm:$0xf]
        %v366 = vld [vmem:[%s230 + $0x268] sm:$0xff]
        %v367 = vld [vmem:[%s230 + $0x270] sm:$0xff]
        %v368 = vld [vmem:[%s230 + $0x278] sm:$0xff]
        %v369 = vld [vmem:[%s230 + $0x280] sm:$0xff]
        %v370 = vld [vmem:[%s230 + $0x288] sm:$0xff]
        %v371 = vld [vmem:[%s230 + $0x290] sm:$0xf]
        %v372 = vld [vmem:[%s230 + $0x294] sm:$0xff]
        %v373 = vld [vmem:[%s230 + $0x29c] sm:$0xff]
        %v374 = vld [vmem:[%s230 + $0x2a4] sm:$0xff]
        %v375 = vld [vmem:[%s230 + $0x2ac] sm:$0xff]
        %v376 = vld [vmem:[%s230 + $0x2b4] sm:$0xff]
        %v377 = vld [vmem:[%s230 + $0x2bc] sm:$0xf]
        %v378 = vld [vmem:[%s230 + $0x2c0] sm:$0xff]
        %v379 = vld [vmem:[%s230 + $0x2c8] sm:$0xff]
        %v380 = vld [vmem:[%s230 + $0x2d0] sm:$0xff]
        %v381 = vld [vmem:[%s230 + $0x2d8] sm:$0xff]
        %v382 = vld [vmem:[%s230 + $0x2e0] sm:$0xff]
        %v383 = vld [vmem:[%s230 + $0x2e8] sm:$0xf]
        %v384 = vld [vmem:[%s230 + $0x2ec] sm:$0xff]
        %v385 = vld [vmem:[%s230 + $0x2f4] sm:$0xff]
        %v386 = vld [vmem:[%s230 + $0x2fc] sm:$0xff]
        %v387 = vld [vmem:[%s230 + $0x304] sm:$0xff]
        %v388 = vld [vmem:[%s230 + $0x30c] sm:$0xff]
        %v389 = vld [vmem:[%s230 + $0x314] sm:$0xf]
        %v390 = vld [vmem:[%s230 + $0x318] sm:$0xff]
        %v391 = vld [vmem:[%s230 + $0x320] sm:$0xff]
        %v392 = vld [vmem:[%s230 + $0x328] sm:$0xff]
        %v393 = vld [vmem:[%s230 + $0x330] sm:$0xff]
        %v394 = vld [vmem:[%s230 + $0x338] sm:$0xff]
        %v395 = vld [vmem:[%s230 + $0x340] sm:$0xf]
        %v396 = vld [vmem:[%s230 + $0x344] sm:$0xff]
        %v397 = vld [vmem:[%s230 + $0x34c] sm:$0xff]
        %v398 = vld [vmem:[%s230 + $0x354] sm:$0xff]
        %v399 = vld [vmem:[%s230 + $0x35c] sm:$0xff]
        %v400 = vld [vmem:[%s230 + $0x364] sm:$0xff]
        %v401 = vld [vmem:[%s230 + $0x36c] sm:$0xf]
        %v402 = vld [vmem:[%s230 + $0x370] sm:$0xff]
        %v403 = vld [vmem:[%s230 + $0x378] sm:$0xff]
        %v404 = vld [vmem:[%s230 + $0x380] sm:$0xff]
        %v405 = vld [vmem:[%s230 + $0x388] sm:$0xff]
        %v406 = vld [vmem:[%s230 + $0x390] sm:$0xff]
        %v407 = vld [vmem:[%s230 + $0x398] sm:$0xf]
        %v408 = vld [vmem:[%s230 + $0x39c] sm:$0xff]
        %v409 = vld [vmem:[%s230 + $0x3a4] sm:$0xff]
        %v410 = vld [vmem:[%s230 + $0x3ac] sm:$0xff]
        %v411 = vld [vmem:[%s230 + $0x3b4] sm:$0xff]
        %v412 = vld [vmem:[%s230 + $0x3bc] sm:$0xff]
        %v413 = vld [vmem:[%s230 + $0x3c4] sm:$0xf]
        %v414 = vld [vmem:[%s230 + $0x3c8] sm:$0xff]
        %v415 = vld [vmem:[%s230 + $0x3d0] sm:$0xff]
        %v416 = vld [vmem:[%s230 + $0x3d8] sm:$0xff]
        %v417 = vld [vmem:[%s230 + $0x3e0] sm:$0xff]
        %v418 = vld [vmem:[%s230 + $0x3e8] sm:$0xff]
        %v419 = vld [vmem:[%s230 + $0x3f0] sm:$0xf]
        %v420 = vld [vmem:[%s230 + $0x3f4] sm:$0xff]
        %v421 = vld [vmem:[%s230 + $0x3fc] sm:$0xff]
        %v422 = vld [vmem:[%s230 + $0x404] sm:$0xff]
        %v423 = vld [vmem:[%s230 + $0x40c] sm:$0xff]
        %v424 = vld [vmem:[%s230 + $0x414] sm:$0xff]
        %v425 = vld [vmem:[%s230 + $0x41c] sm:$0xf]
        %v426 = vld [vmem:[%s230 + $0x420] sm:$0xff]
        %v427 = vld [vmem:[%s230 + $0x428] sm:$0xff]
        %v428 = vld [vmem:[%s230 + $0x430] sm:$0xff]
        %v429 = vld [vmem:[%s230 + $0x438] sm:$0xff]
        %v430 = vld [vmem:[%s230 + $0x440] sm:$0xff]
        %v431 = vld [vmem:[%s230 + $0x448] sm:$0xf]
        %v432 = vld [vmem:[%s230 + $0x44c] sm:$0xff]
        %v433 = vld [vmem:[%s230 + $0x454] sm:$0xff]
        %v434 = vld [vmem:[%s230 + $0x45c] sm:$0xff]
        %v435 = vld [vmem:[%s230 + $0x464] sm:$0xff]
        %v436 = vld [vmem:[%s230 + $0x46c] sm:$0xff]
        %v437 = vld [vmem:[%s230 + $0x474] sm:$0xf]
        %v438 = vld [vmem:[%s230 + $0x478] sm:$0xff]
        %v439 = vld [vmem:[%s230 + $0x480] sm:$0xff]
        %v440 = vld [vmem:[%s230 + $0x488] sm:$0xff]
        %v441 = vld [vmem:[%s230 + $0x490] sm:$0xff]
        %v442 = vld [vmem:[%s230 + $0x498] sm:$0xff]
        %v443 = vld [vmem:[%s230 + $0x4a0] sm:$0xf]
        %v444 = vld [vmem:[%s230 + $0x4a4] sm:$0xff]
        %v445 = vld [vmem:[%s230 + $0x4ac] sm:$0xff]
        %v446 = vld [vmem:[%s230 + $0x4b4] sm:$0xff]
        %v447 = vld [vmem:[%s230 + $0x4bc] sm:$0xff]
        %v448 = vld [vmem:[%s230 + $0x4c4] sm:$0xff]
        %v449 = vld [vmem:[%s230 + $0x4cc] sm:$0xf]
        %v450 = vld [vmem:[%s230 + $0x4d0] sm:$0xff]
        %v451 = vld [vmem:[%s230 + $0x4d8] sm:$0xff]
        %v452 = vld [vmem:[%s230 + $0x4e0] sm:$0xff]
        %v453 = vld [vmem:[%s230 + $0x4e8] sm:$0xff]
        %v454 = vld [vmem:[%s230 + $0x4f0] sm:$0xff]
        %v455 = vld [vmem:[%s230 + $0x4f8] sm:$0xf]
        %v456 = vld [vmem:[%s230 + $0x4fc] sm:$0xff]
        %v457 = vld [vmem:[%s230 + $0x504] sm:$0xff]
        %v458 = vld [vmem:[%s230 + $0x50c] sm:$0xff]
        %v459 = vld [vmem:[%s230 + $0x514] sm:$0xff]
        %v460 = vld [vmem:[%s230 + $0x51c] sm:$0xff]
        %v461 = vld [vmem:[%s230 + $0x524] sm:$0xf]
        %v462 = vld [vmem:[%s230 + $0x528] sm:$0xff]
        %v463 = vld [vmem:[%s230 + $0x530] sm:$0xff]
        %v464 = vld [vmem:[%s230 + $0x538] sm:$0xff]
        %v465 = vld [vmem:[%s230 + $0x540] sm:$0xff]
        %v466 = vld [vmem:[%s230 + $0x548] sm:$0xff]
        %v467 = vld [vmem:[%s230 + $0x550] sm:$0xf]
        %v468 = vld [vmem:[%s230 + $0x554] sm:$0xff]
        %v469 = vld [vmem:[%s230 + $0x55c] sm:$0xff]
        %v470 = vld [vmem:[%s230 + $0x564] sm:$0xff]
        %v471 = vld [vmem:[%s230 + $0x56c] sm:$0xff]
        %v472 = vld [vmem:[%s230 + $0x574] sm:$0xff]
        %v473 = vld [vmem:[%s230 + $0x57c] sm:$0xf]
        %v474 = vld [vmem:[%s230 + $0x580] sm:$0xff]
        %v475 = vld [vmem:[%s230 + $0x588] sm:$0xff]
        %v476 = vld [vmem:[%s230 + $0x590] sm:$0xff]
        %v477 = vld [vmem:[%s230 + $0x598] sm:$0xff]
        %v478 = vld [vmem:[%s230 + $0x5a0] sm:$0xff]
        %v479 = vld [vmem:[%s230 + $0x5a8] sm:$0xf]
        %v480 = vld [vmem:[%s230 + $0x5ac] sm:$0xff]
        %v481 = vld [vmem:[%s230 + $0x5b4] sm:$0xff]
        %v482 = vld [vmem:[%s230 + $0x5bc] sm:$0xff]
        %v483 = vld [vmem:[%s230 + $0x5c4] sm:$0xff]
        %v484 = vld [vmem:[%s230 + $0x5cc] sm:$0xff]
        %v485 = vld [vmem:[%s230 + $0x5d4] sm:$0xf]
        %v486 = vld [vmem:[%s230 + $0x5d8] sm:$0xff]
        %v487 = vld [vmem:[%s230 + $0x5e0] sm:$0xff]
        %v488 = vld [vmem:[%s230 + $0x5e8] sm:$0xff]
        %v489 = vld [vmem:[%s230 + $0x5f0] sm:$0xff]
        %v490 = vld [vmem:[%s230 + $0x5f8] sm:$0xff]
        %v491 = vld [vmem:[%s230 + $0x600] sm:$0xf]
        %v492 = vld [vmem:[%s230 + $0x604] sm:$0xff]
        %v493 = vld [vmem:[%s230 + $0x60c] sm:$0xff]
        %v494 = vld [vmem:[%s230 + $0x614] sm:$0xff]
        %v495 = vld [vmem:[%s230 + $0x61c] sm:$0xff]
        %v496 = vld [vmem:[%s230 + $0x624] sm:$0xff]
        %v497 = vld [vmem:[%s230 + $0x62c] sm:$0xf]
        %v498 = vld [vmem:[%s230 + $0x630] sm:$0xff]
        %v499 = vld [vmem:[%s230 + $0x638] sm:$0xff]
        %v500 = vld [vmem:[%s230 + $0x640] sm:$0xff]
        %v501 = vld [vmem:[%s230 + $0x648] sm:$0xff]
        %v502 = vld [vmem:[%s230 + $0x650] sm:$0xff]
        %v503 = vld [vmem:[%s230 + $0x658] sm:$0xf]
        %v504 = vld [vmem:[%s230 + $0x65c] sm:$0xff]
        %v505 = vld [vmem:[%s230 + $0x664] sm:$0xff]
        %v506 = vld [vmem:[%s230 + $0x66c] sm:$0xff]
        %v507 = vld [vmem:[%s230 + $0x674] sm:$0xff]
        %v508 = vld [vmem:[%s230 + $0x67c] sm:$0xff]
        %v509 = vld [vmem:[%s230 + $0x684] sm:$0xf]
        %v510 = vld [vmem:[%s230 + $0x688] sm:$0xff]
        %v511 = vld [vmem:[%s230 + $0x690] sm:$0xff]
        %v512 = vld [vmem:[%s230 + $0x698] sm:$0xff]
        %v513 = vld [vmem:[%s230 + $0x6a0] sm:$0xff]
        %v514 = vld [vmem:[%s230 + $0x6a8] sm:$0xff]
        %v515 = vld [vmem:[%s230 + $0x6b0] sm:$0xf]
        %v516 = vld [vmem:[%s230 + $0x6b4] sm:$0xff]
        %v517 = vld [vmem:[%s230 + $0x6bc] sm:$0xff]
        %v518 = vld [vmem:[%s230 + $0x6c4] sm:$0xff]
        %v519 = vld [vmem:[%s230 + $0x6cc] sm:$0xff]
        %v520 = vld [vmem:[%s230 + $0x6d4] sm:$0xff]
        %v521 = vld [vmem:[%s230 + $0x6dc] sm:$0xf]
        %v522 = vld [vmem:[%s230 + $0x6e0] sm:$0xff]
        %v523 = vld [vmem:[%s230 + $0x6e8] sm:$0xff]
        %v524 = vld [vmem:[%s230 + $0x6f0] sm:$0xff]
        %v525 = vld [vmem:[%s230 + $0x6f8] sm:$0xff]
        %v526 = vld [vmem:[%s230 + $0x700] sm:$0xff]
        %v527 = vld [vmem:[%s230 + $0x708] sm:$0xf]
        %v528 = vld [vmem:[%s230 + $0x70c] sm:$0xff]
        %v529 = vld [vmem:[%s230 + $0x714] sm:$0xff]
        %v530 = vld [vmem:[%s230 + $0x71c] sm:$0xff]
        %v531 = vld [vmem:[%s230 + $0x724] sm:$0xff]
        %v532 = vld [vmem:[%s230 + $0x72c] sm:$0xff]
        %v533 = vld [vmem:[%s230 + $0x734] sm:$0xf]
        %v534 = vld [vmem:[%s230 + $0x738] sm:$0xff]
        %v535 = vld [vmem:[%s230 + $0x740] sm:$0xff]
        %v536 = vld [vmem:[%s230 + $0x748] sm:$0xff]
        %v537 = vld [vmem:[%s230 + $0x750] sm:$0xff]
        %v538 = vld [vmem:[%s230 + $0x758] sm:$0xff]
        %v539 = vld [vmem:[%s230 + $0x760] sm:$0xf]
        %v540 = vld [vmem:[%s230 + $0x764] sm:$0xff]
        %v541 = vld [vmem:[%s230 + $0x76c] sm:$0xff]
        %v542 = vld [vmem:[%s230 + $0x774] sm:$0xff]
        %v543 = vld [vmem:[%s230 + $0x77c] sm:$0xff]
        %v544 = vld [vmem:[%s230 + $0x784] sm:$0xff]
        %v545 = vld [vmem:[%s230 + $0x78c] sm:$0xf]
        %v546 = vld [vmem:[%s230 + $0x790] sm:$0xff]
        %v547 = vld [vmem:[%s230 + $0x798] sm:$0xff]
        %v548 = vld [vmem:[%s230 + $0x7a0] sm:$0xff]
        %v549 = vld [vmem:[%s230 + $0x7a8] sm:$0xff]
        %v550 = vld [vmem:[%s230 + $0x7b0] sm:$0xff]
        %v551 = vld [vmem:[%s230 + $0x7b8] sm:$0xf]
        %v552 = vld [vmem:[%s230 + $0x7bc] sm:$0xff]
        %v553 = vld [vmem:[%s230 + $0x7c4] sm:$0xff]
        %v554 = vld [vmem:[%s230 + $0x7cc] sm:$0xff]
        %v555 = vld [vmem:[%s230 + $0x7d4] sm:$0xff]
        %v556 = vld [vmem:[%s230 + $0x7dc] sm:$0xff]
        %v557 = vld [vmem:[%s230 + $0x7e4] sm:$0xf]
        %v558 = vld [vmem:[%s230 + $0x7e8] sm:$0xff]
        %v559 = vld [vmem:[%s230 + $0x7f0] sm:$0xff]
        %v560 = vld [vmem:[%s230 + $0x7f8] sm:$0xff]
        %v561 = vld [vmem:[%s230 + $0x800] sm:$0xff]
        %v562 = vld [vmem:[%s230 + $0x808] sm:$0xff]
        %v563 = vld [vmem:[%s230 + $0x810] sm:$0xf]
        %v564 = vld [vmem:[%s230 + $0x814] sm:$0xff]
        %v565 = vld [vmem:[%s230 + $0x81c] sm:$0xff]
        %v566 = vld [vmem:[%s230 + $0x824] sm:$0xff]
        %v567 = vld [vmem:[%s230 + $0x82c] sm:$0xff]
        %v568 = vld [vmem:[%s230 + $0x834] sm:$0xff]
        %v569 = vld [vmem:[%s230 + $0x83c] sm:$0xf]
        %v570 = vld [vmem:[%s230 + $0x840] sm:$0xff]
        %v571 = vld [vmem:[%s230 + $0x848] sm:$0xff]
        %v572 = vld [vmem:[%s230 + $0x850] sm:$0xff]
        %v573 = vld [vmem:[%s230 + $0x858] sm:$0xff]
        %v574 = vld [vmem:[%s230 + $0x860] sm:$0xff]
        %v575 = vld [vmem:[%s230 + $0x868] sm:$0xf]
        %v576 = vld [vmem:[%s230 + $0x86c] sm:$0xff]
        %v577 = vld [vmem:[%s230 + $0x874] sm:$0xff]
        %v578 = vld [vmem:[%s230 + $0x87c] sm:$0xff]
        %v579 = vld [vmem:[%s230 + $0x884] sm:$0xff]
        %v580 = vld [vmem:[%s230 + $0x88c] sm:$0xff]
        %v581 = vld [vmem:[%s230 + $0x894] sm:$0xf]
        %v582 = vld [vmem:[%s230 + $0x898] sm:$0xff]
        %v583 = vld [vmem:[%s230 + $0x8a0] sm:$0xff]
        %v584 = vld [vmem:[%s230 + $0x8a8] sm:$0xff]
        %v585 = vld [vmem:[%s230 + $0x8b0] sm:$0xff]
        %v586 = vld [vmem:[%s230 + $0x8b8] sm:$0xff]
        %v587 = vld [vmem:[%s230 + $0x8c0] sm:$0xf]
        %v588 = vld [vmem:[%s230 + $0x8c4] sm:$0xff]
        %v589 = vld [vmem:[%s230 + $0x8cc] sm:$0xff]
        %v590 = vld [vmem:[%s230 + $0x8d4] sm:$0xff]
        %v591 = vld [vmem:[%s230 + $0x8dc] sm:$0xff]
        %v592 = vld [vmem:[%s230 + $0x8e4] sm:$0xff]
        %v593 = vld [vmem:[%s230 + $0x8ec] sm:$0xf]
        %v594 = vld [vmem:[%s230 + $0x8f0] sm:$0xff]
        %v595 = vld [vmem:[%s230 + $0x8f8] sm:$0xff]
        %v596 = vld [vmem:[%s230 + $0x900] sm:$0xff]
        %v597 = vld [vmem:[%s230 + $0x908] sm:$0xff]
        %v598 = vld [vmem:[%s230 + $0x910] sm:$0xff]
        %v599 = vld [vmem:[%s230 + $0x918] sm:$0xf]
        %v600 = vld [vmem:[%s230 + $0x91c] sm:$0xff]
        %v601 = vld [vmem:[%s230 + $0x924] sm:$0xff]
        %v602 = vld [vmem:[%s230 + $0x92c] sm:$0xff]
        %v603 = vld [vmem:[%s230 + $0x934] sm:$0xff]
        %v604 = vld [vmem:[%s230 + $0x93c] sm:$0xff]
        %v605 = vld [vmem:[%s230 + $0x944] sm:$0xf]
        %v606 = vld [vmem:[%s230 + $0x948] sm:$0xff]
        %v607 = vld [vmem:[%s230 + $0x950] sm:$0xff]
        %v608 = vld [vmem:[%s230 + $0x958] sm:$0xff]
        %v609 = vld [vmem:[%s230 + $0x960] sm:$0xff]
        %v610 = vld [vmem:[%s230 + $0x968] sm:$0xff]
        %v611 = vld [vmem:[%s230 + $0x970] sm:$0xf]
        %v612 = vld [vmem:[%s230 + $0x974] sm:$0xff]
        %v613 = vld [vmem:[%s230 + $0x97c] sm:$0xff]
        %v614 = vld [vmem:[%s230 + $0x984] sm:$0xff]
        %v615 = vld [vmem:[%s230 + $0x98c] sm:$0xff]
        %v616 = vld [vmem:[%s230 + $0x994] sm:$0xff]
        %v617 = vld [vmem:[%s230 + $0x99c] sm:$0xf]
        %v618 = vld [vmem:[%s230 + $0x9a0] sm:$0xff]
        %v619 = vld [vmem:[%s230 + $0x9a8] sm:$0xff]
        %v620 = vld [vmem:[%s230 + $0x9b0] sm:$0xff]
        %v621 = vld [vmem:[%s230 + $0x9b8] sm:$0xff]
        %v622 = vld [vmem:[%s230 + $0x9c0] sm:$0xff]
        %v623 = vld [vmem:[%s230 + $0x9c8] sm:$0xf]
        %v624 = vld [vmem:[%s230 + $0x9cc] sm:$0xff]
        %v625 = vld [vmem:[%s230 + $0x9d4] sm:$0xff]
        %v626 = vld [vmem:[%s230 + $0x9dc] sm:$0xff]
        %v627 = vld [vmem:[%s230 + $0x9e4] sm:$0xff]
        %v628 = vld [vmem:[%s230 + $0x9ec] sm:$0xff]
        %v629 = vld [vmem:[%s230 + $0x9f4] sm:$0xf]
        %v630 = vld [vmem:[%s230 + $0x9f8] sm:$0xff]
        %v631 = vld [vmem:[%s230 + $0xa00] sm:$0xff]
        %v632 = vld [vmem:[%s230 + $0xa08] sm:$0xff]
        %v633 = vld [vmem:[%s230 + $0xa10] sm:$0xff]
        %v634 = vld [vmem:[%s230 + $0xa18] sm:$0xff]
        %v635 = vld [vmem:[%s230 + $0xa20] sm:$0xf]
        %v636 = vld [vmem:[%s230 + $0xa24] sm:$0xff]
        %v637 = vld [vmem:[%s230 + $0xa2c] sm:$0xff]
        %v638 = vld [vmem:[%s230 + $0xa34] sm:$0xff]
        %v639 = vld [vmem:[%s230 + $0xa3c] sm:$0xff]
        %v640 = vld [vmem:[%s230 + $0xa44] sm:$0xff]
        %v641 = vld [vmem:[%s230 + $0xa4c] sm:$0xf]
        %v642 = vld [vmem:[%s230 + $0xa50] sm:$0xff]
        %v643 = vld [vmem:[%s230 + $0xa58] sm:$0xff]
        %v644 = vld [vmem:[%s230 + $0xa60] sm:$0xff]
        %v645 = vld [vmem:[%s230 + $0xa68] sm:$0xff]
        %v646 = vld [vmem:[%s230 + $0xa70] sm:$0xff]
        %v647 = vld [vmem:[%s230 + $0xa78] sm:$0xf]
        %v648 = vld [vmem:[%s230 + $0xa7c] sm:$0xff]
        %v649 = vld [vmem:[%s230 + $0xa84] sm:$0xff]
        %v650 = vld [vmem:[%s230 + $0xa8c] sm:$0xff]
        %v651 = vld [vmem:[%s230 + $0xa94] sm:$0xff]
        %v652 = vld [vmem:[%s230 + $0xa9c] sm:$0xff]
        %v653 = vld [vmem:[%s230 + $0xaa4] sm:$0xf]
        %v654 = vld [vmem:[%s230 + $0xaa8] sm:$0xff]
        %v655 = vld [vmem:[%s230 + $0xab0] sm:$0xff]
        %v656 = vld [vmem:[%s230 + $0xab8] sm:$0xff]
        %v657 = vld [vmem:[%s230 + $0xac0] sm:$0xff]
        %v658 = vld [vmem:[%s230 + $0xac8] sm:$0xff]
        %v659 = vld [vmem:[%s230 + $0xad0] sm:$0xf]
        %v660 = vld [vmem:[%s230 + $0xad4] sm:$0xff]
        %v661 = vld [vmem:[%s230 + $0xadc] sm:$0xff]
        %v662 = vld [vmem:[%s230 + $0xae4] sm:$0xff]
        %v663 = vld [vmem:[%s230 + $0xaec] sm:$0xff]
        %v664 = vld [vmem:[%s230 + $0xaf4] sm:$0xff]
        %v665 = vld [vmem:[%s230 + $0xafc] sm:$0xf]
        %v666 = vld [vmem:[%s230 + $0xb00] sm:$0xff]
        %v667 = vld [vmem:[%s230 + $0xb08] sm:$0xff]
        %v668 = vld [vmem:[%s230 + $0xb10] sm:$0xff]
        %v669 = vld [vmem:[%s230 + $0xb18] sm:$0xff]
        %v670 = vld [vmem:[%s230 + $0xb20] sm:$0xff]
        %v671 = vld [vmem:[%s230 + $0xb28] sm:$0xf]
        %v672 = vld [vmem:[%s230 + $0xb2c] sm:$0xff]
        %v673 = vld [vmem:[%s230 + $0xb34] sm:$0xff]
        %v674 = vld [vmem:[%s230 + $0xb3c] sm:$0xff]
        %v675 = vld [vmem:[%s230 + $0xb44] sm:$0xff]
        %v676 = vld [vmem:[%s230 + $0xb4c] sm:$0xff]
        %v677 = vld [vmem:[%s230 + $0xb54] sm:$0xf]
        %v678 = vld [vmem:[%s230 + $0xb58] sm:$0xff]
        %v679 = vld [vmem:[%s230 + $0xb60] sm:$0xff]
        %v680 = vld [vmem:[%s230 + $0xb68] sm:$0xff]
        %v681 = vld [vmem:[%s230 + $0xb70] sm:$0xff]
        %v682 = vld [vmem:[%s230 + $0xb78] sm:$0xff]
        %v683 = vld [vmem:[%s230 + $0xb80] sm:$0xf]
        %v684 = vld [vmem:[%s230 + $0xb84] sm:$0xff]
        %v685 = vld [vmem:[%s230 + $0xb8c] sm:$0xff]
        %v686 = vld [vmem:[%s230 + $0xb94] sm:$0xff]
        %v687 = vld [vmem:[%s230 + $0xb9c] sm:$0xff]
        %v688 = vld [vmem:[%s230 + $0xba4] sm:$0xff]
        %v689 = vld [vmem:[%s230 + $0xbac] sm:$0xf]
        %v690 = vld [vmem:[%s230 + $0xbb0] sm:$0xff]
        %v691 = vld [vmem:[%s230 + $0xbb8] sm:$0xff]
        %v692 = vld [vmem:[%s230 + $0xbc0] sm:$0xff]
        %v693 = vld [vmem:[%s230 + $0xbc8] sm:$0xff]
        %v694 = vld [vmem:[%s230 + $0xbd0] sm:$0xff]
        %v695 = vld [vmem:[%s230 + $0xbd8] sm:$0xf]
        %v696 = vld [vmem:[%s230 + $0xbdc] sm:$0xff]
        %v697 = vld [vmem:[%s230 + $0xbe4] sm:$0xff]
        %v698 = vld [vmem:[%s230 + $0xbec] sm:$0xff]
        %v699 = vld [vmem:[%s230 + $0xbf4] sm:$0xff]
        %v700 = vld [vmem:[%s230 + $0xbfc] sm:$0xff]
        %v701 = vld [vmem:[%s230 + $0xc04] sm:$0xf]
        %v702 = vld [vmem:[%s230 + $0xc08] sm:$0xff]
        %v703 = vld [vmem:[%s230 + $0xc10] sm:$0xff]
        %v704 = vld [vmem:[%s230 + $0xc18] sm:$0xff]
        %v705 = vld [vmem:[%s230 + $0xc20] sm:$0xff]
        %v706 = vld [vmem:[%s230 + $0xc28] sm:$0xff]
        %v707 = vld [vmem:[%s230 + $0xc30] sm:$0xf]
        %v708 = vld [vmem:[%s230 + $0xc34] sm:$0xff]
        %v709 = vld [vmem:[%s230 + $0xc3c] sm:$0xff]
        %v710 = vld [vmem:[%s230 + $0xc44] sm:$0xff]
        %v711 = vld [vmem:[%s230 + $0xc4c] sm:$0xff]
        %v712 = vld [vmem:[%s230 + $0xc54] sm:$0xff]
        %v713 = vld [vmem:[%s230 + $0xc5c] sm:$0xf]
        %v714 = vld [vmem:[%s230 + $0xc60] sm:$0xff]
        %v715 = vld [vmem:[%s230 + $0xc68] sm:$0xff]
        %v716 = vld [vmem:[%s230 + $0xc70] sm:$0xff]
        %v717 = vld [vmem:[%s230 + $0xc78] sm:$0xff]
        %v718 = vld [vmem:[%s230 + $0xc80] sm:$0xff]
        %v719 = vld [vmem:[%s230 + $0xc88] sm:$0xf]
        %v720 = vld [vmem:[%s230 + $0xc8c] sm:$0xff]
        %v721 = vld [vmem:[%s230 + $0xc94] sm:$0xff]
        %v722 = vld [vmem:[%s230 + $0xc9c] sm:$0xff]
        %v723 = vld [vmem:[%s230 + $0xca4] sm:$0xff]
        %v724 = vld [vmem:[%s230 + $0xcac] sm:$0xff]
        %v725 = vld [vmem:[%s230 + $0xcb4] sm:$0xf]
        %v726 = vld [vmem:[%s230 + $0xcb8] sm:$0xff]
        %v727 = vld [vmem:[%s230 + $0xcc0] sm:$0xff]
        %v728 = vld [vmem:[%s230 + $0xcc8] sm:$0xff]
        %v729 = vld [vmem:[%s230 + $0xcd0] sm:$0xff]
        %v730 = vld [vmem:[%s230 + $0xcd8] sm:$0xff]
        %v731 = vld [vmem:[%s230 + $0xce0] sm:$0xf]
        %v732 = vld [vmem:[%s230 + $0xce4] sm:$0xff]
        %v733 = vld [vmem:[%s230 + $0xcec] sm:$0xff]
        %v734 = vld [vmem:[%s230 + $0xcf4] sm:$0xff]
        %v735 = vld [vmem:[%s230 + $0xcfc] sm:$0xff]
        %v736 = vld [vmem:[%s230 + $0xd04] sm:$0xff]
        %v737 = vld [vmem:[%s230 + $0xd0c] sm:$0xf]
        %v738 = vld [vmem:[%s230 + $0xd10] sm:$0xff]
        %v739 = vld [vmem:[%s230 + $0xd18] sm:$0xff]
        %v740 = vld [vmem:[%s230 + $0xd20] sm:$0xff]
        %v741 = vld [vmem:[%s230 + $0xd28] sm:$0xff]
        %v742 = vld [vmem:[%s230 + $0xd30] sm:$0xff]
        %v743 = vld [vmem:[%s230 + $0xd38] sm:$0xf]
        %v744 = vld [vmem:[%s230 + $0xd3c] sm:$0xff]
        %v745 = vld [vmem:[%s230 + $0xd44] sm:$0xff]
        %v746 = vld [vmem:[%s230 + $0xd4c] sm:$0xff]
        %v747 = vld [vmem:[%s230 + $0xd54] sm:$0xff]
        %v748 = vld [vmem:[%s230 + $0xd5c] sm:$0xff]
        %v749 = vld [vmem:[%s230 + $0xd64] sm:$0xf]
        %v750 = vld [vmem:[%s230 + $0xd68] sm:$0xff]
        %v751 = vld [vmem:[%s230 + $0xd70] sm:$0xff]
        %v752 = vld [vmem:[%s230 + $0xd78] sm:$0xff]
        %v753 = vld [vmem:[%s230 + $0xd80] sm:$0xff]
        %v754 = vld [vmem:[%s230 + $0xd88] sm:$0xff]
        %v755 = vld [vmem:[%s230 + $0xd90] sm:$0xf]
        %v756 = vld [vmem:[%s230 + $0xd94] sm:$0xff]
        %v757 = vld [vmem:[%s230 + $0xd9c] sm:$0xff]
        %v758 = vld [vmem:[%s230 + $0xda4] sm:$0xff]
        %v759 = vld [vmem:[%s230 + $0xdac] sm:$0xff]
        %v760 = vld [vmem:[%s230 + $0xdb4] sm:$0xff]
        %v761 = vld [vmem:[%s230 + $0xdbc] sm:$0xf]
        %v762 = vld [vmem:[%s230 + $0xdc0] sm:$0xff]
        %v763 = vld [vmem:[%s230 + $0xdc8] sm:$0xff]
        %v764 = vld [vmem:[%s230 + $0xdd0] sm:$0xff]
        %v765 = vld [vmem:[%s230 + $0xdd8] sm:$0xff]
        %v766 = vld [vmem:[%s230 + $0xde0] sm:$0xff]
        %v767 = vld [vmem:[%s230 + $0xde8] sm:$0xf]
        %v768 = vld [vmem:[%s230 + $0xdec] sm:$0xff]
        %v769 = vld [vmem:[%s230 + $0xdf4] sm:$0xff]
        %v770 = vld [vmem:[%s230 + $0xdfc] sm:$0xff]
        %v771 = vld [vmem:[%s230 + $0xe04] sm:$0xff]
        %v772 = vld [vmem:[%s230 + $0xe0c] sm:$0xff]
        %v773 = vld [vmem:[%s230 + $0xe14] sm:$0xf]
        %v774 = vld [vmem:[%s230 + $0xe18] sm:$0xff]
        %v775 = vld [vmem:[%s230 + $0xe20] sm:$0xff]
        %v776 = vld [vmem:[%s230 + $0xe28] sm:$0xff]
        %v777 = vld [vmem:[%s230 + $0xe30] sm:$0xff]
        %v778 = vld [vmem:[%s230 + $0xe38] sm:$0xff]
        %v779 = vld [vmem:[%s230 + $0xe40] sm:$0xf]
        %v780 = vld [vmem:[%s230 + $0xe44] sm:$0xff]
        %v781 = vld [vmem:[%s230 + $0xe4c] sm:$0xff]
        %v782 = vld [vmem:[%s230 + $0xe54] sm:$0xff]
        %v783 = vld [vmem:[%s230 + $0xe5c] sm:$0xff]
        %v784 = vld [vmem:[%s230 + $0xe64] sm:$0xff]
        %v785 = vld [vmem:[%s230 + $0xe6c] sm:$0xf]
        %v786 = vld [vmem:[%s230 + $0xe70] sm:$0xff]
        %v787 = vld [vmem:[%s230 + $0xe78] sm:$0xff]
        %v788 = vld [vmem:[%s230 + $0xe80] sm:$0xff]
        %v789 = vld [vmem:[%s230 + $0xe88] sm:$0xff]
        %v790 = vld [vmem:[%s230 + $0xe90] sm:$0xff]
        %v791 = vld [vmem:[%s230 + $0xe98] sm:$0xf]
        %v792 = vld [vmem:[%s230 + $0xe9c] sm:$0xff]
        %v793 = vld [vmem:[%s230 + $0xea4] sm:$0xff]
        %v794 = vld [vmem:[%s230 + $0xeac] sm:$0xff]
        %v795 = vld [vmem:[%s230 + $0xeb4] sm:$0xff]
        %v796 = vld [vmem:[%s230 + $0xebc] sm:$0xff]
        %v797 = vld [vmem:[%s230 + $0xec4] sm:$0xf]
        %v798 = vld [vmem:[%s230 + $0xec8] sm:$0xff]
        %v799 = vld [vmem:[%s230 + $0xed0] sm:$0xff]
        %v800 = vld [vmem:[%s230 + $0xed8] sm:$0xff]
        %v801 = vld [vmem:[%s230 + $0xee0] sm:$0xff]
        %v802 = vld [vmem:[%s230 + $0xee8] sm:$0xff]
        %v803 = vld [vmem:[%s230 + $0xef0] sm:$0xf]
        %v804 = vld [vmem:[%s230 + $0xef4] sm:$0xff]
        %v805 = vld [vmem:[%s230 + $0xefc] sm:$0xff]
        %v806 = vld [vmem:[%s230 + $0xf04] sm:$0xff]
        %v807 = vld [vmem:[%s230 + $0xf0c] sm:$0xff]
        %v808 = vld [vmem:[%s230 + $0xf14] sm:$0xff]
        %v809 = vld [vmem:[%s230 + $0xf1c] sm:$0xf]
        %v810 = vld [vmem:[%s230 + $0xf20] sm:$0xff]
        %v811 = vld [vmem:[%s230 + $0xf28] sm:$0xff]
        %v812 = vld [vmem:[%s230 + $0xf30] sm:$0xff]
        %v813 = vld [vmem:[%s230 + $0xf38] sm:$0xff]
        %v814 = vld [vmem:[%s230 + $0xf40] sm:$0xff]
        %v815 = vld [vmem:[%s230 + $0xf48] sm:$0xf]
        %v816 = vld [vmem:[%s230 + $0xf4c] sm:$0xff]
        %v817 = vld [vmem:[%s230 + $0xf54] sm:$0xff]
        %v818 = vld [vmem:[%s230 + $0xf5c] sm:$0xff]
        %v819 = vld [vmem:[%s230 + $0xf64] sm:$0xff]
        %v820 = vld [vmem:[%s230 + $0xf6c] sm:$0xff]
        %v821 = vld [vmem:[%s230 + $0xf74] sm:$0xf]
        %v822 = vld [vmem:[%s230 + $0xf78] sm:$0xff]
        %v823 = vld [vmem:[%s230 + $0xf80] sm:$0xff]
        %v824 = vld [vmem:[%s230 + $0xf88] sm:$0xff]
        %v825 = vld [vmem:[%s230 + $0xf90] sm:$0xff]
        %v826 = vld [vmem:[%s230 + $0xf98] sm:$0xff]
        %v827 = vld [vmem:[%s230 + $0xfa0] sm:$0xf]
        %v828 = vld [vmem:[%s230 + $0xfa4] sm:$0xff]
        %v829 = vld [vmem:[%s230 + $0xfac] sm:$0xff]
        %v830 = vld [vmem:[%s230 + $0xfb4] sm:$0xff]
        %v831 = vld [vmem:[%s230 + $0xfbc] sm:$0xff]
        %v832 = vld [vmem:[%s230 + $0xfc4] sm:$0xff]
        %v833 = vld [vmem:[%s230 + $0xfcc] sm:$0xf]
        %v834 = vld [vmem:[%s230 + $0xfd0] sm:$0xff]
        %v835 = vld [vmem:[%s230 + $0xfd8] sm:$0xff]
        %v836 = vld [vmem:[%s230 + $0xfe0] sm:$0xff]
        %v837 = vld [vmem:[%s230 + $0xfe8] sm:$0xff]
        %v838 = vld [vmem:[%s230 + $0xff0] sm:$0xff]
        %v839 = vld [vmem:[%s230 + $0xff8] sm:$0xf]
        %v840 = vld [vmem:[%s230 + $0xffc] sm:$0xff]
        %v841 = vld [vmem:[%s230 + $0x1004] sm:$0xff]
        %v842 = vld [vmem:[%s230 + $0x100c] sm:$0xff]
        %v843 = vld [vmem:[%s230 + $0x1014] sm:$0xff]
        %v844 = vld [vmem:[%s230 + $0x101c] sm:$0xff]
        %v845 = vld [vmem:[%s230 + $0x1024] sm:$0xf]
        %v846 = vld [vmem:[%s230 + $0x1028] sm:$0xff]
        %v847 = vld [vmem:[%s230 + $0x1030] sm:$0xff]
        %v848 = vld [vmem:[%s230 + $0x1038] sm:$0xff]
        %v849 = vld [vmem:[%s230 + $0x1040] sm:$0xff]
        %v850 = vld [vmem:[%s230 + $0x1048] sm:$0xff]
        %v851 = vld [vmem:[%s230 + $0x1050] sm:$0xf]
        %v852 = vld [vmem:[%s230 + $0x1054] sm:$0xff]
        %v853 = vld [vmem:[%s230 + $0x105c] sm:$0xff]
        %v854 = vld [vmem:[%s230 + $0x1064] sm:$0xff]
        %v855 = vld [vmem:[%s230 + $0x106c] sm:$0xff]
        %v856 = vld [vmem:[%s230 + $0x1074] sm:$0xff]
        %v857 = vld [vmem:[%s230 + $0x107c] sm:$0xf]
        %v858 = vld [vmem:[%s266] sm:$0xff]
        %v859 = vld [vmem:[%s266 + $0x8] sm:$0x7]
        %v862 = vperm.slane %v858, 0
        %v863 = vperm.slane %v858, 1
        %v864 = vperm.slane %v858, 2
        %v865 = vperm.slane %v858, 3
        %v866 = vperm.slane %v858, 4
        %v867 = vperm.slane %v858, 5
        %v868 = vperm.slane %v858, 6
        %v869 = vperm.slane %v858, 7
        %v870 = vperm.slane %v859, 0
        %v871 = vperm.slane %v859, 1
        %v872 = vperm.slane %v859, 2
        %v887 = vunpack.c.l.b16 %v279
        %v888 = vunpack.c.h.b16 %v279
        %v889 = vunpack.c.l.b16 %v280
        %v890 = vunpack.c.h.b16 %v280
        %v891 = vunpack.c.l.b16 %v281
        %v892 = vunpack.c.h.b16 %v281
        %v893 = vpack.c.b16 %v887, %v887
        %v894 = vpack.c.b16 %v888, %v888
        %v895 = vpack.c.b16 %v889, %v889
        %v896 = vpack.c.b16 %v890, %v890
        %v897 = vpack.c.b16 %v891, %v891
        %v898 = vpack.c.b16 %v892, %v892
        %v1481 = vunpack.c.l.b16 %v282
        %v1482 = vunpack.c.h.b16 %v282
        %v1483 = vunpack.c.l.b16 %v283
        %v1484 = vunpack.c.h.b16 %v283
        %v1485 = vunpack.c.l.b16 %v284
        %v1486 = vunpack.c.h.b16 %v284
        %v1487 = vunpack.c.l.b16 %v285
        %v1488 = vunpack.c.h.b16 %v285
        %v1489 = vunpack.c.l.b16 %v286
        %v1490 = vunpack.c.h.b16 %v286
        %v1491 = vunpack.c.l.b16 %v287
        %v1492 = vunpack.c.l.b16 %v288
        %v1493 = vunpack.c.h.b16 %v288
        %v1494 = vunpack.c.l.b16 %v289
        %v1495 = vunpack.c.h.b16 %v289
        %v1496 = vunpack.c.l.b16 %v290
        %v1497 = vunpack.c.h.b16 %v290
        %v1498 = vunpack.c.l.b16 %v291
        %v1499 = vunpack.c.h.b16 %v291
        %v1500 = vunpack.c.l.b16 %v292
        %v1501 = vunpack.c.h.b16 %v292
        %v1502 = vunpack.c.l.b16 %v293
        %v1503 = vunpack.c.l.b16 %v294
        %v1504 = vunpack.c.h.b16 %v294
        %v1505 = vunpack.c.l.b16 %v295
        %v1506 = vunpack.c.h.b16 %v295
        %v1507 = vunpack.c.l.b16 %v296
        %v1508 = vunpack.c.h.b16 %v296
        %v1509 = vunpack.c.l.b16 %v297
        %v1510 = vunpack.c.h.b16 %v297
        %v1511 = vunpack.c.l.b16 %v298
        %v1512 = vunpack.c.h.b16 %v298
        %v1513 = vunpack.c.l.b16 %v299
        %v1514 = vunpack.c.l.b16 %v300
        %v1515 = vunpack.c.h.b16 %v300
        %v1516 = vunpack.c.l.b16 %v301
        %v1517 = vunpack.c.h.b16 %v301
        %v1518 = vunpack.c.l.b16 %v302
        %v1519 = vunpack.c.h.b16 %v302
        %v1520 = vunpack.c.l.b16 %v303
        %v1521 = vunpack.c.h.b16 %v303
        %v1522 = vunpack.c.l.b16 %v304
        %v1523 = vunpack.c.h.b16 %v304
        %v1524 = vunpack.c.l.b16 %v305
        %v1525 = vunpack.c.l.b16 %v306
        %v1526 = vunpack.c.h.b16 %v306
        %v1527 = vunpack.c.l.b16 %v307
        %v1528 = vunpack.c.h.b16 %v307
        %v1529 = vunpack.c.l.b16 %v308
        %v1530 = vunpack.c.h.b16 %v308
        %v1531 = vunpack.c.l.b16 %v309
        %v1532 = vunpack.c.h.b16 %v309
        %v1533 = vunpack.c.l.b16 %v310
        %v1534 = vunpack.c.h.b16 %v310
        %v1535 = vunpack.c.l.b16 %v311
        %v1536 = vunpack.c.l.b16 %v312
        %v1537 = vunpack.c.h.b16 %v312
        %v1538 = vunpack.c.l.b16 %v313
        %v1539 = vunpack.c.h.b16 %v313
        %v1540 = vunpack.c.l.b16 %v314
        %v1541 = vunpack.c.h.b16 %v314
        %v1542 = vunpack.c.l.b16 %v315
        %v1543 = vunpack.c.h.b16 %v315
        %v1544 = vunpack.c.l.b16 %v316
        %v1545 = vunpack.c.h.b16 %v316
        %v1546 = vunpack.c.l.b16 %v317
        %v1547 = vunpack.c.l.b16 %v318
        %v1548 = vunpack.c.h.b16 %v318
        %v1549 = vunpack.c.l.b16 %v319
        %v1550 = vunpack.c.h.b16 %v319
        %v1551 = vunpack.c.l.b16 %v320
        %v1552 = vunpack.c.h.b16 %v320
        %v1553 = vunpack.c.l.b16 %v321
        %v1554 = vunpack.c.h.b16 %v321
        %v1555 = vunpack.c.l.b16 %v322
        %v1556 = vunpack.c.h.b16 %v322
        %v1557 = vunpack.c.l.b16 %v323
        %v1558 = vunpack.c.l.b16 %v324
        %v1559 = vunpack.c.h.b16 %v324
        %v1560 = vunpack.c.l.b16 %v325
        %v1561 = vunpack.c.h.b16 %v325
        %v1562 = vunpack.c.l.b16 %v326
        %v1563 = vunpack.c.h.b16 %v326
        %v1564 = vunpack.c.l.b16 %v327
        %v1565 = vunpack.c.h.b16 %v327
        %v1566 = vunpack.c.l.b16 %v328
        %v1567 = vunpack.c.h.b16 %v328
        %v1568 = vunpack.c.l.b16 %v329
        %v1569 = vunpack.c.l.b16 %v330
        %v1570 = vunpack.c.h.b16 %v330
        %v1571 = vunpack.c.l.b16 %v331
        %v1572 = vunpack.c.h.b16 %v331
        %v1573 = vunpack.c.l.b16 %v332
        %v1574 = vunpack.c.h.b16 %v332
        %v1575 = vunpack.c.l.b16 %v333
        %v1576 = vunpack.c.h.b16 %v333
        %v1577 = vunpack.c.l.b16 %v334
        %v1578 = vunpack.c.h.b16 %v334
        %v1579 = vunpack.c.l.b16 %v335
        %v1580 = vunpack.c.l.b16 %v336
        %v1581 = vunpack.c.h.b16 %v336
        %v1582 = vunpack.c.l.b16 %v337
        %v1583 = vunpack.c.h.b16 %v337
        %v1584 = vunpack.c.l.b16 %v338
        %v1585 = vunpack.c.h.b16 %v338
        %v1586 = vunpack.c.l.b16 %v339
        %v1587 = vunpack.c.h.b16 %v339
        %v1588 = vunpack.c.l.b16 %v340
        %v1589 = vunpack.c.h.b16 %v340
        %v1590 = vunpack.c.l.b16 %v341
        %v1591 = vunpack.c.l.b16 %v342
        %v1592 = vunpack.c.h.b16 %v342
        %v1593 = vunpack.c.l.b16 %v343
        %v1594 = vunpack.c.h.b16 %v343
        %v1595 = vunpack.c.l.b16 %v344
        %v1596 = vunpack.c.h.b16 %v344
        %v1597 = vunpack.c.l.b16 %v345
        %v1598 = vunpack.c.h.b16 %v345
        %v1599 = vunpack.c.l.b16 %v346
        %v1600 = vunpack.c.h.b16 %v346
        %v1601 = vunpack.c.l.b16 %v347
        %v1602 = vunpack.c.l.b16 %v348
        %v1603 = vunpack.c.h.b16 %v348
        %v1604 = vunpack.c.l.b16 %v349
        %v1605 = vunpack.c.h.b16 %v349
        %v1606 = vunpack.c.l.b16 %v350
        %v1607 = vunpack.c.h.b16 %v350
        %v1608 = vunpack.c.l.b16 %v351
        %v1609 = vunpack.c.h.b16 %v351
        %v1610 = vunpack.c.l.b16 %v352
        %v1611 = vunpack.c.h.b16 %v352
        %v1612 = vunpack.c.l.b16 %v353
        %v1613 = vunpack.c.l.b16 %v354
        %v1614 = vunpack.c.h.b16 %v354
        %v1615 = vunpack.c.l.b16 %v355
        %v1616 = vunpack.c.h.b16 %v355
        %v1617 = vunpack.c.l.b16 %v356
        %v1618 = vunpack.c.h.b16 %v356
        %v1619 = vunpack.c.l.b16 %v357
        %v1620 = vunpack.c.h.b16 %v357
        %v1621 = vunpack.c.l.b16 %v358
        %v1622 = vunpack.c.h.b16 %v358
        %v1623 = vunpack.c.l.b16 %v359
        %v1624 = vunpack.c.l.b16 %v360
        %v1625 = vunpack.c.h.b16 %v360
        %v1626 = vunpack.c.l.b16 %v361
        %v1627 = vunpack.c.h.b16 %v361
        %v1628 = vunpack.c.l.b16 %v362
        %v1629 = vunpack.c.h.b16 %v362
        %v1630 = vunpack.c.l.b16 %v363
        %v1631 = vunpack.c.h.b16 %v363
        %v1632 = vunpack.c.l.b16 %v364
        %v1633 = vunpack.c.h.b16 %v364
        %v1634 = vunpack.c.l.b16 %v365
        %v1635 = vunpack.c.l.b16 %v366
        %v1636 = vunpack.c.h.b16 %v366
        %v1637 = vunpack.c.l.b16 %v367
        %v1638 = vunpack.c.h.b16 %v367
        %v1639 = vunpack.c.l.b16 %v368
        %v1640 = vunpack.c.h.b16 %v368
        %v1641 = vunpack.c.l.b16 %v369
        %v1642 = vunpack.c.h.b16 %v369
        %v1643 = vunpack.c.l.b16 %v370
        %v1644 = vunpack.c.h.b16 %v370
        %v1645 = vunpack.c.l.b16 %v371
        %v1646 = vunpack.c.l.b16 %v372
        %v1647 = vunpack.c.h.b16 %v372
        %v1648 = vunpack.c.l.b16 %v373
        %v1649 = vunpack.c.h.b16 %v373
        %v1650 = vunpack.c.l.b16 %v374
        %v1651 = vunpack.c.h.b16 %v374
        %v1652 = vunpack.c.l.b16 %v375
        %v1653 = vunpack.c.h.b16 %v375
        %v1654 = vunpack.c.l.b16 %v376
        %v1655 = vunpack.c.h.b16 %v376
        %v1656 = vunpack.c.l.b16 %v377
        %v1657 = vunpack.c.l.b16 %v378
        %v1658 = vunpack.c.h.b16 %v378
        %v1659 = vunpack.c.l.b16 %v379
        %v1660 = vunpack.c.h.b16 %v379
        %v1661 = vunpack.c.l.b16 %v380
        %v1662 = vunpack.c.h.b16 %v380
        %v1663 = vunpack.c.l.b16 %v381
        %v1664 = vunpack.c.h.b16 %v381
        %v1665 = vunpack.c.l.b16 %v382
        %v1666 = vunpack.c.h.b16 %v382
        %v1667 = vunpack.c.l.b16 %v383
        %v1668 = vunpack.c.l.b16 %v384
        %v1669 = vunpack.c.h.b16 %v384
        %v1670 = vunpack.c.l.b16 %v385
        %v1671 = vunpack.c.h.b16 %v385
        %v1672 = vunpack.c.l.b16 %v386
        %v1673 = vunpack.c.h.b16 %v386
        %v1674 = vunpack.c.l.b16 %v387
        %v1675 = vunpack.c.h.b16 %v387
        %v1676 = vunpack.c.l.b16 %v388
        %v1677 = vunpack.c.h.b16 %v388
        %v1678 = vunpack.c.l.b16 %v389
        %v1679 = vunpack.c.l.b16 %v390
        %v1680 = vunpack.c.h.b16 %v390
        %v1681 = vunpack.c.l.b16 %v391
        %v1682 = vunpack.c.h.b16 %v391
        %v1683 = vunpack.c.l.b16 %v392
        %v1684 = vunpack.c.h.b16 %v392
        %v1685 = vunpack.c.l.b16 %v393
        %v1686 = vunpack.c.h.b16 %v393
        %v1687 = vunpack.c.l.b16 %v394
        %v1688 = vunpack.c.h.b16 %v394
        %v1689 = vunpack.c.l.b16 %v395
        %v1690 = vunpack.c.l.b16 %v396
        %v1691 = vunpack.c.h.b16 %v396
        %v1692 = vunpack.c.l.b16 %v397
        %v1693 = vunpack.c.h.b16 %v397
        %v1694 = vunpack.c.l.b16 %v398
        %v1695 = vunpack.c.h.b16 %v398
        %v1696 = vunpack.c.l.b16 %v399
        %v1697 = vunpack.c.h.b16 %v399
        %v1698 = vunpack.c.l.b16 %v400
        %v1699 = vunpack.c.h.b16 %v400
        %v1700 = vunpack.c.l.b16 %v401
        %v1701 = vunpack.c.l.b16 %v402
        %v1702 = vunpack.c.h.b16 %v402
        %v1703 = vunpack.c.l.b16 %v403
        %v1704 = vunpack.c.h.b16 %v403
        %v1705 = vunpack.c.l.b16 %v404
        %v1706 = vunpack.c.h.b16 %v404
        %v1707 = vunpack.c.l.b16 %v405
        %v1708 = vunpack.c.h.b16 %v405
        %v1709 = vunpack.c.l.b16 %v406
        %v1710 = vunpack.c.h.b16 %v406
        %v1711 = vunpack.c.l.b16 %v407
        %v1712 = vunpack.c.l.b16 %v408
        %v1713 = vunpack.c.h.b16 %v408
        %v1714 = vunpack.c.l.b16 %v409
        %v1715 = vunpack.c.h.b16 %v409
        %v1716 = vunpack.c.l.b16 %v410
        %v1717 = vunpack.c.h.b16 %v410
        %v1718 = vunpack.c.l.b16 %v411
        %v1719 = vunpack.c.h.b16 %v411
        %v1720 = vunpack.c.l.b16 %v412
        %v1721 = vunpack.c.h.b16 %v412
        %v1722 = vunpack.c.l.b16 %v413
        %v1723 = vunpack.c.l.b16 %v414
        %v1724 = vunpack.c.h.b16 %v414
        %v1725 = vunpack.c.l.b16 %v415
        %v1726 = vunpack.c.h.b16 %v415
        %v1727 = vunpack.c.l.b16 %v416
        %v1728 = vunpack.c.h.b16 %v416
        %v1729 = vunpack.c.l.b16 %v417
        %v1730 = vunpack.c.h.b16 %v417
        %v1731 = vunpack.c.l.b16 %v418
        %v1732 = vunpack.c.h.b16 %v418
        %v1733 = vunpack.c.l.b16 %v419
        %v1734 = vunpack.c.l.b16 %v420
        %v1735 = vunpack.c.h.b16 %v420
        %v1736 = vunpack.c.l.b16 %v421
        %v1737 = vunpack.c.h.b16 %v421
        %v1738 = vunpack.c.l.b16 %v422
        %v1739 = vunpack.c.h.b16 %v422
        %v1740 = vunpack.c.l.b16 %v423
        %v1741 = vunpack.c.h.b16 %v423
        %v1742 = vunpack.c.l.b16 %v424
        %v1743 = vunpack.c.h.b16 %v424
        %v1744 = vunpack.c.l.b16 %v425
        %v1745 = vunpack.c.l.b16 %v426
        %v1746 = vunpack.c.h.b16 %v426
        %v1747 = vunpack.c.l.b16 %v427
        %v1748 = vunpack.c.h.b16 %v427
        %v1749 = vunpack.c.l.b16 %v428
        %v1750 = vunpack.c.h.b16 %v428
        %v1751 = vunpack.c.l.b16 %v429
        %v1752 = vunpack.c.h.b16 %v429
        %v1753 = vunpack.c.l.b16 %v430
        %v1754 = vunpack.c.h.b16 %v430
        %v1755 = vunpack.c.l.b16 %v431
        %v1756 = vunpack.c.l.b16 %v432
        %v1757 = vunpack.c.h.b16 %v432
        %v1758 = vunpack.c.l.b16 %v433
        %v1759 = vunpack.c.h.b16 %v433
        %v1760 = vunpack.c.l.b16 %v434
        %v1761 = vunpack.c.h.b16 %v434
        %v1762 = vunpack.c.l.b16 %v435
        %v1763 = vunpack.c.h.b16 %v435
        %v1764 = vunpack.c.l.b16 %v436
        %v1765 = vunpack.c.h.b16 %v436
        %v1766 = vunpack.c.l.b16 %v437
        %v1767 = vunpack.c.l.b16 %v438
        %v1768 = vunpack.c.h.b16 %v438
        %v1769 = vunpack.c.l.b16 %v439
        %v1770 = vunpack.c.h.b16 %v439
        %v1771 = vunpack.c.l.b16 %v440
        %v1772 = vunpack.c.h.b16 %v440
        %v1773 = vunpack.c.l.b16 %v441
        %v1774 = vunpack.c.h.b16 %v441
        %v1775 = vunpack.c.l.b16 %v442
        %v1776 = vunpack.c.h.b16 %v442
        %v1777 = vunpack.c.l.b16 %v443
        %v1778 = vunpack.c.l.b16 %v444
        %v1779 = vunpack.c.h.b16 %v444
        %v1780 = vunpack.c.l.b16 %v445
        %v1781 = vunpack.c.h.b16 %v445
        %v1782 = vunpack.c.l.b16 %v446
        %v1783 = vunpack.c.h.b16 %v446
        %v1784 = vunpack.c.l.b16 %v447
        %v1785 = vunpack.c.h.b16 %v447
        %v1786 = vunpack.c.l.b16 %v448
        %v1787 = vunpack.c.h.b16 %v448
        %v1788 = vunpack.c.l.b16 %v449
        %v1789 = vunpack.c.l.b16 %v450
        %v1790 = vunpack.c.h.b16 %v450
        %v1791 = vunpack.c.l.b16 %v451
        %v1792 = vunpack.c.h.b16 %v451
        %v1793 = vunpack.c.l.b16 %v452
        %v1794 = vunpack.c.h.b16 %v452
        %v1795 = vunpack.c.l.b16 %v453
        %v1796 = vunpack.c.h.b16 %v453
        %v1797 = vunpack.c.l.b16 %v454
        %v1798 = vunpack.c.h.b16 %v454
        %v1799 = vunpack.c.l.b16 %v455
        %v1800 = vunpack.c.l.b16 %v456
        %v1801 = vunpack.c.h.b16 %v456
        %v1802 = vunpack.c.l.b16 %v457
        %v1803 = vunpack.c.h.b16 %v457
        %v1804 = vunpack.c.l.b16 %v458
        %v1805 = vunpack.c.h.b16 %v458
        %v1806 = vunpack.c.l.b16 %v459
        %v1807 = vunpack.c.h.b16 %v459
        %v1808 = vunpack.c.l.b16 %v460
        %v1809 = vunpack.c.h.b16 %v460
        %v1810 = vunpack.c.l.b16 %v461
        %v1811 = vunpack.c.l.b16 %v462
        %v1812 = vunpack.c.h.b16 %v462
        %v1813 = vunpack.c.l.b16 %v463
        %v1814 = vunpack.c.h.b16 %v463
        %v1815 = vunpack.c.l.b16 %v464
        %v1816 = vunpack.c.h.b16 %v464
        %v1817 = vunpack.c.l.b16 %v465
        %v1818 = vunpack.c.h.b16 %v465
        %v1819 = vunpack.c.l.b16 %v466
        %v1820 = vunpack.c.h.b16 %v466
        %v1821 = vunpack.c.l.b16 %v467
        %v1822 = vunpack.c.l.b16 %v468
        %v1823 = vunpack.c.h.b16 %v468
        %v1824 = vunpack.c.l.b16 %v469
        %v1825 = vunpack.c.h.b16 %v469
        %v1826 = vunpack.c.l.b16 %v470
        %v1827 = vunpack.c.h.b16 %v470
        %v1828 = vunpack.c.l.b16 %v471
        %v1829 = vunpack.c.h.b16 %v471
        %v1830 = vunpack.c.l.b16 %v472
        %v1831 = vunpack.c.h.b16 %v472
        %v1832 = vunpack.c.l.b16 %v473
        %v1833 = vunpack.c.l.b16 %v474
        %v1834 = vunpack.c.h.b16 %v474
        %v1835 = vunpack.c.l.b16 %v475
        %v1836 = vunpack.c.h.b16 %v475
        %v1837 = vunpack.c.l.b16 %v476
        %v1838 = vunpack.c.h.b16 %v476
        %v1839 = vunpack.c.l.b16 %v477
        %v1840 = vunpack.c.h.b16 %v477
        %v1841 = vunpack.c.l.b16 %v478
        %v1842 = vunpack.c.h.b16 %v478
        %v1843 = vunpack.c.l.b16 %v479
        %v1844 = vunpack.c.l.b16 %v480
        %v1845 = vunpack.c.h.b16 %v480
        %v1846 = vunpack.c.l.b16 %v481
        %v1847 = vunpack.c.h.b16 %v481
        %v1848 = vunpack.c.l.b16 %v482
        %v1849 = vunpack.c.h.b16 %v482
        %v1850 = vunpack.c.l.b16 %v483
        %v1851 = vunpack.c.h.b16 %v483
        %v1852 = vunpack.c.l.b16 %v484
        %v1853 = vunpack.c.h.b16 %v484
        %v1854 = vunpack.c.l.b16 %v485
        %v1855 = vunpack.c.l.b16 %v486
        %v1856 = vunpack.c.h.b16 %v486
        %v1857 = vunpack.c.l.b16 %v487
        %v1858 = vunpack.c.h.b16 %v487
        %v1859 = vunpack.c.l.b16 %v488
        %v1860 = vunpack.c.h.b16 %v488
        %v1861 = vunpack.c.l.b16 %v489
        %v1862 = vunpack.c.h.b16 %v489
        %v1863 = vunpack.c.l.b16 %v490
        %v1864 = vunpack.c.h.b16 %v490
        %v1865 = vunpack.c.l.b16 %v491
        %v1866 = vunpack.c.l.b16 %v492
        %v1867 = vunpack.c.h.b16 %v492
        %v1868 = vunpack.c.l.b16 %v493
        %v1869 = vunpack.c.h.b16 %v493
        %v1870 = vunpack.c.l.b16 %v494
        %v1871 = vunpack.c.h.b16 %v494
        %v1872 = vunpack.c.l.b16 %v495
        %v1873 = vunpack.c.h.b16 %v495
        %v1874 = vunpack.c.l.b16 %v496
        %v1875 = vunpack.c.h.b16 %v496
        %v1876 = vunpack.c.l.b16 %v497
        %v1877 = vunpack.c.l.b16 %v498
        %v1878 = vunpack.c.h.b16 %v498
        %v1879 = vunpack.c.l.b16 %v499
        %v1880 = vunpack.c.h.b16 %v499
        %v1881 = vunpack.c.l.b16 %v500
        %v1882 = vunpack.c.h.b16 %v500
        %v1883 = vunpack.c.l.b16 %v501
        %v1884 = vunpack.c.h.b16 %v501
        %v1885 = vunpack.c.l.b16 %v502
        %v1886 = vunpack.c.h.b16 %v502
        %v1887 = vunpack.c.l.b16 %v503
        %v1888 = vunpack.c.l.b16 %v504
        %v1889 = vunpack.c.h.b16 %v504
        %v1890 = vunpack.c.l.b16 %v505
        %v1891 = vunpack.c.h.b16 %v505
        %v1892 = vunpack.c.l.b16 %v506
        %v1893 = vunpack.c.h.b16 %v506
        %v1894 = vunpack.c.l.b16 %v507
        %v1895 = vunpack.c.h.b16 %v507
        %v1896 = vunpack.c.l.b16 %v508
        %v1897 = vunpack.c.h.b16 %v508
        %v1898 = vunpack.c.l.b16 %v509
        %v1899 = vunpack.c.l.b16 %v510
        %v1900 = vunpack.c.h.b16 %v510
        %v1901 = vunpack.c.l.b16 %v511
        %v1902 = vunpack.c.h.b16 %v511
        %v1903 = vunpack.c.l.b16 %v512
        %v1904 = vunpack.c.h.b16 %v512
        %v1905 = vunpack.c.l.b16 %v513
        %v1906 = vunpack.c.h.b16 %v513
        %v1907 = vunpack.c.l.b16 %v514
        %v1908 = vunpack.c.h.b16 %v514
        %v1909 = vunpack.c.l.b16 %v515
        %v1910 = vunpack.c.l.b16 %v516
        %v1911 = vunpack.c.h.b16 %v516
        %v1912 = vunpack.c.l.b16 %v517
        %v1913 = vunpack.c.h.b16 %v517
        %v1914 = vunpack.c.l.b16 %v518
        %v1915 = vunpack.c.h.b16 %v518
        %v1916 = vunpack.c.l.b16 %v519
        %v1917 = vunpack.c.h.b16 %v519
        %v1918 = vunpack.c.l.b16 %v520
        %v1919 = vunpack.c.h.b16 %v520
        %v1920 = vunpack.c.l.b16 %v521
        %v1921 = vunpack.c.l.b16 %v522
        %v1922 = vunpack.c.h.b16 %v522
        %v1923 = vunpack.c.l.b16 %v523
        %v1924 = vunpack.c.h.b16 %v523
        %v1925 = vunpack.c.l.b16 %v524
        %v1926 = vunpack.c.h.b16 %v524
        %v1927 = vunpack.c.l.b16 %v525
        %v1928 = vunpack.c.h.b16 %v525
        %v1929 = vunpack.c.l.b16 %v526
        %v1930 = vunpack.c.h.b16 %v526
        %v1931 = vunpack.c.l.b16 %v527
        %v1932 = vunpack.c.l.b16 %v528
        %v1933 = vunpack.c.h.b16 %v528
        %v1934 = vunpack.c.l.b16 %v529
        %v1935 = vunpack.c.h.b16 %v529
        %v1936 = vunpack.c.l.b16 %v530
        %v1937 = vunpack.c.h.b16 %v530
        %v1938 = vunpack.c.l.b16 %v531
        %v1939 = vunpack.c.h.b16 %v531
        %v1940 = vunpack.c.l.b16 %v532
        %v1941 = vunpack.c.h.b16 %v532
        %v1942 = vunpack.c.l.b16 %v533
        %v1943 = vunpack.c.l.b16 %v534
        %v1944 = vunpack.c.h.b16 %v534
        %v1945 = vunpack.c.l.b16 %v535
        %v1946 = vunpack.c.h.b16 %v535
        %v1947 = vunpack.c.l.b16 %v536
        %v1948 = vunpack.c.h.b16 %v536
        %v1949 = vunpack.c.l.b16 %v537
        %v1950 = vunpack.c.h.b16 %v537
        %v1951 = vunpack.c.l.b16 %v538
        %v1952 = vunpack.c.h.b16 %v538
        %v1953 = vunpack.c.l.b16 %v539
        %v1954 = vunpack.c.l.b16 %v540
        %v1955 = vunpack.c.h.b16 %v540
        %v1956 = vunpack.c.l.b16 %v541
        %v1957 = vunpack.c.h.b16 %v541
        %v1958 = vunpack.c.l.b16 %v542
        %v1959 = vunpack.c.h.b16 %v542
        %v1960 = vunpack.c.l.b16 %v543
        %v1961 = vunpack.c.h.b16 %v543
        %v1962 = vunpack.c.l.b16 %v544
        %v1963 = vunpack.c.h.b16 %v544
        %v1964 = vunpack.c.l.b16 %v545
        %v1965 = vunpack.c.l.b16 %v546
        %v1966 = vunpack.c.h.b16 %v546
        %v1967 = vunpack.c.l.b16 %v547
        %v1968 = vunpack.c.h.b16 %v547
        %v1969 = vunpack.c.l.b16 %v548
        %v1970 = vunpack.c.h.b16 %v548
        %v1971 = vunpack.c.l.b16 %v549
        %v1972 = vunpack.c.h.b16 %v549
        %v1973 = vunpack.c.l.b16 %v550
        %v1974 = vunpack.c.h.b16 %v550
        %v1975 = vunpack.c.l.b16 %v551
        %v1976 = vunpack.c.l.b16 %v552
        %v1977 = vunpack.c.h.b16 %v552
        %v1978 = vunpack.c.l.b16 %v553
        %v1979 = vunpack.c.h.b16 %v553
        %v1980 = vunpack.c.l.b16 %v554
        %v1981 = vunpack.c.h.b16 %v554
        %v1982 = vunpack.c.l.b16 %v555
        %v1983 = vunpack.c.h.b16 %v555
        %v1984 = vunpack.c.l.b16 %v556
        %v1985 = vunpack.c.h.b16 %v556
        %v1986 = vunpack.c.l.b16 %v557
        %v1987 = vunpack.c.l.b16 %v558
        %v1988 = vunpack.c.h.b16 %v558
        %v1989 = vunpack.c.l.b16 %v559
        %v1990 = vunpack.c.h.b16 %v559
        %v1991 = vunpack.c.l.b16 %v560
        %v1992 = vunpack.c.h.b16 %v560
        %v1993 = vunpack.c.l.b16 %v561
        %v1994 = vunpack.c.h.b16 %v561
        %v1995 = vunpack.c.l.b16 %v562
        %v1996 = vunpack.c.h.b16 %v562
        %v1997 = vunpack.c.l.b16 %v563
        %v1998 = vunpack.c.l.b16 %v564
        %v1999 = vunpack.c.h.b16 %v564
        %v2000 = vunpack.c.l.b16 %v565
        %v2001 = vunpack.c.h.b16 %v565
        %v2002 = vunpack.c.l.b16 %v566
        %v2003 = vunpack.c.h.b16 %v566
        %v2004 = vunpack.c.l.b16 %v567
        %v2005 = vunpack.c.h.b16 %v567
        %v2006 = vunpack.c.l.b16 %v568
        %v2007 = vunpack.c.h.b16 %v568
        %v2008 = vunpack.c.l.b16 %v569
        %v2009 = vunpack.c.l.b16 %v570
        %v2010 = vunpack.c.h.b16 %v570
        %v2011 = vunpack.c.l.b16 %v571
        %v2012 = vunpack.c.h.b16 %v571
        %v2013 = vunpack.c.l.b16 %v572
        %v2014 = vunpack.c.h.b16 %v572
        %v2015 = vunpack.c.l.b16 %v573
        %v2016 = vunpack.c.h.b16 %v573
        %v2017 = vunpack.c.l.b16 %v574
        %v2018 = vunpack.c.h.b16 %v574
        %v2019 = vunpack.c.l.b16 %v575
        %v2020 = vunpack.c.l.b16 %v576
        %v2021 = vunpack.c.h.b16 %v576
        %v2022 = vunpack.c.l.b16 %v577
        %v2023 = vunpack.c.h.b16 %v577
        %v2024 = vunpack.c.l.b16 %v578
        %v2025 = vunpack.c.h.b16 %v578
        %v2026 = vunpack.c.l.b16 %v579
        %v2027 = vunpack.c.h.b16 %v579
        %v2028 = vunpack.c.l.b16 %v580
        %v2029 = vunpack.c.h.b16 %v580
        %v2030 = vunpack.c.l.b16 %v581
        %v2031 = vunpack.c.l.b16 %v582
        %v2032 = vunpack.c.h.b16 %v582
        %v2033 = vunpack.c.l.b16 %v583
        %v2034 = vunpack.c.h.b16 %v583
        %v2035 = vunpack.c.l.b16 %v584
        %v2036 = vunpack.c.h.b16 %v584
        %v2037 = vunpack.c.l.b16 %v585
        %v2038 = vunpack.c.h.b16 %v585
        %v2039 = vunpack.c.l.b16 %v586
        %v2040 = vunpack.c.h.b16 %v586
        %v2041 = vunpack.c.l.b16 %v587
        %v2042 = vunpack.c.l.b16 %v588
        %v2043 = vunpack.c.h.b16 %v588
        %v2044 = vunpack.c.l.b16 %v589
        %v2045 = vunpack.c.h.b16 %v589
        %v2046 = vunpack.c.l.b16 %v590
        %v2047 = vunpack.c.h.b16 %v590
        %v2048 = vunpack.c.l.b16 %v591
        %v2049 = vunpack.c.h.b16 %v591
        %v2050 = vunpack.c.l.b16 %v592
        %v2051 = vunpack.c.h.b16 %v592
        %v2052 = vunpack.c.l.b16 %v593
        %v2053 = vunpack.c.l.b16 %v594
        %v2054 = vunpack.c.h.b16 %v594
        %v2055 = vunpack.c.l.b16 %v595
        %v2056 = vunpack.c.h.b16 %v595
        %v2057 = vunpack.c.l.b16 %v596
        %v2058 = vunpack.c.h.b16 %v596
        %v2059 = vunpack.c.l.b16 %v597
        %v2060 = vunpack.c.h.b16 %v597
        %v2061 = vunpack.c.l.b16 %v598
        %v2062 = vunpack.c.h.b16 %v598
        %v2063 = vunpack.c.l.b16 %v599
        %v2064 = vunpack.c.l.b16 %v600
        %v2065 = vunpack.c.h.b16 %v600
        %v2066 = vunpack.c.l.b16 %v601
        %v2067 = vunpack.c.h.b16 %v601
        %v2068 = vunpack.c.l.b16 %v602
        %v2069 = vunpack.c.h.b16 %v602
        %v2070 = vunpack.c.l.b16 %v603
        %v2071 = vunpack.c.h.b16 %v603
        %v2072 = vunpack.c.l.b16 %v604
        %v2073 = vunpack.c.h.b16 %v604
        %v2074 = vunpack.c.l.b16 %v605
        %v2075 = vunpack.c.l.b16 %v606
        %v2076 = vunpack.c.h.b16 %v606
        %v2077 = vunpack.c.l.b16 %v607
        %v2078 = vunpack.c.h.b16 %v607
        %v2079 = vunpack.c.l.b16 %v608
        %v2080 = vunpack.c.h.b16 %v608
        %v2081 = vunpack.c.l.b16 %v609
        %v2082 = vunpack.c.h.b16 %v609
        %v2083 = vunpack.c.l.b16 %v610
        %v2084 = vunpack.c.h.b16 %v610
        %v2085 = vunpack.c.l.b16 %v611
        %v2086 = vunpack.c.l.b16 %v612
        %v2087 = vunpack.c.h.b16 %v612
        %v2088 = vunpack.c.l.b16 %v613
        %v2089 = vunpack.c.h.b16 %v613
        %v2090 = vunpack.c.l.b16 %v614
        %v2091 = vunpack.c.h.b16 %v614
        %v2092 = vunpack.c.l.b16 %v615
        %v2093 = vunpack.c.h.b16 %v615
        %v2094 = vunpack.c.l.b16 %v616
        %v2095 = vunpack.c.h.b16 %v616
        %v2096 = vunpack.c.l.b16 %v617
        %v2097 = vunpack.c.l.b16 %v618
        %v2098 = vunpack.c.h.b16 %v618
        %v2099 = vunpack.c.l.b16 %v619
        %v2100 = vunpack.c.h.b16 %v619
        %v2101 = vunpack.c.l.b16 %v620
        %v2102 = vunpack.c.h.b16 %v620
        %v2103 = vunpack.c.l.b16 %v621
        %v2104 = vunpack.c.h.b16 %v621
        %v2105 = vunpack.c.l.b16 %v622
        %v2106 = vunpack.c.h.b16 %v622
        %v2107 = vunpack.c.l.b16 %v623
        %v2108 = vunpack.c.l.b16 %v624
        %v2109 = vunpack.c.h.b16 %v624
        %v2110 = vunpack.c.l.b16 %v625
        %v2111 = vunpack.c.h.b16 %v625
        %v2112 = vunpack.c.l.b16 %v626
        %v2113 = vunpack.c.h.b16 %v626
        %v2114 = vunpack.c.l.b16 %v627
        %v2115 = vunpack.c.h.b16 %v627
        %v2116 = vunpack.c.l.b16 %v628
        %v2117 = vunpack.c.h.b16 %v628
        %v2118 = vunpack.c.l.b16 %v629
        %v2119 = vunpack.c.l.b16 %v630
        %v2120 = vunpack.c.h.b16 %v630
        %v2121 = vunpack.c.l.b16 %v631
        %v2122 = vunpack.c.h.b16 %v631
        %v2123 = vunpack.c.l.b16 %v632
        %v2124 = vunpack.c.h.b16 %v632
        %v2125 = vunpack.c.l.b16 %v633
        %v2126 = vunpack.c.h.b16 %v633
        %v2127 = vunpack.c.l.b16 %v634
        %v2128 = vunpack.c.h.b16 %v634
        %v2129 = vunpack.c.l.b16 %v635
        %v2130 = vunpack.c.l.b16 %v636
        %v2131 = vunpack.c.h.b16 %v636
        %v2132 = vunpack.c.l.b16 %v637
        %v2133 = vunpack.c.h.b16 %v637
        %v2134 = vunpack.c.l.b16 %v638
        %v2135 = vunpack.c.h.b16 %v638
        %v2136 = vunpack.c.l.b16 %v639
        %v2137 = vunpack.c.h.b16 %v639
        %v2138 = vunpack.c.l.b16 %v640
        %v2139 = vunpack.c.h.b16 %v640
        %v2140 = vunpack.c.l.b16 %v641
        %v2141 = vunpack.c.l.b16 %v642
        %v2142 = vunpack.c.h.b16 %v642
        %v2143 = vunpack.c.l.b16 %v643
        %v2144 = vunpack.c.h.b16 %v643
        %v2145 = vunpack.c.l.b16 %v644
        %v2146 = vunpack.c.h.b16 %v644
        %v2147 = vunpack.c.l.b16 %v645
        %v2148 = vunpack.c.h.b16 %v645
        %v2149 = vunpack.c.l.b16 %v646
        %v2150 = vunpack.c.h.b16 %v646
        %v2151 = vunpack.c.l.b16 %v647
        %v2152 = vunpack.c.l.b16 %v648
        %v2153 = vunpack.c.h.b16 %v648
        %v2154 = vunpack.c.l.b16 %v649
        %v2155 = vunpack.c.h.b16 %v649
        %v2156 = vunpack.c.l.b16 %v650
        %v2157 = vunpack.c.h.b16 %v650
        %v2158 = vunpack.c.l.b16 %v651
        %v2159 = vunpack.c.h.b16 %v651
        %v2160 = vunpack.c.l.b16 %v652
        %v2161 = vunpack.c.h.b16 %v652
        %v2162 = vunpack.c.l.b16 %v653
        %v2163 = vunpack.c.l.b16 %v654
        %v2164 = vunpack.c.h.b16 %v654
        %v2165 = vunpack.c.l.b16 %v655
        %v2166 = vunpack.c.h.b16 %v655
        %v2167 = vunpack.c.l.b16 %v656
        %v2168 = vunpack.c.h.b16 %v656
        %v2169 = vunpack.c.l.b16 %v657
        %v2170 = vunpack.c.h.b16 %v657
        %v2171 = vunpack.c.l.b16 %v658
        %v2172 = vunpack.c.h.b16 %v658
        %v2173 = vunpack.c.l.b16 %v659
        %v2174 = vunpack.c.l.b16 %v660
        %v2175 = vunpack.c.h.b16 %v660
        %v2176 = vunpack.c.l.b16 %v661
        %v2177 = vunpack.c.h.b16 %v661
        %v2178 = vunpack.c.l.b16 %v662
        %v2179 = vunpack.c.h.b16 %v662
        %v2180 = vunpack.c.l.b16 %v663
        %v2181 = vunpack.c.h.b16 %v663
        %v2182 = vunpack.c.l.b16 %v664
        %v2183 = vunpack.c.h.b16 %v664
        %v2184 = vunpack.c.l.b16 %v665
        %v2185 = vunpack.c.l.b16 %v666
        %v2186 = vunpack.c.h.b16 %v666
        %v2187 = vunpack.c.l.b16 %v667
        %v2188 = vunpack.c.h.b16 %v667
        %v2189 = vunpack.c.l.b16 %v668
        %v2190 = vunpack.c.h.b16 %v668
        %v2191 = vunpack.c.l.b16 %v669
        %v2192 = vunpack.c.h.b16 %v669
        %v2193 = vunpack.c.l.b16 %v670
        %v2194 = vunpack.c.h.b16 %v670
        %v2195 = vunpack.c.l.b16 %v671
        %v2196 = vunpack.c.l.b16 %v672
        %v2197 = vunpack.c.h.b16 %v672
        %v2198 = vunpack.c.l.b16 %v673
        %v2199 = vunpack.c.h.b16 %v673
        %v2200 = vunpack.c.l.b16 %v674
        %v2201 = vunpack.c.h.b16 %v674
        %v2202 = vunpack.c.l.b16 %v675
        %v2203 = vunpack.c.h.b16 %v675
        %v2204 = vunpack.c.l.b16 %v676
        %v2205 = vunpack.c.h.b16 %v676
        %v2206 = vunpack.c.l.b16 %v677
        %v2207 = vunpack.c.l.b16 %v678
        %v2208 = vunpack.c.h.b16 %v678
        %v2209 = vunpack.c.l.b16 %v679
        %v2210 = vunpack.c.h.b16 %v679
        %v2211 = vunpack.c.l.b16 %v680
        %v2212 = vunpack.c.h.b16 %v680
        %v2213 = vunpack.c.l.b16 %v681
        %v2214 = vunpack.c.h.b16 %v681
        %v2215 = vunpack.c.l.b16 %v682
        %v2216 = vunpack.c.h.b16 %v682
        %v2217 = vunpack.c.l.b16 %v683
        %v2218 = vunpack.c.l.b16 %v684
        %v2219 = vunpack.c.h.b16 %v684
        %v2220 = vunpack.c.l.b16 %v685
        %v2221 = vunpack.c.h.b16 %v685
        %v2222 = vunpack.c.l.b16 %v686
        %v2223 = vunpack.c.h.b16 %v686
        %v2224 = vunpack.c.l.b16 %v687
        %v2225 = vunpack.c.h.b16 %v687
        %v2226 = vunpack.c.l.b16 %v688
        %v2227 = vunpack.c.h.b16 %v688
        %v2228 = vunpack.c.l.b16 %v689
        %v2229 = vunpack.c.l.b16 %v690
        %v2230 = vunpack.c.h.b16 %v690
        %v2231 = vunpack.c.l.b16 %v691
        %v2232 = vunpack.c.h.b16 %v691
        %v2233 = vunpack.c.l.b16 %v692
        %v2234 = vunpack.c.h.b16 %v692
        %v2235 = vunpack.c.l.b16 %v693
        %v2236 = vunpack.c.h.b16 %v693
        %v2237 = vunpack.c.l.b16 %v694
        %v2238 = vunpack.c.h.b16 %v694
        %v2239 = vunpack.c.l.b16 %v695
        %v2240 = vunpack.c.l.b16 %v696
        %v2241 = vunpack.c.h.b16 %v696
        %v2242 = vunpack.c.l.b16 %v697
        %v2243 = vunpack.c.h.b16 %v697
        %v2244 = vunpack.c.l.b16 %v698
        %v2245 = vunpack.c.h.b16 %v698
        %v2246 = vunpack.c.l.b16 %v699
        %v2247 = vunpack.c.h.b16 %v699
        %v2248 = vunpack.c.l.b16 %v700
        %v2249 = vunpack.c.h.b16 %v700
        %v2250 = vunpack.c.l.b16 %v701
        %v2251 = vunpack.c.l.b16 %v702
        %v2252 = vunpack.c.h.b16 %v702
        %v2253 = vunpack.c.l.b16 %v703
        %v2254 = vunpack.c.h.b16 %v703
        %v2255 = vunpack.c.l.b16 %v704
        %v2256 = vunpack.c.h.b16 %v704
        %v2257 = vunpack.c.l.b16 %v705
        %v2258 = vunpack.c.h.b16 %v705
        %v2259 = vunpack.c.l.b16 %v706
        %v2260 = vunpack.c.h.b16 %v706
        %v2261 = vunpack.c.l.b16 %v707
        %v2262 = vunpack.c.l.b16 %v708
        %v2263 = vunpack.c.h.b16 %v708
        %v2264 = vunpack.c.l.b16 %v709
        %v2265 = vunpack.c.h.b16 %v709
        %v2266 = vunpack.c.l.b16 %v710
        %v2267 = vunpack.c.h.b16 %v710
        %v2268 = vunpack.c.l.b16 %v711
        %v2269 = vunpack.c.h.b16 %v711
        %v2270 = vunpack.c.l.b16 %v712
        %v2271 = vunpack.c.h.b16 %v712
        %v2272 = vunpack.c.l.b16 %v713
        %v2273 = vunpack.c.l.b16 %v714
        %v2274 = vunpack.c.h.b16 %v714
        %v2275 = vunpack.c.l.b16 %v715
        %v2276 = vunpack.c.h.b16 %v715
        %v2277 = vunpack.c.l.b16 %v716
        %v2278 = vunpack.c.h.b16 %v716
        %v2279 = vunpack.c.l.b16 %v717
        %v2280 = vunpack.c.h.b16 %v717
        %v2281 = vunpack.c.l.b16 %v718
        %v2282 = vunpack.c.h.b16 %v718
        %v2283 = vunpack.c.l.b16 %v719
        %v2284 = vunpack.c.l.b16 %v720
        %v2285 = vunpack.c.h.b16 %v720
        %v2286 = vunpack.c.l.b16 %v721
        %v2287 = vunpack.c.h.b16 %v721
        %v2288 = vunpack.c.l.b16 %v722
        %v2289 = vunpack.c.h.b16 %v722
        %v2290 = vunpack.c.l.b16 %v723
        %v2291 = vunpack.c.h.b16 %v723
        %v2292 = vunpack.c.l.b16 %v724
        %v2293 = vunpack.c.h.b16 %v724
        %v2294 = vunpack.c.l.b16 %v725
        %v2295 = vunpack.c.l.b16 %v726
        %v2296 = vunpack.c.h.b16 %v726
        %v2297 = vunpack.c.l.b16 %v727
        %v2298 = vunpack.c.h.b16 %v727
        %v2299 = vunpack.c.l.b16 %v728
        %v2300 = vunpack.c.h.b16 %v728
        %v2301 = vunpack.c.l.b16 %v729
        %v2302 = vunpack.c.h.b16 %v729
        %v2303 = vunpack.c.l.b16 %v730
        %v2304 = vunpack.c.h.b16 %v730
        %v2305 = vunpack.c.l.b16 %v731
        %v2306 = vunpack.c.l.b16 %v732
        %v2307 = vunpack.c.h.b16 %v732
        %v2308 = vunpack.c.l.b16 %v733
        %v2309 = vunpack.c.h.b16 %v733
        %v2310 = vunpack.c.l.b16 %v734
        %v2311 = vunpack.c.h.b16 %v734
        %v2312 = vunpack.c.l.b16 %v735
        %v2313 = vunpack.c.h.b16 %v735
        %v2314 = vunpack.c.l.b16 %v736
        %v2315 = vunpack.c.h.b16 %v736
        %v2316 = vunpack.c.l.b16 %v737
        %v2317 = vunpack.c.l.b16 %v738
        %v2318 = vunpack.c.h.b16 %v738
        %v2319 = vunpack.c.l.b16 %v739
        %v2320 = vunpack.c.h.b16 %v739
        %v2321 = vunpack.c.l.b16 %v740
        %v2322 = vunpack.c.h.b16 %v740
        %v2323 = vunpack.c.l.b16 %v741
        %v2324 = vunpack.c.h.b16 %v741
        %v2325 = vunpack.c.l.b16 %v742
        %v2326 = vunpack.c.h.b16 %v742
        %v2327 = vunpack.c.l.b16 %v743
        %v2328 = vunpack.c.l.b16 %v744
        %v2329 = vunpack.c.h.b16 %v744
        %v2330 = vunpack.c.l.b16 %v745
        %v2331 = vunpack.c.h.b16 %v745
        %v2332 = vunpack.c.l.b16 %v746
        %v2333 = vunpack.c.h.b16 %v746
        %v2334 = vunpack.c.l.b16 %v747
        %v2335 = vunpack.c.h.b16 %v747
        %v2336 = vunpack.c.l.b16 %v748
        %v2337 = vunpack.c.h.b16 %v748
        %v2338 = vunpack.c.l.b16 %v749
        %v2339 = vunpack.c.l.b16 %v750
        %v2340 = vunpack.c.h.b16 %v750
        %v2341 = vunpack.c.l.b16 %v751
        %v2342 = vunpack.c.h.b16 %v751
        %v2343 = vunpack.c.l.b16 %v752
        %v2344 = vunpack.c.h.b16 %v752
        %v2345 = vunpack.c.l.b16 %v753
        %v2346 = vunpack.c.h.b16 %v753
        %v2347 = vunpack.c.l.b16 %v754
        %v2348 = vunpack.c.h.b16 %v754
        %v2349 = vunpack.c.l.b16 %v755
        %v2350 = vunpack.c.l.b16 %v756
        %v2351 = vunpack.c.h.b16 %v756
        %v2352 = vunpack.c.l.b16 %v757
        %v2353 = vunpack.c.h.b16 %v757
        %v2354 = vunpack.c.l.b16 %v758
        %v2355 = vunpack.c.h.b16 %v758
        %v2356 = vunpack.c.l.b16 %v759
        %v2357 = vunpack.c.h.b16 %v759
        %v2358 = vunpack.c.l.b16 %v760
        %v2359 = vunpack.c.h.b16 %v760
        %v2360 = vunpack.c.l.b16 %v761
        %v2361 = vunpack.c.l.b16 %v762
        %v2362 = vunpack.c.h.b16 %v762
        %v2363 = vunpack.c.l.b16 %v763
        %v2364 = vunpack.c.h.b16 %v763
        %v2365 = vunpack.c.l.b16 %v764
        %v2366 = vunpack.c.h.b16 %v764
        %v2367 = vunpack.c.l.b16 %v765
        %v2368 = vunpack.c.h.b16 %v765
        %v2369 = vunpack.c.l.b16 %v766
        %v2370 = vunpack.c.h.b16 %v766
        %v2371 = vunpack.c.l.b16 %v767
        %v2372 = vunpack.c.l.b16 %v768
        %v2373 = vunpack.c.h.b16 %v768
        %v2374 = vunpack.c.l.b16 %v769
        %v2375 = vunpack.c.h.b16 %v769
        %v2376 = vunpack.c.l.b16 %v770
        %v2377 = vunpack.c.h.b16 %v770
        %v2378 = vunpack.c.l.b16 %v771
        %v2379 = vunpack.c.h.b16 %v771
        %v2380 = vunpack.c.l.b16 %v772
        %v2381 = vunpack.c.h.b16 %v772
        %v2382 = vunpack.c.l.b16 %v773
        %v2383 = vunpack.c.l.b16 %v774
        %v2384 = vunpack.c.h.b16 %v774
        %v2385 = vunpack.c.l.b16 %v775
        %v2386 = vunpack.c.h.b16 %v775
        %v2387 = vunpack.c.l.b16 %v776
        %v2388 = vunpack.c.h.b16 %v776
        %v2389 = vunpack.c.l.b16 %v777
        %v2390 = vunpack.c.h.b16 %v777
        %v2391 = vunpack.c.l.b16 %v778
        %v2392 = vunpack.c.h.b16 %v778
        %v2393 = vunpack.c.l.b16 %v779
        %v2394 = vunpack.c.l.b16 %v780
        %v2395 = vunpack.c.h.b16 %v780
        %v2396 = vunpack.c.l.b16 %v781
        %v2397 = vunpack.c.h.b16 %v781
        %v2398 = vunpack.c.l.b16 %v782
        %v2399 = vunpack.c.h.b16 %v782
        %v2400 = vunpack.c.l.b16 %v783
        %v2401 = vunpack.c.h.b16 %v783
        %v2402 = vunpack.c.l.b16 %v784
        %v2403 = vunpack.c.h.b16 %v784
        %v2404 = vunpack.c.l.b16 %v785
        %v2405 = vunpack.c.l.b16 %v786
        %v2406 = vunpack.c.h.b16 %v786
        %v2407 = vunpack.c.l.b16 %v787
        %v2408 = vunpack.c.h.b16 %v787
        %v2409 = vunpack.c.l.b16 %v788
        %v2410 = vunpack.c.h.b16 %v788
        %v2411 = vunpack.c.l.b16 %v789
        %v2412 = vunpack.c.h.b16 %v789
        %v2413 = vunpack.c.l.b16 %v790
        %v2414 = vunpack.c.h.b16 %v790
        %v2415 = vunpack.c.l.b16 %v791
        %v2416 = vunpack.c.l.b16 %v792
        %v2417 = vunpack.c.h.b16 %v792
        %v2418 = vunpack.c.l.b16 %v793
        %v2419 = vunpack.c.h.b16 %v793
        %v2420 = vunpack.c.l.b16 %v794
        %v2421 = vunpack.c.h.b16 %v794
        %v2422 = vunpack.c.l.b16 %v795
        %v2423 = vunpack.c.h.b16 %v795
        %v2424 = vunpack.c.l.b16 %v796
        %v2425 = vunpack.c.h.b16 %v796
        %v2426 = vunpack.c.l.b16 %v797
        %v2427 = vunpack.c.l.b16 %v798
        %v2428 = vunpack.c.h.b16 %v798
        %v2429 = vunpack.c.l.b16 %v799
        %v2430 = vunpack.c.h.b16 %v799
        %v2431 = vunpack.c.l.b16 %v800
        %v2432 = vunpack.c.h.b16 %v800
        %v2433 = vunpack.c.l.b16 %v801
        %v2434 = vunpack.c.h.b16 %v801
        %v2435 = vunpack.c.l.b16 %v802
        %v2436 = vunpack.c.h.b16 %v802
        %v2437 = vunpack.c.l.b16 %v803
        %v2438 = vunpack.c.l.b16 %v804
        %v2439 = vunpack.c.h.b16 %v804
        %v2440 = vunpack.c.l.b16 %v805
        %v2441 = vunpack.c.h.b16 %v805
        %v2442 = vunpack.c.l.b16 %v806
        %v2443 = vunpack.c.h.b16 %v806
        %v2444 = vunpack.c.l.b16 %v807
        %v2445 = vunpack.c.h.b16 %v807
        %v2446 = vunpack.c.l.b16 %v808
        %v2447 = vunpack.c.h.b16 %v808
        %v2448 = vunpack.c.l.b16 %v809
        %v2449 = vunpack.c.l.b16 %v810
        %v2450 = vunpack.c.h.b16 %v810
        %v2451 = vunpack.c.l.b16 %v811
        %v2452 = vunpack.c.h.b16 %v811
        %v2453 = vunpack.c.l.b16 %v812
        %v2454 = vunpack.c.h.b16 %v812
        %v2455 = vunpack.c.l.b16 %v813
        %v2456 = vunpack.c.h.b16 %v813
        %v2457 = vunpack.c.l.b16 %v814
        %v2458 = vunpack.c.h.b16 %v814
        %v2459 = vunpack.c.l.b16 %v815
        %v2460 = vunpack.c.l.b16 %v816
        %v2461 = vunpack.c.h.b16 %v816
        %v2462 = vunpack.c.l.b16 %v817
        %v2463 = vunpack.c.h.b16 %v817
        %v2464 = vunpack.c.l.b16 %v818
        %v2465 = vunpack.c.h.b16 %v818
        %v2466 = vunpack.c.l.b16 %v819
        %v2467 = vunpack.c.h.b16 %v819
        %v2468 = vunpack.c.l.b16 %v820
        %v2469 = vunpack.c.h.b16 %v820
        %v2470 = vunpack.c.l.b16 %v821
        %v2471 = vunpack.c.l.b16 %v822
        %v2472 = vunpack.c.h.b16 %v822
        %v2473 = vunpack.c.l.b16 %v823
        %v2474 = vunpack.c.h.b16 %v823
        %v2475 = vunpack.c.l.b16 %v824
        %v2476 = vunpack.c.h.b16 %v824
        %v2477 = vunpack.c.l.b16 %v825
        %v2478 = vunpack.c.h.b16 %v825
        %v2479 = vunpack.c.l.b16 %v826
        %v2480 = vunpack.c.h.b16 %v826
        %v2481 = vunpack.c.l.b16 %v827
        %v2482 = vunpack.c.l.b16 %v828
        %v2483 = vunpack.c.h.b16 %v828
        %v2484 = vunpack.c.l.b16 %v829
        %v2485 = vunpack.c.h.b16 %v829
        %v2486 = vunpack.c.l.b16 %v830
        %v2487 = vunpack.c.h.b16 %v830
        %v2488 = vunpack.c.l.b16 %v831
        %v2489 = vunpack.c.h.b16 %v831
        %v2490 = vunpack.c.l.b16 %v832
        %v2491 = vunpack.c.h.b16 %v832
        %v2492 = vunpack.c.l.b16 %v833
        %v2493 = vunpack.c.l.b16 %v834
        %v2494 = vunpack.c.h.b16 %v834
        %v2495 = vunpack.c.l.b16 %v835
        %v2496 = vunpack.c.h.b16 %v835
        %v2497 = vunpack.c.l.b16 %v836
        %v2498 = vunpack.c.h.b16 %v836
        %v2499 = vunpack.c.l.b16 %v837
        %v2500 = vunpack.c.h.b16 %v837
        %v2501 = vunpack.c.l.b16 %v838
        %v2502 = vunpack.c.h.b16 %v838
        %v2503 = vunpack.c.l.b16 %v839
        %v2504 = vunpack.c.l.b16 %v840
        %v2505 = vunpack.c.h.b16 %v840
        %v2506 = vunpack.c.l.b16 %v841
        %v2507 = vunpack.c.h.b16 %v841
        %v2508 = vunpack.c.l.b16 %v842
        %v2509 = vunpack.c.h.b16 %v842
        %v2510 = vunpack.c.l.b16 %v843
        %v2511 = vunpack.c.h.b16 %v843
        %v2512 = vunpack.c.l.b16 %v844
        %v2513 = vunpack.c.h.b16 %v844
        %v2514 = vunpack.c.l.b16 %v845
        %v2515 = vunpack.c.l.b16 %v846
        %v2516 = vunpack.c.h.b16 %v846
        %v2517 = vunpack.c.l.b16 %v847
        %v2518 = vunpack.c.h.b16 %v847
        %v2519 = vunpack.c.l.b16 %v848
        %v2520 = vunpack.c.h.b16 %v848
        %v2521 = vunpack.c.l.b16 %v849
        %v2522 = vunpack.c.h.b16 %v849
        %v2523 = vunpack.c.l.b16 %v850
        %v2524 = vunpack.c.h.b16 %v850
        %v2525 = vunpack.c.l.b16 %v851
        %v2526 = vunpack.c.l.b16 %v852
        %v2527 = vunpack.c.h.b16 %v852
        %v2528 = vunpack.c.l.b16 %v853
        %v2529 = vunpack.c.h.b16 %v853
        %v2530 = vunpack.c.l.b16 %v854
        %v2531 = vunpack.c.h.b16 %v854
        %v2532 = vunpack.c.l.b16 %v855
        %v2533 = vunpack.c.h.b16 %v855
        %v2534 = vunpack.c.l.b16 %v856
        %v2535 = vunpack.c.h.b16 %v856
        %v2536 = vunpack.c.l.b16 %v857
        %v2537 = vpack.c.b16 %v1492, %v1481
        %v2538 = vpack.c.b16 %v1493, %v1482
        %v2539 = vpack.c.b16 %v1494, %v1483
        %v2540 = vpack.c.b16 %v1495, %v1484
        %v2541 = vpack.c.b16 %v1496, %v1485
        %v2542 = vpack.c.b16 %v1497, %v1486
        %v2543 = vpack.c.b16 %v1498, %v1487
        %v2544 = vpack.c.b16 %v1499, %v1488
        %v2545 = vpack.c.b16 %v1500, %v1489
        %v2546 = vpack.c.b16 %v1501, %v1490
        %v2547 = vpack.c.b16 %v1502, %v1491
        %v2548 = vpack.c.b16 %v1514, %v1503
        %v2549 = vpack.c.b16 %v1515, %v1504
        %v2550 = vpack.c.b16 %v1516, %v1505
        %v2551 = vpack.c.b16 %v1517, %v1506
        %v2552 = vpack.c.b16 %v1518, %v1507
        %v2553 = vpack.c.b16 %v1519, %v1508
        %v2554 = vpack.c.b16 %v1520, %v1509
        %v2555 = vpack.c.b16 %v1521, %v1510
        %v2556 = vpack.c.b16 %v1522, %v1511
        %v2557 = vpack.c.b16 %v1523, %v1512
        %v2558 = vpack.c.b16 %v1524, %v1513
        %v2559 = vpack.c.b16 %v1536, %v1525
        %v2560 = vpack.c.b16 %v1537, %v1526
        %v2561 = vpack.c.b16 %v1538, %v1527
        %v2562 = vpack.c.b16 %v1539, %v1528
        %v2563 = vpack.c.b16 %v1540, %v1529
        %v2564 = vpack.c.b16 %v1541, %v1530
        %v2565 = vpack.c.b16 %v1542, %v1531
        %v2566 = vpack.c.b16 %v1543, %v1532
        %v2567 = vpack.c.b16 %v1544, %v1533
        %v2568 = vpack.c.b16 %v1545, %v1534
        %v2569 = vpack.c.b16 %v1546, %v1535
        %v2570 = vpack.c.b16 %v1558, %v1547
        %v2571 = vpack.c.b16 %v1559, %v1548
        %v2572 = vpack.c.b16 %v1560, %v1549
        %v2573 = vpack.c.b16 %v1561, %v1550
        %v2574 = vpack.c.b16 %v1562, %v1551
        %v2575 = vpack.c.b16 %v1563, %v1552
        %v2576 = vpack.c.b16 %v1564, %v1553
        %v2577 = vpack.c.b16 %v1565, %v1554
        %v2578 = vpack.c.b16 %v1566, %v1555
        %v2579 = vpack.c.b16 %v1567, %v1556
        %v2580 = vpack.c.b16 %v1568, %v1557
        %v2581 = vpack.c.b16 %v1580, %v1569
        %v2582 = vpack.c.b16 %v1581, %v1570
        %v2583 = vpack.c.b16 %v1582, %v1571
        %v2584 = vpack.c.b16 %v1583, %v1572
        %v2585 = vpack.c.b16 %v1584, %v1573
        %v2586 = vpack.c.b16 %v1585, %v1574
        %v2587 = vpack.c.b16 %v1586, %v1575
        %v2588 = vpack.c.b16 %v1587, %v1576
        %v2589 = vpack.c.b16 %v1588, %v1577
        %v2590 = vpack.c.b16 %v1589, %v1578
        %v2591 = vpack.c.b16 %v1590, %v1579
        %v2592 = vpack.c.b16 %v1602, %v1591
        %v2593 = vpack.c.b16 %v1603, %v1592
        %v2594 = vpack.c.b16 %v1604, %v1593
        %v2595 = vpack.c.b16 %v1605, %v1594
        %v2596 = vpack.c.b16 %v1606, %v1595
        %v2597 = vpack.c.b16 %v1607, %v1596
        %v2598 = vpack.c.b16 %v1608, %v1597
        %v2599 = vpack.c.b16 %v1609, %v1598
        %v2600 = vpack.c.b16 %v1610, %v1599
        %v2601 = vpack.c.b16 %v1611, %v1600
        %v2602 = vpack.c.b16 %v1612, %v1601
        %v2603 = vpack.c.b16 %v1624, %v1613
        %v2604 = vpack.c.b16 %v1625, %v1614
        %v2605 = vpack.c.b16 %v1626, %v1615
        %v2606 = vpack.c.b16 %v1627, %v1616
        %v2607 = vpack.c.b16 %v1628, %v1617
        %v2608 = vpack.c.b16 %v1629, %v1618
        %v2609 = vpack.c.b16 %v1630, %v1619
        %v2610 = vpack.c.b16 %v1631, %v1620
        %v2611 = vpack.c.b16 %v1632, %v1621
        %v2612 = vpack.c.b16 %v1633, %v1622
        %v2613 = vpack.c.b16 %v1634, %v1623
        %v2614 = vpack.c.b16 %v1646, %v1635
        %v2615 = vpack.c.b16 %v1647, %v1636
        %v2616 = vpack.c.b16 %v1648, %v1637
        %v2617 = vpack.c.b16 %v1649, %v1638
        %v2618 = vpack.c.b16 %v1650, %v1639
        %v2619 = vpack.c.b16 %v1651, %v1640
        %v2620 = vpack.c.b16 %v1652, %v1641
        %v2621 = vpack.c.b16 %v1653, %v1642
        %v2622 = vpack.c.b16 %v1654, %v1643
        %v2623 = vpack.c.b16 %v1655, %v1644
        %v2624 = vpack.c.b16 %v1656, %v1645
        %v2625 = vpack.c.b16 %v1668, %v1657
        %v2626 = vpack.c.b16 %v1669, %v1658
        %v2627 = vpack.c.b16 %v1670, %v1659
        %v2628 = vpack.c.b16 %v1671, %v1660
        %v2629 = vpack.c.b16 %v1672, %v1661
        %v2630 = vpack.c.b16 %v1673, %v1662
        %v2631 = vpack.c.b16 %v1674, %v1663
        %v2632 = vpack.c.b16 %v1675, %v1664
        %v2633 = vpack.c.b16 %v1676, %v1665
        %v2634 = vpack.c.b16 %v1677, %v1666
        %v2635 = vpack.c.b16 %v1678, %v1667
        %v2636 = vpack.c.b16 %v1690, %v1679
        %v2637 = vpack.c.b16 %v1691, %v1680
        %v2638 = vpack.c.b16 %v1692, %v1681
        %v2639 = vpack.c.b16 %v1693, %v1682
        %v2640 = vpack.c.b16 %v1694, %v1683
        %v2641 = vpack.c.b16 %v1695, %v1684
        %v2642 = vpack.c.b16 %v1696, %v1685
        %v2643 = vpack.c.b16 %v1697, %v1686
        %v2644 = vpack.c.b16 %v1698, %v1687
        %v2645 = vpack.c.b16 %v1699, %v1688
        %v2646 = vpack.c.b16 %v1700, %v1689
        %v2647 = vpack.c.b16 %v1712, %v1701
        %v2648 = vpack.c.b16 %v1713, %v1702
        %v2649 = vpack.c.b16 %v1714, %v1703
        %v2650 = vpack.c.b16 %v1715, %v1704
        %v2651 = vpack.c.b16 %v1716, %v1705
        %v2652 = vpack.c.b16 %v1717, %v1706
        %v2653 = vpack.c.b16 %v1718, %v1707
        %v2654 = vpack.c.b16 %v1719, %v1708
        %v2655 = vpack.c.b16 %v1720, %v1709
        %v2656 = vpack.c.b16 %v1721, %v1710
        %v2657 = vpack.c.b16 %v1722, %v1711
        %v2658 = vpack.c.b16 %v1734, %v1723
        %v2659 = vpack.c.b16 %v1735, %v1724
        %v2660 = vpack.c.b16 %v1736, %v1725
        %v2661 = vpack.c.b16 %v1737, %v1726
        %v2662 = vpack.c.b16 %v1738, %v1727
        %v2663 = vpack.c.b16 %v1739, %v1728
        %v2664 = vpack.c.b16 %v1740, %v1729
        %v2665 = vpack.c.b16 %v1741, %v1730
        %v2666 = vpack.c.b16 %v1742, %v1731
        %v2667 = vpack.c.b16 %v1743, %v1732
        %v2668 = vpack.c.b16 %v1744, %v1733
        %v2669 = vpack.c.b16 %v1756, %v1745
        %v2670 = vpack.c.b16 %v1757, %v1746
        %v2671 = vpack.c.b16 %v1758, %v1747
        %v2672 = vpack.c.b16 %v1759, %v1748
        %v2673 = vpack.c.b16 %v1760, %v1749
        %v2674 = vpack.c.b16 %v1761, %v1750
        %v2675 = vpack.c.b16 %v1762, %v1751
        %v2676 = vpack.c.b16 %v1763, %v1752
        %v2677 = vpack.c.b16 %v1764, %v1753
        %v2678 = vpack.c.b16 %v1765, %v1754
        %v2679 = vpack.c.b16 %v1766, %v1755
        %v2680 = vpack.c.b16 %v1778, %v1767
        %v2681 = vpack.c.b16 %v1779, %v1768
        %v2682 = vpack.c.b16 %v1780, %v1769
        %v2683 = vpack.c.b16 %v1781, %v1770
        %v2684 = vpack.c.b16 %v1782, %v1771
        %v2685 = vpack.c.b16 %v1783, %v1772
        %v2686 = vpack.c.b16 %v1784, %v1773
        %v2687 = vpack.c.b16 %v1785, %v1774
        %v2688 = vpack.c.b16 %v1786, %v1775
        %v2689 = vpack.c.b16 %v1787, %v1776
        %v2690 = vpack.c.b16 %v1788, %v1777
        %v2691 = vpack.c.b16 %v1800, %v1789
        %v2692 = vpack.c.b16 %v1801, %v1790
        %v2693 = vpack.c.b16 %v1802, %v1791
        %v2694 = vpack.c.b16 %v1803, %v1792
        %v2695 = vpack.c.b16 %v1804, %v1793
        %v2696 = vpack.c.b16 %v1805, %v1794
        %v2697 = vpack.c.b16 %v1806, %v1795
        %v2698 = vpack.c.b16 %v1807, %v1796
        %v2699 = vpack.c.b16 %v1808, %v1797
        %v2700 = vpack.c.b16 %v1809, %v1798
        %v2701 = vpack.c.b16 %v1810, %v1799
        %v2702 = vpack.c.b16 %v1822, %v1811
        %v2703 = vpack.c.b16 %v1823, %v1812
        %v2704 = vpack.c.b16 %v1824, %v1813
        %v2705 = vpack.c.b16 %v1825, %v1814
        %v2706 = vpack.c.b16 %v1826, %v1815
        %v2707 = vpack.c.b16 %v1827, %v1816
        %v2708 = vpack.c.b16 %v1828, %v1817
        %v2709 = vpack.c.b16 %v1829, %v1818
        %v2710 = vpack.c.b16 %v1830, %v1819
        %v2711 = vpack.c.b16 %v1831, %v1820
        %v2712 = vpack.c.b16 %v1832, %v1821
        %v2713 = vpack.c.b16 %v1844, %v1833
        %v2714 = vpack.c.b16 %v1845, %v1834
        %v2715 = vpack.c.b16 %v1846, %v1835
        %v2716 = vpack.c.b16 %v1847, %v1836
        %v2717 = vpack.c.b16 %v1848, %v1837
        %v2718 = vpack.c.b16 %v1849, %v1838
        %v2719 = vpack.c.b16 %v1850, %v1839
        %v2720 = vpack.c.b16 %v1851, %v1840
        %v2721 = vpack.c.b16 %v1852, %v1841
        %v2722 = vpack.c.b16 %v1853, %v1842
        %v2723 = vpack.c.b16 %v1854, %v1843
        %v2724 = vpack.c.b16 %v1866, %v1855
        %v2725 = vpack.c.b16 %v1867, %v1856
        %v2726 = vpack.c.b16 %v1868, %v1857
        %v2727 = vpack.c.b16 %v1869, %v1858
        %v2728 = vpack.c.b16 %v1870, %v1859
        %v2729 = vpack.c.b16 %v1871, %v1860
        %v2730 = vpack.c.b16 %v1872, %v1861
        %v2731 = vpack.c.b16 %v1873, %v1862
        %v2732 = vpack.c.b16 %v1874, %v1863
        %v2733 = vpack.c.b16 %v1875, %v1864
        %v2734 = vpack.c.b16 %v1876, %v1865
        %v2735 = vpack.c.b16 %v1888, %v1877
        %v2736 = vpack.c.b16 %v1889, %v1878
        %v2737 = vpack.c.b16 %v1890, %v1879
        %v2738 = vpack.c.b16 %v1891, %v1880
        %v2739 = vpack.c.b16 %v1892, %v1881
        %v2740 = vpack.c.b16 %v1893, %v1882
        %v2741 = vpack.c.b16 %v1894, %v1883
        %v2742 = vpack.c.b16 %v1895, %v1884
        %v2743 = vpack.c.b16 %v1896, %v1885
        %v2744 = vpack.c.b16 %v1897, %v1886
        %v2745 = vpack.c.b16 %v1898, %v1887
        %v2746 = vpack.c.b16 %v1910, %v1899
        %v2747 = vpack.c.b16 %v1911, %v1900
        %v2748 = vpack.c.b16 %v1912, %v1901
        %v2749 = vpack.c.b16 %v1913, %v1902
        %v2750 = vpack.c.b16 %v1914, %v1903
        %v2751 = vpack.c.b16 %v1915, %v1904
        %v2752 = vpack.c.b16 %v1916, %v1905
        %v2753 = vpack.c.b16 %v1917, %v1906
        %v2754 = vpack.c.b16 %v1918, %v1907
        %v2755 = vpack.c.b16 %v1919, %v1908
        %v2756 = vpack.c.b16 %v1920, %v1909
        %v2757 = vpack.c.b16 %v1932, %v1921
        %v2758 = vpack.c.b16 %v1933, %v1922
        %v2759 = vpack.c.b16 %v1934, %v1923
        %v2760 = vpack.c.b16 %v1935, %v1924
        %v2761 = vpack.c.b16 %v1936, %v1925
        %v2762 = vpack.c.b16 %v1937, %v1926
        %v2763 = vpack.c.b16 %v1938, %v1927
        %v2764 = vpack.c.b16 %v1939, %v1928
        %v2765 = vpack.c.b16 %v1940, %v1929
        %v2766 = vpack.c.b16 %v1941, %v1930
        %v2767 = vpack.c.b16 %v1942, %v1931
        %v2768 = vpack.c.b16 %v1954, %v1943
        %v2769 = vpack.c.b16 %v1955, %v1944
        %v2770 = vpack.c.b16 %v1956, %v1945
        %v2771 = vpack.c.b16 %v1957, %v1946
        %v2772 = vpack.c.b16 %v1958, %v1947
        %v2773 = vpack.c.b16 %v1959, %v1948
        %v2774 = vpack.c.b16 %v1960, %v1949
        %v2775 = vpack.c.b16 %v1961, %v1950
        %v2776 = vpack.c.b16 %v1962, %v1951
        %v2777 = vpack.c.b16 %v1963, %v1952
        %v2778 = vpack.c.b16 %v1964, %v1953
        %v2779 = vpack.c.b16 %v1976, %v1965
        %v2780 = vpack.c.b16 %v1977, %v1966
        %v2781 = vpack.c.b16 %v1978, %v1967
        %v2782 = vpack.c.b16 %v1979, %v1968
        %v2783 = vpack.c.b16 %v1980, %v1969
        %v2784 = vpack.c.b16 %v1981, %v1970
        %v2785 = vpack.c.b16 %v1982, %v1971
        %v2786 = vpack.c.b16 %v1983, %v1972
        %v2787 = vpack.c.b16 %v1984, %v1973
        %v2788 = vpack.c.b16 %v1985, %v1974
        %v2789 = vpack.c.b16 %v1986, %v1975
        %v2790 = vpack.c.b16 %v1998, %v1987
        %v2791 = vpack.c.b16 %v1999, %v1988
        %v2792 = vpack.c.b16 %v2000, %v1989
        %v2793 = vpack.c.b16 %v2001, %v1990
        %v2794 = vpack.c.b16 %v2002, %v1991
        %v2795 = vpack.c.b16 %v2003, %v1992
        %v2796 = vpack.c.b16 %v2004, %v1993
        %v2797 = vpack.c.b16 %v2005, %v1994
        %v2798 = vpack.c.b16 %v2006, %v1995
        %v2799 = vpack.c.b16 %v2007, %v1996
        %v2800 = vpack.c.b16 %v2008, %v1997
        %v2801 = vpack.c.b16 %v2020, %v2009
        %v2802 = vpack.c.b16 %v2021, %v2010
        %v2803 = vpack.c.b16 %v2022, %v2011
        %v2804 = vpack.c.b16 %v2023, %v2012
        %v2805 = vpack.c.b16 %v2024, %v2013
        %v2806 = vpack.c.b16 %v2025, %v2014
        %v2807 = vpack.c.b16 %v2026, %v2015
        %v2808 = vpack.c.b16 %v2027, %v2016
        %v2809 = vpack.c.b16 %v2028, %v2017
        %v2810 = vpack.c.b16 %v2029, %v2018
        %v2811 = vpack.c.b16 %v2030, %v2019
        %v2812 = vpack.c.b16 %v2042, %v2031
        %v2813 = vpack.c.b16 %v2043, %v2032
        %v2814 = vpack.c.b16 %v2044, %v2033
        %v2815 = vpack.c.b16 %v2045, %v2034
        %v2816 = vpack.c.b16 %v2046, %v2035
        %v2817 = vpack.c.b16 %v2047, %v2036
        %v2818 = vpack.c.b16 %v2048, %v2037
        %v2819 = vpack.c.b16 %v2049, %v2038
        %v2820 = vpack.c.b16 %v2050, %v2039
        %v2821 = vpack.c.b16 %v2051, %v2040
        %v2822 = vpack.c.b16 %v2052, %v2041
        %v2823 = vpack.c.b16 %v2064, %v2053
        %v2824 = vpack.c.b16 %v2065, %v2054
        %v2825 = vpack.c.b16 %v2066, %v2055
        %v2826 = vpack.c.b16 %v2067, %v2056
        %v2827 = vpack.c.b16 %v2068, %v2057
        %v2828 = vpack.c.b16 %v2069, %v2058
        %v2829 = vpack.c.b16 %v2070, %v2059
        %v2830 = vpack.c.b16 %v2071, %v2060
        %v2831 = vpack.c.b16 %v2072, %v2061
        %v2832 = vpack.c.b16 %v2073, %v2062
        %v2833 = vpack.c.b16 %v2074, %v2063
        %v2834 = vpack.c.b16 %v2086, %v2075
        %v2835 = vpack.c.b16 %v2087, %v2076
        %v2836 = vpack.c.b16 %v2088, %v2077
        %v2837 = vpack.c.b16 %v2089, %v2078
        %v2838 = vpack.c.b16 %v2090, %v2079
        %v2839 = vpack.c.b16 %v2091, %v2080
        %v2840 = vpack.c.b16 %v2092, %v2081
        %v2841 = vpack.c.b16 %v2093, %v2082
        %v2842 = vpack.c.b16 %v2094, %v2083
        %v2843 = vpack.c.b16 %v2095, %v2084
        %v2844 = vpack.c.b16 %v2096, %v2085
        %v2845 = vpack.c.b16 %v2108, %v2097
        %v2846 = vpack.c.b16 %v2109, %v2098
        %v2847 = vpack.c.b16 %v2110, %v2099
        %v2848 = vpack.c.b16 %v2111, %v2100
        %v2849 = vpack.c.b16 %v2112, %v2101
        %v2850 = vpack.c.b16 %v2113, %v2102
        %v2851 = vpack.c.b16 %v2114, %v2103
        %v2852 = vpack.c.b16 %v2115, %v2104
        %v2853 = vpack.c.b16 %v2116, %v2105
        %v2854 = vpack.c.b16 %v2117, %v2106
        %v2855 = vpack.c.b16 %v2118, %v2107
        %v2856 = vpack.c.b16 %v2130, %v2119
        %v2857 = vpack.c.b16 %v2131, %v2120
        %v2858 = vpack.c.b16 %v2132, %v2121
        %v2859 = vpack.c.b16 %v2133, %v2122
        %v2860 = vpack.c.b16 %v2134, %v2123
        %v2861 = vpack.c.b16 %v2135, %v2124
        %v2862 = vpack.c.b16 %v2136, %v2125
        %v2863 = vpack.c.b16 %v2137, %v2126
        %v2864 = vpack.c.b16 %v2138, %v2127
        %v2865 = vpack.c.b16 %v2139, %v2128
        %v2866 = vpack.c.b16 %v2140, %v2129
        %v2867 = vpack.c.b16 %v2152, %v2141
        %v2868 = vpack.c.b16 %v2153, %v2142
        %v2869 = vpack.c.b16 %v2154, %v2143
        %v2870 = vpack.c.b16 %v2155, %v2144
        %v2871 = vpack.c.b16 %v2156, %v2145
        %v2872 = vpack.c.b16 %v2157, %v2146
        %v2873 = vpack.c.b16 %v2158, %v2147
        %v2874 = vpack.c.b16 %v2159, %v2148
        %v2875 = vpack.c.b16 %v2160, %v2149
        %v2876 = vpack.c.b16 %v2161, %v2150
        %v2877 = vpack.c.b16 %v2162, %v2151
        %v2878 = vpack.c.b16 %v2174, %v2163
        %v2879 = vpack.c.b16 %v2175, %v2164
        %v2880 = vpack.c.b16 %v2176, %v2165
        %v2881 = vpack.c.b16 %v2177, %v2166
        %v2882 = vpack.c.b16 %v2178, %v2167
        %v2883 = vpack.c.b16 %v2179, %v2168
        %v2884 = vpack.c.b16 %v2180, %v2169
        %v2885 = vpack.c.b16 %v2181, %v2170
        %v2886 = vpack.c.b16 %v2182, %v2171
        %v2887 = vpack.c.b16 %v2183, %v2172
        %v2888 = vpack.c.b16 %v2184, %v2173
        %v2889 = vpack.c.b16 %v2196, %v2185
        %v2890 = vpack.c.b16 %v2197, %v2186
        %v2891 = vpack.c.b16 %v2198, %v2187
        %v2892 = vpack.c.b16 %v2199, %v2188
        %v2893 = vpack.c.b16 %v2200, %v2189
        %v2894 = vpack.c.b16 %v2201, %v2190
        %v2895 = vpack.c.b16 %v2202, %v2191
        %v2896 = vpack.c.b16 %v2203, %v2192
        %v2897 = vpack.c.b16 %v2204, %v2193
        %v2898 = vpack.c.b16 %v2205, %v2194
        %v2899 = vpack.c.b16 %v2206, %v2195
        %v2900 = vpack.c.b16 %v2218, %v2207
        %v2901 = vpack.c.b16 %v2219, %v2208
        %v2902 = vpack.c.b16 %v2220, %v2209
        %v2903 = vpack.c.b16 %v2221, %v2210
        %v2904 = vpack.c.b16 %v2222, %v2211
        %v2905 = vpack.c.b16 %v2223, %v2212
        %v2906 = vpack.c.b16 %v2224, %v2213
        %v2907 = vpack.c.b16 %v2225, %v2214
        %v2908 = vpack.c.b16 %v2226, %v2215
        %v2909 = vpack.c.b16 %v2227, %v2216
        %v2910 = vpack.c.b16 %v2228, %v2217
        %v2911 = vpack.c.b16 %v2240, %v2229
        %v2912 = vpack.c.b16 %v2241, %v2230
        %v2913 = vpack.c.b16 %v2242, %v2231
        %v2914 = vpack.c.b16 %v2243, %v2232
        %v2915 = vpack.c.b16 %v2244, %v2233
        %v2916 = vpack.c.b16 %v2245, %v2234
        %v2917 = vpack.c.b16 %v2246, %v2235
        %v2918 = vpack.c.b16 %v2247, %v2236
        %v2919 = vpack.c.b16 %v2248, %v2237
        %v2920 = vpack.c.b16 %v2249, %v2238
        %v2921 = vpack.c.b16 %v2250, %v2239
        %v2922 = vpack.c.b16 %v2262, %v2251
        %v2923 = vpack.c.b16 %v2263, %v2252
        %v2924 = vpack.c.b16 %v2264, %v2253
        %v2925 = vpack.c.b16 %v2265, %v2254
        %v2926 = vpack.c.b16 %v2266, %v2255
        %v2927 = vpack.c.b16 %v2267, %v2256
        %v2928 = vpack.c.b16 %v2268, %v2257
        %v2929 = vpack.c.b16 %v2269, %v2258
        %v2930 = vpack.c.b16 %v2270, %v2259
        %v2931 = vpack.c.b16 %v2271, %v2260
        %v2932 = vpack.c.b16 %v2272, %v2261
        %v2933 = vpack.c.b16 %v2284, %v2273
        %v2934 = vpack.c.b16 %v2285, %v2274
        %v2935 = vpack.c.b16 %v2286, %v2275
        %v2936 = vpack.c.b16 %v2287, %v2276
        %v2937 = vpack.c.b16 %v2288, %v2277
        %v2938 = vpack.c.b16 %v2289, %v2278
        %v2939 = vpack.c.b16 %v2290, %v2279
        %v2940 = vpack.c.b16 %v2291, %v2280
        %v2941 = vpack.c.b16 %v2292, %v2281
        %v2942 = vpack.c.b16 %v2293, %v2282
        %v2943 = vpack.c.b16 %v2294, %v2283
        %v2944 = vpack.c.b16 %v2306, %v2295
        %v2945 = vpack.c.b16 %v2307, %v2296
        %v2946 = vpack.c.b16 %v2308, %v2297
        %v2947 = vpack.c.b16 %v2309, %v2298
        %v2948 = vpack.c.b16 %v2310, %v2299
        %v2949 = vpack.c.b16 %v2311, %v2300
        %v2950 = vpack.c.b16 %v2312, %v2301
        %v2951 = vpack.c.b16 %v2313, %v2302
        %v2952 = vpack.c.b16 %v2314, %v2303
        %v2953 = vpack.c.b16 %v2315, %v2304
        %v2954 = vpack.c.b16 %v2316, %v2305
        %v2955 = vpack.c.b16 %v2328, %v2317
        %v2956 = vpack.c.b16 %v2329, %v2318
        %v2957 = vpack.c.b16 %v2330, %v2319
        %v2958 = vpack.c.b16 %v2331, %v2320
        %v2959 = vpack.c.b16 %v2332, %v2321
        %v2960 = vpack.c.b16 %v2333, %v2322
        %v2961 = vpack.c.b16 %v2334, %v2323
        %v2962 = vpack.c.b16 %v2335, %v2324
        %v2963 = vpack.c.b16 %v2336, %v2325
        %v2964 = vpack.c.b16 %v2337, %v2326
        %v2965 = vpack.c.b16 %v2338, %v2327
        %v2966 = vpack.c.b16 %v2350, %v2339
        %v2967 = vpack.c.b16 %v2351, %v2340
        %v2968 = vpack.c.b16 %v2352, %v2341
        %v2969 = vpack.c.b16 %v2353, %v2342
        %v2970 = vpack.c.b16 %v2354, %v2343
        %v2971 = vpack.c.b16 %v2355, %v2344
        %v2972 = vpack.c.b16 %v2356, %v2345
        %v2973 = vpack.c.b16 %v2357, %v2346
        %v2974 = vpack.c.b16 %v2358, %v2347
        %v2975 = vpack.c.b16 %v2359, %v2348
        %v2976 = vpack.c.b16 %v2360, %v2349
        %v2977 = vpack.c.b16 %v2372, %v2361
        %v2978 = vpack.c.b16 %v2373, %v2362
        %v2979 = vpack.c.b16 %v2374, %v2363
        %v2980 = vpack.c.b16 %v2375, %v2364
        %v2981 = vpack.c.b16 %v2376, %v2365
        %v2982 = vpack.c.b16 %v2377, %v2366
        %v2983 = vpack.c.b16 %v2378, %v2367
        %v2984 = vpack.c.b16 %v2379, %v2368
        %v2985 = vpack.c.b16 %v2380, %v2369
        %v2986 = vpack.c.b16 %v2381, %v2370
        %v2987 = vpack.c.b16 %v2382, %v2371
        %v2988 = vpack.c.b16 %v2394, %v2383
        %v2989 = vpack.c.b16 %v2395, %v2384
        %v2990 = vpack.c.b16 %v2396, %v2385
        %v2991 = vpack.c.b16 %v2397, %v2386
        %v2992 = vpack.c.b16 %v2398, %v2387
        %v2993 = vpack.c.b16 %v2399, %v2388
        %v2994 = vpack.c.b16 %v2400, %v2389
        %v2995 = vpack.c.b16 %v2401, %v2390
        %v2996 = vpack.c.b16 %v2402, %v2391
        %v2997 = vpack.c.b16 %v2403, %v2392
        %v2998 = vpack.c.b16 %v2404, %v2393
        %v2999 = vpack.c.b16 %v2416, %v2405
        %v3000 = vpack.c.b16 %v2417, %v2406
        %v3001 = vpack.c.b16 %v2418, %v2407
        %v3002 = vpack.c.b16 %v2419, %v2408
        %v3003 = vpack.c.b16 %v2420, %v2409
        %v3004 = vpack.c.b16 %v2421, %v2410
        %v3005 = vpack.c.b16 %v2422, %v2411
        %v3006 = vpack.c.b16 %v2423, %v2412
        %v3007 = vpack.c.b16 %v2424, %v2413
        %v3008 = vpack.c.b16 %v2425, %v2414
        %v3009 = vpack.c.b16 %v2426, %v2415
        %v3010 = vpack.c.b16 %v2438, %v2427
        %v3011 = vpack.c.b16 %v2439, %v2428
        %v3012 = vpack.c.b16 %v2440, %v2429
        %v3013 = vpack.c.b16 %v2441, %v2430
        %v3014 = vpack.c.b16 %v2442, %v2431
        %v3015 = vpack.c.b16 %v2443, %v2432
        %v3016 = vpack.c.b16 %v2444, %v2433
        %v3017 = vpack.c.b16 %v2445, %v2434
        %v3018 = vpack.c.b16 %v2446, %v2435
        %v3019 = vpack.c.b16 %v2447, %v2436
        %v3020 = vpack.c.b16 %v2448, %v2437
        %v3021 = vpack.c.b16 %v2460, %v2449
        %v3022 = vpack.c.b16 %v2461, %v2450
        %v3023 = vpack.c.b16 %v2462, %v2451
        %v3024 = vpack.c.b16 %v2463, %v2452
        %v3025 = vpack.c.b16 %v2464, %v2453
        %v3026 = vpack.c.b16 %v2465, %v2454
        %v3027 = vpack.c.b16 %v2466, %v2455
        %v3028 = vpack.c.b16 %v2467, %v2456
        %v3029 = vpack.c.b16 %v2468, %v2457
        %v3030 = vpack.c.b16 %v2469, %v2458
        %v3031 = vpack.c.b16 %v2470, %v2459
        %v3032 = vpack.c.b16 %v2482, %v2471
        %v3033 = vpack.c.b16 %v2483, %v2472
        %v3034 = vpack.c.b16 %v2484, %v2473
        %v3035 = vpack.c.b16 %v2485, %v2474
        %v3036 = vpack.c.b16 %v2486, %v2475
        %v3037 = vpack.c.b16 %v2487, %v2476
        %v3038 = vpack.c.b16 %v2488, %v2477
        %v3039 = vpack.c.b16 %v2489, %v2478
        %v3040 = vpack.c.b16 %v2490, %v2479
        %v3041 = vpack.c.b16 %v2491, %v2480
        %v3042 = vpack.c.b16 %v2492, %v2481
        %v3043 = vpack.c.b16 %v2504, %v2493
        %v3044 = vpack.c.b16 %v2505, %v2494
        %v3045 = vpack.c.b16 %v2506, %v2495
        %v3046 = vpack.c.b16 %v2507, %v2496
        %v3047 = vpack.c.b16 %v2508, %v2497
        %v3048 = vpack.c.b16 %v2509, %v2498
        %v3049 = vpack.c.b16 %v2510, %v2499
        %v3050 = vpack.c.b16 %v2511, %v2500
        %v3051 = vpack.c.b16 %v2512, %v2501
        %v3052 = vpack.c.b16 %v2513, %v2502
        %v3053 = vpack.c.b16 %v2514, %v2503
        %v3054 = vpack.c.b16 %v2526, %v2515
        %v3055 = vpack.c.b16 %v2527, %v2516
        %v3056 = vpack.c.b16 %v2528, %v2517
        %v3057 = vpack.c.b16 %v2529, %v2518
        %v3058 = vpack.c.b16 %v2530, %v2519
        %v3059 = vpack.c.b16 %v2531, %v2520
        %v3060 = vpack.c.b16 %v2532, %v2521
        %v3061 = vpack.c.b16 %v2533, %v2522
        %v3062 = vpack.c.b16 %v2534, %v2523
        %v3063 = vpack.c.b16 %v2535, %v2524
        %v3064 = vpack.c.b16 %v2536, %v2525
        %3593 = vmatpush.bf16.msra.mxu0 %v2614
        %3594 = vmatpush.bf16.msra.mxu0 %v2603
        %3595 = vmatpush.bf16.msra.mxu0 %v2592
        %3596 = vmatpush.bf16.msra.mxu0 %v2581
        %3597 = vmatpush.bf16.msra.mxu0 %v2570
        %3598 = vmatpush.bf16.msra.mxu0 %v2559
        %3599 = vmatpush.bf16.msra.mxu0 %v2548
        %3600 = vmatpush.bf16.msra.mxu0 %v2537
        %3601 = vmatmul.bf16.gmra.mxu0 %v893
        %v3602 = vpop.f32.mrf.mxu0
        %v3603 = vadd.f32 %v862, %v3602
        %v3604 = vpop.f32.mrf.mxu0
        %3605 = vdwg.mxu0
        %3606 = vmatpush.bf16.msra.mxu0 %v2702
        %3607 = vmatpush.bf16.msra.mxu0 %v2691
        %3608 = vmatpush.bf16.msra.mxu0 %v2680
        %3609 = vmatpush.bf16.msra.mxu0 %v2669
        %3610 = vmatpush.bf16.msra.mxu0 %v2658
        %3611 = vmatpush.bf16.msra.mxu0 %v2647
        %3612 = vmatpush.bf16.msra.mxu0 %v2636
        %3613 = vmatpush.bf16.msra.mxu0 %v2625
        %3614 = vmatmul.bf16.gmra.mxu0 %v894
        %v3615 = vpop.f32.mrf.mxu0
        %v3616 = vadd.f32 %v3603, %v3615
        %v3617 = vpop.f32.mrf.mxu0
        %3618 = vdwg.mxu0
        %3619 = vmatpush.bf16.msra.mxu0 %v2790
        %3620 = vmatpush.bf16.msra.mxu0 %v2779
        %3621 = vmatpush.bf16.msra.mxu0 %v2768
        %3622 = vmatpush.bf16.msra.mxu0 %v2757
        %3623 = vmatpush.bf16.msra.mxu0 %v2746
        %3624 = vmatpush.bf16.msra.mxu0 %v2735
        %3625 = vmatpush.bf16.msra.mxu0 %v2724
        %3626 = vmatpush.bf16.msra.mxu0 %v2713
        %3627 = vmatmul.bf16.gmra.mxu0 %v895
        %v3628 = vpop.f32.mrf.mxu0
        %v3629 = vadd.f32 %v3616, %v3628
        %v3630 = vpop.f32.mrf.mxu0
        %3631 = vdwg.mxu0
        %3632 = vmatpush.bf16.msra.mxu0 %v2878
        %3633 = vmatpush.bf16.msra.mxu0 %v2867
        %3634 = vmatpush.bf16.msra.mxu0 %v2856
        %3635 = vmatpush.bf16.msra.mxu0 %v2845
        %3636 = vmatpush.bf16.msra.mxu0 %v2834
        %3637 = vmatpush.bf16.msra.mxu0 %v2823
        %3638 = vmatpush.bf16.msra.mxu0 %v2812
        %3639 = vmatpush.bf16.msra.mxu0 %v2801
        %3640 = vmatmul.bf16.gmra.mxu0 %v896
        %v3641 = vpop.f32.mrf.mxu0
        %v3642 = vadd.f32 %v3629, %v3641
        %v3643 = vpop.f32.mrf.mxu0
        %3644 = vdwg.mxu0
        %3645 = vmatpush.bf16.msra.mxu0 %v2966
        %3646 = vmatpush.bf16.msra.mxu0 %v2955
        %3647 = vmatpush.bf16.msra.mxu0 %v2944
        %3648 = vmatpush.bf16.msra.mxu0 %v2933
        %3649 = vmatpush.bf16.msra.mxu0 %v2922
        %3650 = vmatpush.bf16.msra.mxu0 %v2911
        %3651 = vmatpush.bf16.msra.mxu0 %v2900
        %3652 = vmatpush.bf16.msra.mxu0 %v2889
        %3653 = vmatmul.bf16.gmra.mxu0 %v897
        %v3654 = vpop.f32.mrf.mxu0
        %v3655 = vadd.f32 %v3642, %v3654
        %v3656 = vpop.f32.mrf.mxu0
        %3657 = vdwg.mxu0
        %3658 = vmatpush.bf16.msra.mxu0 %v3054
        %3659 = vmatpush.bf16.msra.mxu0 %v3043
        %3660 = vmatpush.bf16.msra.mxu0 %v3032
        %3661 = vmatpush.bf16.msra.mxu0 %v3021
        %3662 = vmatpush.bf16.msra.mxu0 %v3010
        %3663 = vmatpush.bf16.msra.mxu0 %v2999
        %3664 = vmatpush.bf16.msra.mxu0 %v2988
        %3665 = vmatpush.bf16.msra.mxu0 %v2977
        %3666 = vmatmul.bf16.gmra.mxu0 %v898
        %v3667 = vpop.f32.mrf.mxu0
        %v3668 = vadd.f32 %v3655, %v3667
        %v3669 = vpop.f32.mrf.mxu0
        %3670 = vdwg.mxu0
        %3671 = vmatpush.bf16.msra.mxu0 %v2615
        %3672 = vmatpush.bf16.msra.mxu0 %v2604
        %3673 = vmatpush.bf16.msra.mxu0 %v2593
        %3674 = vmatpush.bf16.msra.mxu0 %v2582
        %3675 = vmatpush.bf16.msra.mxu0 %v2571
        %3676 = vmatpush.bf16.msra.mxu0 %v2560
        %3677 = vmatpush.bf16.msra.mxu0 %v2549
        %3678 = vmatpush.bf16.msra.mxu0 %v2538
        %3679 = vmatmul.bf16.gmra.mxu0 %v893
        %v3680 = vpop.f32.mrf.mxu0
        %v3681 = vadd.f32 %v863, %v3680
        %v3682 = vpop.f32.mrf.mxu0
        %3683 = vdwg.mxu0
        %3684 = vmatpush.bf16.msra.mxu0 %v2703
        %3685 = vmatpush.bf16.msra.mxu0 %v2692
        %3686 = vmatpush.bf16.msra.mxu0 %v2681
        %3687 = vmatpush.bf16.msra.mxu0 %v2670
        %3688 = vmatpush.bf16.msra.mxu0 %v2659
        %3689 = vmatpush.bf16.msra.mxu0 %v2648
        %3690 = vmatpush.bf16.msra.mxu0 %v2637
        %3691 = vmatpush.bf16.msra.mxu0 %v2626
        %3692 = vmatmul.bf16.gmra.mxu0 %v894
        %v3693 = vpop.f32.mrf.mxu0
        %v3694 = vadd.f32 %v3681, %v3693
        %v3695 = vpop.f32.mrf.mxu0
        %3696 = vdwg.mxu0
        %3697 = vmatpush.bf16.msra.mxu0 %v2791
        %3698 = vmatpush.bf16.msra.mxu0 %v2780
        %3699 = vmatpush.bf16.msra.mxu0 %v2769
        %3700 = vmatpush.bf16.msra.mxu0 %v2758
        %3701 = vmatpush.bf16.msra.mxu0 %v2747
        %3702 = vmatpush.bf16.msra.mxu0 %v2736
        %3703 = vmatpush.bf16.msra.mxu0 %v2725
        %3704 = vmatpush.bf16.msra.mxu0 %v2714
        %3705 = vmatmul.bf16.gmra.mxu0 %v895
        %v3706 = vpop.f32.mrf.mxu0
        %v3707 = vadd.f32 %v3694, %v3706
        %v3708 = vpop.f32.mrf.mxu0
        %3709 = vdwg.mxu0
        %3710 = vmatpush.bf16.msra.mxu0 %v2879
        %3711 = vmatpush.bf16.msra.mxu0 %v2868
        %3712 = vmatpush.bf16.msra.mxu0 %v2857
        %3713 = vmatpush.bf16.msra.mxu0 %v2846
        %3714 = vmatpush.bf16.msra.mxu0 %v2835
        %3715 = vmatpush.bf16.msra.mxu0 %v2824
        %3716 = vmatpush.bf16.msra.mxu0 %v2813
        %3717 = vmatpush.bf16.msra.mxu0 %v2802
        %3718 = vmatmul.bf16.gmra.mxu0 %v896
        %v3719 = vpop.f32.mrf.mxu0
        %v3720 = vadd.f32 %v3707, %v3719
        %v3721 = vpop.f32.mrf.mxu0
        %3722 = vdwg.mxu0
        %3723 = vmatpush.bf16.msra.mxu0 %v2967
        %3724 = vmatpush.bf16.msra.mxu0 %v2956
        %3725 = vmatpush.bf16.msra.mxu0 %v2945
        %3726 = vmatpush.bf16.msra.mxu0 %v2934
        %3727 = vmatpush.bf16.msra.mxu0 %v2923
        %3728 = vmatpush.bf16.msra.mxu0 %v2912
        %3729 = vmatpush.bf16.msra.mxu0 %v2901
        %3730 = vmatpush.bf16.msra.mxu0 %v2890
        %3731 = vmatmul.bf16.gmra.mxu0 %v897
        %v3732 = vpop.f32.mrf.mxu0
        %v3733 = vadd.f32 %v3720, %v3732
        %v3734 = vpop.f32.mrf.mxu0
        %3735 = vdwg.mxu0
        %3736 = vmatpush.bf16.msra.mxu0 %v3055
        %3737 = vmatpush.bf16.msra.mxu0 %v3044
        %3738 = vmatpush.bf16.msra.mxu0 %v3033
        %3739 = vmatpush.bf16.msra.mxu0 %v3022
        %3740 = vmatpush.bf16.msra.mxu0 %v3011
        %3741 = vmatpush.bf16.msra.mxu0 %v3000
        %3742 = vmatpush.bf16.msra.mxu0 %v2989
        %3743 = vmatpush.bf16.msra.mxu0 %v2978
        %3744 = vmatmul.bf16.gmra.mxu0 %v898
        %v3745 = vpop.f32.mrf.mxu0
        %v3746 = vadd.f32 %v3733, %v3745
        %v3747 = vpop.f32.mrf.mxu0
        %3748 = vdwg.mxu0
        %3749 = vmatpush.bf16.msra.mxu0 %v2616
        %3750 = vmatpush.bf16.msra.mxu0 %v2605
        %3751 = vmatpush.bf16.msra.mxu0 %v2594
        %3752 = vmatpush.bf16.msra.mxu0 %v2583
        %3753 = vmatpush.bf16.msra.mxu0 %v2572
        %3754 = vmatpush.bf16.msra.mxu0 %v2561
        %3755 = vmatpush.bf16.msra.mxu0 %v2550
        %3756 = vmatpush.bf16.msra.mxu0 %v2539
        %3757 = vmatmul.bf16.gmra.mxu0 %v893
        %v3758 = vpop.f32.mrf.mxu0
        %v3759 = vadd.f32 %v864, %v3758
        %v3760 = vpop.f32.mrf.mxu0
        %3761 = vdwg.mxu0
        %3762 = vmatpush.bf16.msra.mxu0 %v2704
        %3763 = vmatpush.bf16.msra.mxu0 %v2693
        %3764 = vmatpush.bf16.msra.mxu0 %v2682
        %3765 = vmatpush.bf16.msra.mxu0 %v2671
        %3766 = vmatpush.bf16.msra.mxu0 %v2660
        %3767 = vmatpush.bf16.msra.mxu0 %v2649
        %3768 = vmatpush.bf16.msra.mxu0 %v2638
        %3769 = vmatpush.bf16.msra.mxu0 %v2627
        %3770 = vmatmul.bf16.gmra.mxu0 %v894
        %v3771 = vpop.f32.mrf.mxu0
        %v3772 = vadd.f32 %v3759, %v3771
        %v3773 = vpop.f32.mrf.mxu0
        %3774 = vdwg.mxu0
        %3775 = vmatpush.bf16.msra.mxu0 %v2792
        %3776 = vmatpush.bf16.msra.mxu0 %v2781
        %3777 = vmatpush.bf16.msra.mxu0 %v2770
        %3778 = vmatpush.bf16.msra.mxu0 %v2759
        %3779 = vmatpush.bf16.msra.mxu0 %v2748
        %3780 = vmatpush.bf16.msra.mxu0 %v2737
        %3781 = vmatpush.bf16.msra.mxu0 %v2726
        %3782 = vmatpush.bf16.msra.mxu0 %v2715
        %3783 = vmatmul.bf16.gmra.mxu0 %v895
        %v3784 = vpop.f32.mrf.mxu0
        %v3785 = vadd.f32 %v3772, %v3784
        %v3786 = vpop.f32.mrf.mxu0
        %3787 = vdwg.mxu0
        %3788 = vmatpush.bf16.msra.mxu0 %v2880
        %3789 = vmatpush.bf16.msra.mxu0 %v2869
        %3790 = vmatpush.bf16.msra.mxu0 %v2858
        %3791 = vmatpush.bf16.msra.mxu0 %v2847
        %3792 = vmatpush.bf16.msra.mxu0 %v2836
        %3793 = vmatpush.bf16.msra.mxu0 %v2825
        %3794 = vmatpush.bf16.msra.mxu0 %v2814
        %3795 = vmatpush.bf16.msra.mxu0 %v2803
        %3796 = vmatmul.bf16.gmra.mxu0 %v896
        %v3797 = vpop.f32.mrf.mxu0
        %v3798 = vadd.f32 %v3785, %v3797
        %v3799 = vpop.f32.mrf.mxu0
        %3800 = vdwg.mxu0
        %3801 = vmatpush.bf16.msra.mxu0 %v2968
        %3802 = vmatpush.bf16.msra.mxu0 %v2957
        %3803 = vmatpush.bf16.msra.mxu0 %v2946
        %3804 = vmatpush.bf16.msra.mxu0 %v2935
        %3805 = vmatpush.bf16.msra.mxu0 %v2924
        %3806 = vmatpush.bf16.msra.mxu0 %v2913
        %3807 = vmatpush.bf16.msra.mxu0 %v2902
        %3808 = vmatpush.bf16.msra.mxu0 %v2891
        %3809 = vmatmul.bf16.gmra.mxu0 %v897
        %v3810 = vpop.f32.mrf.mxu0
        %v3811 = vadd.f32 %v3798, %v3810
        %v3812 = vpop.f32.mrf.mxu0
        %3813 = vdwg.mxu0
        %3814 = vmatpush.bf16.msra.mxu0 %v3056
        %3815 = vmatpush.bf16.msra.mxu0 %v3045
        %3816 = vmatpush.bf16.msra.mxu0 %v3034
        %3817 = vmatpush.bf16.msra.mxu0 %v3023
        %3818 = vmatpush.bf16.msra.mxu0 %v3012
        %3819 = vmatpush.bf16.msra.mxu0 %v3001
        %3820 = vmatpush.bf16.msra.mxu0 %v2990
        %3821 = vmatpush.bf16.msra.mxu0 %v2979
        %3822 = vmatmul.bf16.gmra.mxu0 %v898
        %v3823 = vpop.f32.mrf.mxu0
        %v3824 = vadd.f32 %v3811, %v3823
        %v3825 = vpop.f32.mrf.mxu0
        %3826 = vdwg.mxu0
        %3827 = vmatpush.bf16.msra.mxu0 %v2617
        %3828 = vmatpush.bf16.msra.mxu0 %v2606
        %3829 = vmatpush.bf16.msra.mxu0 %v2595
        %3830 = vmatpush.bf16.msra.mxu0 %v2584
        %3831 = vmatpush.bf16.msra.mxu0 %v2573
        %3832 = vmatpush.bf16.msra.mxu0 %v2562
        %3833 = vmatpush.bf16.msra.mxu0 %v2551
        %3834 = vmatpush.bf16.msra.mxu0 %v2540
        %3835 = vmatmul.bf16.gmra.mxu0 %v893
        %v3836 = vpop.f32.mrf.mxu0
        %v3837 = vadd.f32 %v865, %v3836
        %v3838 = vpop.f32.mrf.mxu0
        %3839 = vdwg.mxu0
        %3840 = vmatpush.bf16.msra.mxu0 %v2705
        %3841 = vmatpush.bf16.msra.mxu0 %v2694
        %3842 = vmatpush.bf16.msra.mxu0 %v2683
        %3843 = vmatpush.bf16.msra.mxu0 %v2672
        %3844 = vmatpush.bf16.msra.mxu0 %v2661
        %3845 = vmatpush.bf16.msra.mxu0 %v2650
        %3846 = vmatpush.bf16.msra.mxu0 %v2639
        %3847 = vmatpush.bf16.msra.mxu0 %v2628
        %3848 = vmatmul.bf16.gmra.mxu0 %v894
        %v3849 = vpop.f32.mrf.mxu0
        %v3850 = vadd.f32 %v3837, %v3849
        %v3851 = vpop.f32.mrf.mxu0
        %3852 = vdwg.mxu0
        %3853 = vmatpush.bf16.msra.mxu0 %v2793
        %3854 = vmatpush.bf16.msra.mxu0 %v2782
        %3855 = vmatpush.bf16.msra.mxu0 %v2771
        %3856 = vmatpush.bf16.msra.mxu0 %v2760
        %3857 = vmatpush.bf16.msra.mxu0 %v2749
        %3858 = vmatpush.bf16.msra.mxu0 %v2738
        %3859 = vmatpush.bf16.msra.mxu0 %v2727
        %3860 = vmatpush.bf16.msra.mxu0 %v2716
        %3861 = vmatmul.bf16.gmra.mxu0 %v895
        %v3862 = vpop.f32.mrf.mxu0
        %v3863 = vadd.f32 %v3850, %v3862
        %v3864 = vpop.f32.mrf.mxu0
        %3865 = vdwg.mxu0
        %3866 = vmatpush.bf16.msra.mxu0 %v2881
        %3867 = vmatpush.bf16.msra.mxu0 %v2870
        %3868 = vmatpush.bf16.msra.mxu0 %v2859
        %3869 = vmatpush.bf16.msra.mxu0 %v2848
        %3870 = vmatpush.bf16.msra.mxu0 %v2837
        %3871 = vmatpush.bf16.msra.mxu0 %v2826
        %3872 = vmatpush.bf16.msra.mxu0 %v2815
        %3873 = vmatpush.bf16.msra.mxu0 %v2804
        %3874 = vmatmul.bf16.gmra.mxu0 %v896
        %v3875 = vpop.f32.mrf.mxu0
        %v3876 = vadd.f32 %v3863, %v3875
        %v3877 = vpop.f32.mrf.mxu0
        %3878 = vdwg.mxu0
        %3879 = vmatpush.bf16.msra.mxu0 %v2969
        %3880 = vmatpush.bf16.msra.mxu0 %v2958
        %3881 = vmatpush.bf16.msra.mxu0 %v2947
        %3882 = vmatpush.bf16.msra.mxu0 %v2936
        %3883 = vmatpush.bf16.msra.mxu0 %v2925
        %3884 = vmatpush.bf16.msra.mxu0 %v2914
        %3885 = vmatpush.bf16.msra.mxu0 %v2903
        %3886 = vmatpush.bf16.msra.mxu0 %v2892
        %3887 = vmatmul.bf16.gmra.mxu0 %v897
        %v3888 = vpop.f32.mrf.mxu0
        %v3889 = vadd.f32 %v3876, %v3888
        %v3890 = vpop.f32.mrf.mxu0
        %3891 = vdwg.mxu0
        %3892 = vmatpush.bf16.msra.mxu0 %v3057
        %3893 = vmatpush.bf16.msra.mxu0 %v3046
        %3894 = vmatpush.bf16.msra.mxu0 %v3035
        %3895 = vmatpush.bf16.msra.mxu0 %v3024
        %3896 = vmatpush.bf16.msra.mxu0 %v3013
        %3897 = vmatpush.bf16.msra.mxu0 %v3002
        %3898 = vmatpush.bf16.msra.mxu0 %v2991
        %3899 = vmatpush.bf16.msra.mxu0 %v2980
        %3900 = vmatmul.bf16.gmra.mxu0 %v898
        %v3901 = vpop.f32.mrf.mxu0
        %v3902 = vadd.f32 %v3889, %v3901
        %v3903 = vpop.f32.mrf.mxu0
        %3904 = vdwg.mxu0
        %3905 = vmatpush.bf16.msra.mxu0 %v2618
        %3906 = vmatpush.bf16.msra.mxu0 %v2607
        %3907 = vmatpush.bf16.msra.mxu0 %v2596
        %3908 = vmatpush.bf16.msra.mxu0 %v2585
        %3909 = vmatpush.bf16.msra.mxu0 %v2574
        %3910 = vmatpush.bf16.msra.mxu0 %v2563
        %3911 = vmatpush.bf16.msra.mxu0 %v2552
        %3912 = vmatpush.bf16.msra.mxu0 %v2541
        %3913 = vmatmul.bf16.gmra.mxu0 %v893
        %v3914 = vpop.f32.mrf.mxu0
        %v3915 = vadd.f32 %v866, %v3914
        %v3916 = vpop.f32.mrf.mxu0
        %3917 = vdwg.mxu0
        %3918 = vmatpush.bf16.msra.mxu0 %v2706
        %3919 = vmatpush.bf16.msra.mxu0 %v2695
        %3920 = vmatpush.bf16.msra.mxu0 %v2684
        %3921 = vmatpush.bf16.msra.mxu0 %v2673
        %3922 = vmatpush.bf16.msra.mxu0 %v2662
        %3923 = vmatpush.bf16.msra.mxu0 %v2651
        %3924 = vmatpush.bf16.msra.mxu0 %v2640
        %3925 = vmatpush.bf16.msra.mxu0 %v2629
        %3926 = vmatmul.bf16.gmra.mxu0 %v894
        %v3927 = vpop.f32.mrf.mxu0
        %v3928 = vadd.f32 %v3915, %v3927
        %v3929 = vpop.f32.mrf.mxu0
        %3930 = vdwg.mxu0
        %3931 = vmatpush.bf16.msra.mxu0 %v2794
        %3932 = vmatpush.bf16.msra.mxu0 %v2783
        %3933 = vmatpush.bf16.msra.mxu0 %v2772
        %3934 = vmatpush.bf16.msra.mxu0 %v2761
        %3935 = vmatpush.bf16.msra.mxu0 %v2750
        %3936 = vmatpush.bf16.msra.mxu0 %v2739
        %3937 = vmatpush.bf16.msra.mxu0 %v2728
        %3938 = vmatpush.bf16.msra.mxu0 %v2717
        %3939 = vmatmul.bf16.gmra.mxu0 %v895
        %v3940 = vpop.f32.mrf.mxu0
        %v3941 = vadd.f32 %v3928, %v3940
        %v3942 = vpop.f32.mrf.mxu0
        %3943 = vdwg.mxu0
        %3944 = vmatpush.bf16.msra.mxu0 %v2882
        %3945 = vmatpush.bf16.msra.mxu0 %v2871
        %3946 = vmatpush.bf16.msra.mxu0 %v2860
        %3947 = vmatpush.bf16.msra.mxu0 %v2849
        %3948 = vmatpush.bf16.msra.mxu0 %v2838
        %3949 = vmatpush.bf16.msra.mxu0 %v2827
        %3950 = vmatpush.bf16.msra.mxu0 %v2816
        %3951 = vmatpush.bf16.msra.mxu0 %v2805
        %3952 = vmatmul.bf16.gmra.mxu0 %v896
        %v3953 = vpop.f32.mrf.mxu0
        %v3954 = vadd.f32 %v3941, %v3953
        %v3955 = vpop.f32.mrf.mxu0
        %3956 = vdwg.mxu0
        %3957 = vmatpush.bf16.msra.mxu0 %v2970
        %3958 = vmatpush.bf16.msra.mxu0 %v2959
        %3959 = vmatpush.bf16.msra.mxu0 %v2948
        %3960 = vmatpush.bf16.msra.mxu0 %v2937
        %3961 = vmatpush.bf16.msra.mxu0 %v2926
        %3962 = vmatpush.bf16.msra.mxu0 %v2915
        %3963 = vmatpush.bf16.msra.mxu0 %v2904
        %3964 = vmatpush.bf16.msra.mxu0 %v2893
        %3965 = vmatmul.bf16.gmra.mxu0 %v897
        %v3966 = vpop.f32.mrf.mxu0
        %v3967 = vadd.f32 %v3954, %v3966
        %v3968 = vpop.f32.mrf.mxu0
        %3969 = vdwg.mxu0
        %3970 = vmatpush.bf16.msra.mxu0 %v3058
        %3971 = vmatpush.bf16.msra.mxu0 %v3047
        %3972 = vmatpush.bf16.msra.mxu0 %v3036
        %3973 = vmatpush.bf16.msra.mxu0 %v3025
        %3974 = vmatpush.bf16.msra.mxu0 %v3014
        %3975 = vmatpush.bf16.msra.mxu0 %v3003
        %3976 = vmatpush.bf16.msra.mxu0 %v2992
        %3977 = vmatpush.bf16.msra.mxu0 %v2981
        %3978 = vmatmul.bf16.gmra.mxu0 %v898
        %v3979 = vpop.f32.mrf.mxu0
        %v3980 = vadd.f32 %v3967, %v3979
        %v3981 = vpop.f32.mrf.mxu0
        %3982 = vdwg.mxu0
        %3983 = vmatpush.bf16.msra.mxu0 %v2619
        %3984 = vmatpush.bf16.msra.mxu0 %v2608
        %3985 = vmatpush.bf16.msra.mxu0 %v2597
        %3986 = vmatpush.bf16.msra.mxu0 %v2586
        %3987 = vmatpush.bf16.msra.mxu0 %v2575
        %3988 = vmatpush.bf16.msra.mxu0 %v2564
        %3989 = vmatpush.bf16.msra.mxu0 %v2553
        %3990 = vmatpush.bf16.msra.mxu0 %v2542
        %3991 = vmatmul.bf16.gmra.mxu0 %v893
        %v3992 = vpop.f32.mrf.mxu0
        %v3993 = vadd.f32 %v867, %v3992
        %v3994 = vpop.f32.mrf.mxu0
        %3995 = vdwg.mxu0
        %3996 = vmatpush.bf16.msra.mxu0 %v2707
        %3997 = vmatpush.bf16.msra.mxu0 %v2696
        %3998 = vmatpush.bf16.msra.mxu0 %v2685
        %3999 = vmatpush.bf16.msra.mxu0 %v2674
        %4000 = vmatpush.bf16.msra.mxu0 %v2663
        %4001 = vmatpush.bf16.msra.mxu0 %v2652
        %4002 = vmatpush.bf16.msra.mxu0 %v2641
        %4003 = vmatpush.bf16.msra.mxu0 %v2630
        %4004 = vmatmul.bf16.gmra.mxu0 %v894
        %v4005 = vpop.f32.mrf.mxu0
        %v4006 = vadd.f32 %v3993, %v4005
        %v4007 = vpop.f32.mrf.mxu0
        %4008 = vdwg.mxu0
        %4009 = vmatpush.bf16.msra.mxu0 %v2795
        %4010 = vmatpush.bf16.msra.mxu0 %v2784
        %4011 = vmatpush.bf16.msra.mxu0 %v2773
        %4012 = vmatpush.bf16.msra.mxu0 %v2762
        %4013 = vmatpush.bf16.msra.mxu0 %v2751
        %4014 = vmatpush.bf16.msra.mxu0 %v2740
        %4015 = vmatpush.bf16.msra.mxu0 %v2729
        %4016 = vmatpush.bf16.msra.mxu0 %v2718
        %4017 = vmatmul.bf16.gmra.mxu0 %v895
        %v4018 = vpop.f32.mrf.mxu0
        %v4019 = vadd.f32 %v4006, %v4018
        %v4020 = vpop.f32.mrf.mxu0
        %4021 = vdwg.mxu0
        %4022 = vmatpush.bf16.msra.mxu0 %v2883
        %4023 = vmatpush.bf16.msra.mxu0 %v2872
        %4024 = vmatpush.bf16.msra.mxu0 %v2861
        %4025 = vmatpush.bf16.msra.mxu0 %v2850
        %4026 = vmatpush.bf16.msra.mxu0 %v2839
        %4027 = vmatpush.bf16.msra.mxu0 %v2828
        %4028 = vmatpush.bf16.msra.mxu0 %v2817
        %4029 = vmatpush.bf16.msra.mxu0 %v2806
        %4030 = vmatmul.bf16.gmra.mxu0 %v896
        %v4031 = vpop.f32.mrf.mxu0
        %v4032 = vadd.f32 %v4019, %v4031
        %v4033 = vpop.f32.mrf.mxu0
        %4034 = vdwg.mxu0
        %4035 = vmatpush.bf16.msra.mxu0 %v2971
        %4036 = vmatpush.bf16.msra.mxu0 %v2960
        %4037 = vmatpush.bf16.msra.mxu0 %v2949
        %4038 = vmatpush.bf16.msra.mxu0 %v2938
        %4039 = vmatpush.bf16.msra.mxu0 %v2927
        %4040 = vmatpush.bf16.msra.mxu0 %v2916
        %4041 = vmatpush.bf16.msra.mxu0 %v2905
        %4042 = vmatpush.bf16.msra.mxu0 %v2894
        %4043 = vmatmul.bf16.gmra.mxu0 %v897
        %v4044 = vpop.f32.mrf.mxu0
        %v4045 = vadd.f32 %v4032, %v4044
        %v4046 = vpop.f32.mrf.mxu0
        %4047 = vdwg.mxu0
        %4048 = vmatpush.bf16.msra.mxu0 %v3059
        %4049 = vmatpush.bf16.msra.mxu0 %v3048
        %4050 = vmatpush.bf16.msra.mxu0 %v3037
        %4051 = vmatpush.bf16.msra.mxu0 %v3026
        %4052 = vmatpush.bf16.msra.mxu0 %v3015
        %4053 = vmatpush.bf16.msra.mxu0 %v3004
        %4054 = vmatpush.bf16.msra.mxu0 %v2993
        %4055 = vmatpush.bf16.msra.mxu0 %v2982
        %4056 = vmatmul.bf16.gmra.mxu0 %v898
        %v4057 = vpop.f32.mrf.mxu0
        %v4058 = vadd.f32 %v4045, %v4057
        %v4059 = vpop.f32.mrf.mxu0
        %4060 = vdwg.mxu0
        %4061 = vmatpush.bf16.msra.mxu0 %v2620
        %4062 = vmatpush.bf16.msra.mxu0 %v2609
        %4063 = vmatpush.bf16.msra.mxu0 %v2598
        %4064 = vmatpush.bf16.msra.mxu0 %v2587
        %4065 = vmatpush.bf16.msra.mxu0 %v2576
        %4066 = vmatpush.bf16.msra.mxu0 %v2565
        %4067 = vmatpush.bf16.msra.mxu0 %v2554
        %4068 = vmatpush.bf16.msra.mxu0 %v2543
        %4069 = vmatmul.bf16.gmra.mxu0 %v893
        %v4070 = vpop.f32.mrf.mxu0
        %v4071 = vadd.f32 %v868, %v4070
        %v4072 = vpop.f32.mrf.mxu0
        %4073 = vdwg.mxu0
        %4074 = vmatpush.bf16.msra.mxu0 %v2708
        %4075 = vmatpush.bf16.msra.mxu0 %v2697
        %4076 = vmatpush.bf16.msra.mxu0 %v2686
        %4077 = vmatpush.bf16.msra.mxu0 %v2675
        %4078 = vmatpush.bf16.msra.mxu0 %v2664
        %4079 = vmatpush.bf16.msra.mxu0 %v2653
        %4080 = vmatpush.bf16.msra.mxu0 %v2642
        %4081 = vmatpush.bf16.msra.mxu0 %v2631
        %4082 = vmatmul.bf16.gmra.mxu0 %v894
        %v4083 = vpop.f32.mrf.mxu0
        %v4084 = vadd.f32 %v4071, %v4083
        %v4085 = vpop.f32.mrf.mxu0
        %4086 = vdwg.mxu0
        %4087 = vmatpush.bf16.msra.mxu0 %v2796
        %4088 = vmatpush.bf16.msra.mxu0 %v2785
        %4089 = vmatpush.bf16.msra.mxu0 %v2774
        %4090 = vmatpush.bf16.msra.mxu0 %v2763
        %4091 = vmatpush.bf16.msra.mxu0 %v2752
        %4092 = vmatpush.bf16.msra.mxu0 %v2741
        %4093 = vmatpush.bf16.msra.mxu0 %v2730
        %4094 = vmatpush.bf16.msra.mxu0 %v2719
        %4095 = vmatmul.bf16.gmra.mxu0 %v895
        %v4096 = vpop.f32.mrf.mxu0
        %v4097 = vadd.f32 %v4084, %v4096
        %v4098 = vpop.f32.mrf.mxu0
        %4099 = vdwg.mxu0
        %4100 = vmatpush.bf16.msra.mxu0 %v2884
        %4101 = vmatpush.bf16.msra.mxu0 %v2873
        %4102 = vmatpush.bf16.msra.mxu0 %v2862
        %4103 = vmatpush.bf16.msra.mxu0 %v2851
        %4104 = vmatpush.bf16.msra.mxu0 %v2840
        %4105 = vmatpush.bf16.msra.mxu0 %v2829
        %4106 = vmatpush.bf16.msra.mxu0 %v2818
        %4107 = vmatpush.bf16.msra.mxu0 %v2807
        %4108 = vmatmul.bf16.gmra.mxu0 %v896
        %v4109 = vpop.f32.mrf.mxu0
        %v4110 = vadd.f32 %v4097, %v4109
        %v4111 = vpop.f32.mrf.mxu0
        %4112 = vdwg.mxu0
        %4113 = vmatpush.bf16.msra.mxu0 %v2972
        %4114 = vmatpush.bf16.msra.mxu0 %v2961
        %4115 = vmatpush.bf16.msra.mxu0 %v2950
        %4116 = vmatpush.bf16.msra.mxu0 %v2939
        %4117 = vmatpush.bf16.msra.mxu0 %v2928
        %4118 = vmatpush.bf16.msra.mxu0 %v2917
        %4119 = vmatpush.bf16.msra.mxu0 %v2906
        %4120 = vmatpush.bf16.msra.mxu0 %v2895
        %4121 = vmatmul.bf16.gmra.mxu0 %v897
        %v4122 = vpop.f32.mrf.mxu0
        %v4123 = vadd.f32 %v4110, %v4122
        %v4124 = vpop.f32.mrf.mxu0
        %4125 = vdwg.mxu0
        %4126 = vmatpush.bf16.msra.mxu0 %v3060
        %4127 = vmatpush.bf16.msra.mxu0 %v3049
        %4128 = vmatpush.bf16.msra.mxu0 %v3038
        %4129 = vmatpush.bf16.msra.mxu0 %v3027
        %4130 = vmatpush.bf16.msra.mxu0 %v3016
        %4131 = vmatpush.bf16.msra.mxu0 %v3005
        %4132 = vmatpush.bf16.msra.mxu0 %v2994
        %4133 = vmatpush.bf16.msra.mxu0 %v2983
        %4134 = vmatmul.bf16.gmra.mxu0 %v898
        %v4135 = vpop.f32.mrf.mxu0
        %v4136 = vadd.f32 %v4123, %v4135
        %v4137 = vpop.f32.mrf.mxu0
        %4138 = vdwg.mxu0
        %4139 = vmatpush.bf16.msra.mxu0 %v2621
        %4140 = vmatpush.bf16.msra.mxu0 %v2610
        %4141 = vmatpush.bf16.msra.mxu0 %v2599
        %4142 = vmatpush.bf16.msra.mxu0 %v2588
        %4143 = vmatpush.bf16.msra.mxu0 %v2577
        %4144 = vmatpush.bf16.msra.mxu0 %v2566
        %4145 = vmatpush.bf16.msra.mxu0 %v2555
        %4146 = vmatpush.bf16.msra.mxu0 %v2544
        %4147 = vmatmul.bf16.gmra.mxu0 %v893
        %v4148 = vpop.f32.mrf.mxu0
        %v4149 = vadd.f32 %v869, %v4148
        %v4150 = vpop.f32.mrf.mxu0
        %4151 = vdwg.mxu0
        %4152 = vmatpush.bf16.msra.mxu0 %v2709
        %4153 = vmatpush.bf16.msra.mxu0 %v2698
        %4154 = vmatpush.bf16.msra.mxu0 %v2687
        %4155 = vmatpush.bf16.msra.mxu0 %v2676
        %4156 = vmatpush.bf16.msra.mxu0 %v2665
        %4157 = vmatpush.bf16.msra.mxu0 %v2654
        %4158 = vmatpush.bf16.msra.mxu0 %v2643
        %4159 = vmatpush.bf16.msra.mxu0 %v2632
        %4160 = vmatmul.bf16.gmra.mxu0 %v894
        %v4161 = vpop.f32.mrf.mxu0
        %v4162 = vadd.f32 %v4149, %v4161
        %v4163 = vpop.f32.mrf.mxu0
        %4164 = vdwg.mxu0
        %4165 = vmatpush.bf16.msra.mxu0 %v2797
        %4166 = vmatpush.bf16.msra.mxu0 %v2786
        %4167 = vmatpush.bf16.msra.mxu0 %v2775
        %4168 = vmatpush.bf16.msra.mxu0 %v2764
        %4169 = vmatpush.bf16.msra.mxu0 %v2753
        %4170 = vmatpush.bf16.msra.mxu0 %v2742
        %4171 = vmatpush.bf16.msra.mxu0 %v2731
        %4172 = vmatpush.bf16.msra.mxu0 %v2720
        %4173 = vmatmul.bf16.gmra.mxu0 %v895
        %v4174 = vpop.f32.mrf.mxu0
        %v4175 = vadd.f32 %v4162, %v4174
        %v4176 = vpop.f32.mrf.mxu0
        %4177 = vdwg.mxu0
        %4178 = vmatpush.bf16.msra.mxu0 %v2885
        %4179 = vmatpush.bf16.msra.mxu0 %v2874
        %4180 = vmatpush.bf16.msra.mxu0 %v2863
        %4181 = vmatpush.bf16.msra.mxu0 %v2852
        %4182 = vmatpush.bf16.msra.mxu0 %v2841
        %4183 = vmatpush.bf16.msra.mxu0 %v2830
        %4184 = vmatpush.bf16.msra.mxu0 %v2819
        %4185 = vmatpush.bf16.msra.mxu0 %v2808
        %4186 = vmatmul.bf16.gmra.mxu0 %v896
        %v4187 = vpop.f32.mrf.mxu0
        %v4188 = vadd.f32 %v4175, %v4187
        %v4189 = vpop.f32.mrf.mxu0
        %4190 = vdwg.mxu0
        %4191 = vmatpush.bf16.msra.mxu0 %v2973
        %4192 = vmatpush.bf16.msra.mxu0 %v2962
        %4193 = vmatpush.bf16.msra.mxu0 %v2951
        %4194 = vmatpush.bf16.msra.mxu0 %v2940
        %4195 = vmatpush.bf16.msra.mxu0 %v2929
        %4196 = vmatpush.bf16.msra.mxu0 %v2918
        %4197 = vmatpush.bf16.msra.mxu0 %v2907
        %4198 = vmatpush.bf16.msra.mxu0 %v2896
        %4199 = vmatmul.bf16.gmra.mxu0 %v897
        %v4200 = vpop.f32.mrf.mxu0
        %v4201 = vadd.f32 %v4188, %v4200
        %v4202 = vpop.f32.mrf.mxu0
        %4203 = vdwg.mxu0
        %4204 = vmatpush.bf16.msra.mxu0 %v3061
        %4205 = vmatpush.bf16.msra.mxu0 %v3050
        %4206 = vmatpush.bf16.msra.mxu0 %v3039
        %4207 = vmatpush.bf16.msra.mxu0 %v3028
        %4208 = vmatpush.bf16.msra.mxu0 %v3017
        %4209 = vmatpush.bf16.msra.mxu0 %v3006
        %4210 = vmatpush.bf16.msra.mxu0 %v2995
        %4211 = vmatpush.bf16.msra.mxu0 %v2984
        %4212 = vmatmul.bf16.gmra.mxu0 %v898
        %v4213 = vpop.f32.mrf.mxu0
        %v4214 = vadd.f32 %v4201, %v4213
        %v4215 = vpop.f32.mrf.mxu0
        %4216 = vdwg.mxu0
        %4217 = vmatpush.bf16.msra.mxu0 %v2622
        %4218 = vmatpush.bf16.msra.mxu0 %v2611
        %4219 = vmatpush.bf16.msra.mxu0 %v2600
        %4220 = vmatpush.bf16.msra.mxu0 %v2589
        %4221 = vmatpush.bf16.msra.mxu0 %v2578
        %4222 = vmatpush.bf16.msra.mxu0 %v2567
        %4223 = vmatpush.bf16.msra.mxu0 %v2556
        %4224 = vmatpush.bf16.msra.mxu0 %v2545
        %4225 = vmatmul.bf16.gmra.mxu0 %v893
        %v4226 = vpop.f32.mrf.mxu0
        %v4227 = vadd.f32 %v870, %v4226
        %v4228 = vpop.f32.mrf.mxu0
        %4229 = vdwg.mxu0
        %4230 = vmatpush.bf16.msra.mxu0 %v2710
        %4231 = vmatpush.bf16.msra.mxu0 %v2699
        %4232 = vmatpush.bf16.msra.mxu0 %v2688
        %4233 = vmatpush.bf16.msra.mxu0 %v2677
        %4234 = vmatpush.bf16.msra.mxu0 %v2666
        %4235 = vmatpush.bf16.msra.mxu0 %v2655
        %4236 = vmatpush.bf16.msra.mxu0 %v2644
        %4237 = vmatpush.bf16.msra.mxu0 %v2633
        %4238 = vmatmul.bf16.gmra.mxu0 %v894
        %v4239 = vpop.f32.mrf.mxu0
        %v4240 = vadd.f32 %v4227, %v4239
        %v4241 = vpop.f32.mrf.mxu0
        %4242 = vdwg.mxu0
        %4243 = vmatpush.bf16.msra.mxu0 %v2798
        %4244 = vmatpush.bf16.msra.mxu0 %v2787
        %4245 = vmatpush.bf16.msra.mxu0 %v2776
        %4246 = vmatpush.bf16.msra.mxu0 %v2765
        %4247 = vmatpush.bf16.msra.mxu0 %v2754
        %4248 = vmatpush.bf16.msra.mxu0 %v2743
        %4249 = vmatpush.bf16.msra.mxu0 %v2732
        %4250 = vmatpush.bf16.msra.mxu0 %v2721
        %4251 = vmatmul.bf16.gmra.mxu0 %v895
        %v4252 = vpop.f32.mrf.mxu0
        %v4253 = vadd.f32 %v4240, %v4252
        %v4254 = vpop.f32.mrf.mxu0
        %4255 = vdwg.mxu0
        %4256 = vmatpush.bf16.msra.mxu0 %v2886
        %4257 = vmatpush.bf16.msra.mxu0 %v2875
        %4258 = vmatpush.bf16.msra.mxu0 %v2864
        %4259 = vmatpush.bf16.msra.mxu0 %v2853
        %4260 = vmatpush.bf16.msra.mxu0 %v2842
        %4261 = vmatpush.bf16.msra.mxu0 %v2831
        %4262 = vmatpush.bf16.msra.mxu0 %v2820
        %4263 = vmatpush.bf16.msra.mxu0 %v2809
        %4264 = vmatmul.bf16.gmra.mxu0 %v896
        %v4265 = vpop.f32.mrf.mxu0
        %v4266 = vadd.f32 %v4253, %v4265
        %v4267 = vpop.f32.mrf.mxu0
        %4268 = vdwg.mxu0
        %4269 = vmatpush.bf16.msra.mxu0 %v2974
        %4270 = vmatpush.bf16.msra.mxu0 %v2963
        %4271 = vmatpush.bf16.msra.mxu0 %v2952
        %4272 = vmatpush.bf16.msra.mxu0 %v2941
        %4273 = vmatpush.bf16.msra.mxu0 %v2930
        %4274 = vmatpush.bf16.msra.mxu0 %v2919
        %4275 = vmatpush.bf16.msra.mxu0 %v2908
        %4276 = vmatpush.bf16.msra.mxu0 %v2897
        %4277 = vmatmul.bf16.gmra.mxu0 %v897
        %v4278 = vpop.f32.mrf.mxu0
        %v4279 = vadd.f32 %v4266, %v4278
        %v4280 = vpop.f32.mrf.mxu0
        %4281 = vdwg.mxu0
        %4282 = vmatpush.bf16.msra.mxu0 %v3062
        %4283 = vmatpush.bf16.msra.mxu0 %v3051
        %4284 = vmatpush.bf16.msra.mxu0 %v3040
        %4285 = vmatpush.bf16.msra.mxu0 %v3029
        %4286 = vmatpush.bf16.msra.mxu0 %v3018
        %4287 = vmatpush.bf16.msra.mxu0 %v3007
        %4288 = vmatpush.bf16.msra.mxu0 %v2996
        %4289 = vmatpush.bf16.msra.mxu0 %v2985
        %4290 = vmatmul.bf16.gmra.mxu0 %v898
        %v4291 = vpop.f32.mrf.mxu0
        %v4292 = vadd.f32 %v4279, %v4291
        %v4293 = vpop.f32.mrf.mxu0
        %4294 = vdwg.mxu0
        %4295 = vmatpush.bf16.msra.mxu0 %v2623
        %4296 = vmatpush.bf16.msra.mxu0 %v2612
        %4297 = vmatpush.bf16.msra.mxu0 %v2601
        %4298 = vmatpush.bf16.msra.mxu0 %v2590
        %4299 = vmatpush.bf16.msra.mxu0 %v2579
        %4300 = vmatpush.bf16.msra.mxu0 %v2568
        %4301 = vmatpush.bf16.msra.mxu0 %v2557
        %4302 = vmatpush.bf16.msra.mxu0 %v2546
        %4303 = vmatmul.bf16.gmra.mxu0 %v893
        %v4304 = vpop.f32.mrf.mxu0
        %v4305 = vadd.f32 %v871, %v4304
        %v4306 = vpop.f32.mrf.mxu0
        %4307 = vdwg.mxu0
        %4308 = vmatpush.bf16.msra.mxu0 %v2711
        %4309 = vmatpush.bf16.msra.mxu0 %v2700
        %4310 = vmatpush.bf16.msra.mxu0 %v2689
        %4311 = vmatpush.bf16.msra.mxu0 %v2678
        %4312 = vmatpush.bf16.msra.mxu0 %v2667
        %4313 = vmatpush.bf16.msra.mxu0 %v2656
        %4314 = vmatpush.bf16.msra.mxu0 %v2645
        %4315 = vmatpush.bf16.msra.mxu0 %v2634
        %4316 = vmatmul.bf16.gmra.mxu0 %v894
        %v4317 = vpop.f32.mrf.mxu0
        %v4318 = vadd.f32 %v4305, %v4317
        %v4319 = vpop.f32.mrf.mxu0
        %4320 = vdwg.mxu0
        %4321 = vmatpush.bf16.msra.mxu0 %v2799
        %4322 = vmatpush.bf16.msra.mxu0 %v2788
        %4323 = vmatpush.bf16.msra.mxu0 %v2777
        %4324 = vmatpush.bf16.msra.mxu0 %v2766
        %4325 = vmatpush.bf16.msra.mxu0 %v2755
        %4326 = vmatpush.bf16.msra.mxu0 %v2744
        %4327 = vmatpush.bf16.msra.mxu0 %v2733
        %4328 = vmatpush.bf16.msra.mxu0 %v2722
        %4329 = vmatmul.bf16.gmra.mxu0 %v895
        %v4330 = vpop.f32.mrf.mxu0
        %v4331 = vadd.f32 %v4318, %v4330
        %v4332 = vpop.f32.mrf.mxu0
        %4333 = vdwg.mxu0
        %4334 = vmatpush.bf16.msra.mxu0 %v2887
        %4335 = vmatpush.bf16.msra.mxu0 %v2876
        %4336 = vmatpush.bf16.msra.mxu0 %v2865
        %4337 = vmatpush.bf16.msra.mxu0 %v2854
        %4338 = vmatpush.bf16.msra.mxu0 %v2843
        %4339 = vmatpush.bf16.msra.mxu0 %v2832
        %4340 = vmatpush.bf16.msra.mxu0 %v2821
        %4341 = vmatpush.bf16.msra.mxu0 %v2810
        %4342 = vmatmul.bf16.gmra.mxu0 %v896
        %v4343 = vpop.f32.mrf.mxu0
        %v4344 = vadd.f32 %v4331, %v4343
        %v4345 = vpop.f32.mrf.mxu0
        %4346 = vdwg.mxu0
        %4347 = vmatpush.bf16.msra.mxu0 %v2975
        %4348 = vmatpush.bf16.msra.mxu0 %v2964
        %4349 = vmatpush.bf16.msra.mxu0 %v2953
        %4350 = vmatpush.bf16.msra.mxu0 %v2942
        %4351 = vmatpush.bf16.msra.mxu0 %v2931
        %4352 = vmatpush.bf16.msra.mxu0 %v2920
        %4353 = vmatpush.bf16.msra.mxu0 %v2909
        %4354 = vmatpush.bf16.msra.mxu0 %v2898
        %4355 = vmatmul.bf16.gmra.mxu0 %v897
        %v4356 = vpop.f32.mrf.mxu0
        %v4357 = vadd.f32 %v4344, %v4356
        %v4358 = vpop.f32.mrf.mxu0
        %4359 = vdwg.mxu0
        %4360 = vmatpush.bf16.msra.mxu0 %v3063
        %4361 = vmatpush.bf16.msra.mxu0 %v3052
        %4362 = vmatpush.bf16.msra.mxu0 %v3041
        %4363 = vmatpush.bf16.msra.mxu0 %v3030
        %4364 = vmatpush.bf16.msra.mxu0 %v3019
        %4365 = vmatpush.bf16.msra.mxu0 %v3008
        %4366 = vmatpush.bf16.msra.mxu0 %v2997
        %4367 = vmatpush.bf16.msra.mxu0 %v2986
        %4368 = vmatmul.bf16.gmra.mxu0 %v898
        %v4369 = vpop.f32.mrf.mxu0
        %v4370 = vadd.f32 %v4357, %v4369
        %v4371 = vpop.f32.mrf.mxu0
        %4372 = vdwg.mxu0
        %4373 = vmatpush.bf16.msra.mxu0 %v2624
        %4374 = vmatpush.bf16.msra.mxu0 %v2613
        %4375 = vmatpush.bf16.msra.mxu0 %v2602
        %4376 = vmatpush.bf16.msra.mxu0 %v2591
        %4377 = vmatpush.bf16.msra.mxu0 %v2580
        %4378 = vmatpush.bf16.msra.mxu0 %v2569
        %4379 = vmatpush.bf16.msra.mxu0 %v2558
        %4380 = vmatpush.bf16.msra.mxu0 %v2547
        %4381 = vmatmul.bf16.gmra.mxu0 %v893
        %v4382 = vpop.f32.mrf.mxu0
        %v4383 = vadd.f32 %v872, %v4382
        %v4384 = vpop.f32.mrf.mxu0
        %4385 = vdwg.mxu0
        %4386 = vmatpush.bf16.msra.mxu0 %v2712
        %4387 = vmatpush.bf16.msra.mxu0 %v2701
        %4388 = vmatpush.bf16.msra.mxu0 %v2690
        %4389 = vmatpush.bf16.msra.mxu0 %v2679
        %4390 = vmatpush.bf16.msra.mxu0 %v2668
        %4391 = vmatpush.bf16.msra.mxu0 %v2657
        %4392 = vmatpush.bf16.msra.mxu0 %v2646
        %4393 = vmatpush.bf16.msra.mxu0 %v2635
        %4394 = vmatmul.bf16.gmra.mxu0 %v894
        %v4395 = vpop.f32.mrf.mxu0
        %v4396 = vadd.f32 %v4383, %v4395
        %v4397 = vpop.f32.mrf.mxu0
        %4398 = vdwg.mxu0
        %4399 = vmatpush.bf16.msra.mxu0 %v2800
        %4400 = vmatpush.bf16.msra.mxu0 %v2789
        %4401 = vmatpush.bf16.msra.mxu0 %v2778
        %4402 = vmatpush.bf16.msra.mxu0 %v2767
        %4403 = vmatpush.bf16.msra.mxu0 %v2756
        %4404 = vmatpush.bf16.msra.mxu0 %v2745
        %4405 = vmatpush.bf16.msra.mxu0 %v2734
        %4406 = vmatpush.bf16.msra.mxu0 %v2723
        %4407 = vmatmul.bf16.gmra.mxu0 %v895
        %v4408 = vpop.f32.mrf.mxu0
        %v4409 = vadd.f32 %v4396, %v4408
        %v4410 = vpop.f32.mrf.mxu0
        %4411 = vdwg.mxu0
        %4412 = vmatpush.bf16.msra.mxu0 %v2888
        %4413 = vmatpush.bf16.msra.mxu0 %v2877
        %4414 = vmatpush.bf16.msra.mxu0 %v2866
        %4415 = vmatpush.bf16.msra.mxu0 %v2855
        %4416 = vmatpush.bf16.msra.mxu0 %v2844
        %4417 = vmatpush.bf16.msra.mxu0 %v2833
        %4418 = vmatpush.bf16.msra.mxu0 %v2822
        %4419 = vmatpush.bf16.msra.mxu0 %v2811
        %4420 = vmatmul.bf16.gmra.mxu0 %v896
        %v4421 = vpop.f32.mrf.mxu0
        %v4422 = vadd.f32 %v4409, %v4421
        %v4423 = vpop.f32.mrf.mxu0
        %4424 = vdwg.mxu0
        %4425 = vmatpush.bf16.msra.mxu0 %v2976
        %4426 = vmatpush.bf16.msra.mxu0 %v2965
        %4427 = vmatpush.bf16.msra.mxu0 %v2954
        %4428 = vmatpush.bf16.msra.mxu0 %v2943
        %4429 = vmatpush.bf16.msra.mxu0 %v2932
        %4430 = vmatpush.bf16.msra.mxu0 %v2921
        %4431 = vmatpush.bf16.msra.mxu0 %v2910
        %4432 = vmatpush.bf16.msra.mxu0 %v2899
        %4433 = vmatmul.bf16.gmra.mxu0 %v897
        %v4434 = vpop.f32.mrf.mxu0
        %v4435 = vadd.f32 %v4422, %v4434
        %v4436 = vpop.f32.mrf.mxu0
        %4437 = vdwg.mxu0
        %4438 = vmatpush.bf16.msra.mxu0 %v3064
        %4439 = vmatpush.bf16.msra.mxu0 %v3053
        %4440 = vmatpush.bf16.msra.mxu0 %v3042
        %4441 = vmatpush.bf16.msra.mxu0 %v3031
        %4442 = vmatpush.bf16.msra.mxu0 %v3020
        %4443 = vmatpush.bf16.msra.mxu0 %v3009
        %4444 = vmatpush.bf16.msra.mxu0 %v2998
        %4445 = vmatpush.bf16.msra.mxu0 %v2987
        %4446 = vmatmul.bf16.gmra.mxu0 %v898
        %v4447 = vpop.f32.mrf.mxu0
        %v4448 = vadd.f32 %v4435, %v4447
        %v4449 = vpop.f32.mrf.mxu0
        %4450 = vdwg.mxu0
        %v4451 = vmax.f32 %v3668, 0.0
        %v4452 = vmax.f32 %v3746, 0.0
        %v4453 = vmax.f32 %v3824, 0.0
        %v4454 = vmax.f32 %v3902, 0.0
        %v4455 = vmax.f32 %v3980, 0.0
        %v4456 = vmax.f32 %v4058, 0.0
        %v4457 = vmax.f32 %v4136, 0.0
        %v4458 = vmax.f32 %v4214, 0.0
        %v4459 = vmax.f32 %v4292, 0.0
        %v4460 = vmax.f32 %v4370, 0.0
        %v4461 = vmax.f32 %v4448, 0.0
        %v4462 = vld [vmem:[%s5] sm:$0xff]
        %v4463 = vpack.c.bf16 %v4451, %v4451
        %v4464 = vpack.c.bf16 %v4452, %v4452
        %v4465 = vpack.c.bf16 %v4453, %v4453
        %v4466 = vpack.c.bf16 %v4454, %v4454
        %v4467 = vpack.c.bf16 %v4455, %v4455
        %v4468 = vpack.c.bf16 %v4456, %v4456
        %v4469 = vpack.c.bf16 %v4457, %v4457
        %v4470 = vpack.c.bf16 %v4458, %v4458
        %v4471 = vpack.c.bf16 %v4459, %v4459
        %v4472 = vpack.c.bf16 %v4460, %v4460
        %v4473 = vpack.c.bf16 %v4461, %v4461
        %v4474 = vld [vmem:[%s272] sm:$0xf]
        %v4475 = vld [vmem:[%s272 + $0x4] sm:$0xf]
        %v4476 = vld [vmem:[%s272 + $0x8] sm:$0xf]
        %v4477 = vld [vmem:[%s272 + $0xc] sm:$0xf]
        %v4478 = vld [vmem:[%s272 + $0x10] sm:$0xf]
        %v4479 = vld [vmem:[%s272 + $0x14] sm:$0xf]
        %v4480 = vld [vmem:[%s272 + $0x18] sm:$0xf]
        %v4481 = vld [vmem:[%s272 + $0x1c] sm:$0xf]
        %v4482 = vld [vmem:[%s272 + $0x20] sm:$0xf]
        %v4483 = vld [vmem:[%s272 + $0x24] sm:$0xf]
        %v4484 = vld [vmem:[%s272 + $0x28] sm:$0xf]
        %v4485 = vld [vmem:[%s272 + $0x2c] sm:$0xf]
        %v4486 = vld [vmem:[%s272 + $0x30] sm:$0xf]
        %v4487 = vld [vmem:[%s272 + $0x34] sm:$0xf]
        %v4488 = vld [vmem:[%s272 + $0x38] sm:$0xf]
        %v4489 = vld [vmem:[%s272 + $0x3c] sm:$0xf]
        %v4490 = vld [vmem:[%s272 + $0x40] sm:$0xf]
        %v4491 = vld [vmem:[%s272 + $0x44] sm:$0xf]
        %v4492 = vld [vmem:[%s272 + $0x48] sm:$0xf]
        %v4493 = vld [vmem:[%s272 + $0x4c] sm:$0xf]
        %v4494 = vld [vmem:[%s272 + $0x50] sm:$0xf]
        %v4495 = vld [vmem:[%s272 + $0x54] sm:$0xf]
        %v4496 = vld [vmem:[%s272 + $0x58] sm:$0xf]
        %v4497 = vld [vmem:[%s272 + $0x5c] sm:$0xf]
        %v4498 = vld [vmem:[%s272 + $0x60] sm:$0xf]
        %v4499 = vld [vmem:[%s272 + $0x64] sm:$0xf]
        %v4500 = vld [vmem:[%s272 + $0x68] sm:$0xf]
        %v4501 = vld [vmem:[%s272 + $0x6c] sm:$0xf]
        %v4502 = vld [vmem:[%s272 + $0x70] sm:$0xf]
        %v4503 = vld [vmem:[%s272 + $0x74] sm:$0xf]
        %v4504 = vld [vmem:[%s272 + $0x78] sm:$0xf]
        %v4505 = vld [vmem:[%s272 + $0x7c] sm:$0xf]
        %v4506 = vld [vmem:[%s272 + $0x80] sm:$0xf]
        %v4507 = vld [vmem:[%s272 + $0x84] sm:$0xf]
        %v4508 = vld [vmem:[%s272 + $0x88] sm:$0xf]
        %v4509 = vld [vmem:[%s272 + $0x8c] sm:$0xf]
        %v4510 = vld [vmem:[%s272 + $0x90] sm:$0xf]
        %v4511 = vld [vmem:[%s272 + $0x94] sm:$0xf]
        %v4512 = vld [vmem:[%s272 + $0x98] sm:$0xf]
        %v4513 = vld [vmem:[%s272 + $0x9c] sm:$0xf]
        %v4514 = vld [vmem:[%s272 + $0xa0] sm:$0xf]
        %v4515 = vld [vmem:[%s272 + $0xa4] sm:$0xf]
        %v4516 = vld [vmem:[%s272 + $0xa8] sm:$0xf]
        %v4517 = vld [vmem:[%s272 + $0xac] sm:$0xf]
        %v4518 = vld [vmem:[%s272 + $0xb0] sm:$0xf]
        %v4519 = vld [vmem:[%s272 + $0xb4] sm:$0xf]
        %v4520 = vld [vmem:[%s272 + $0xb8] sm:$0xf]
        %v4521 = vld [vmem:[%s272 + $0xbc] sm:$0xf]
        %v4522 = vld [vmem:[%s272 + $0xc0] sm:$0xf]
        %v4523 = vld [vmem:[%s272 + $0xc4] sm:$0xf]
        %v4524 = vld [vmem:[%s272 + $0xc8] sm:$0xf]
        %v4525 = vld [vmem:[%s272 + $0xcc] sm:$0xf]
        %v4526 = vld [vmem:[%s272 + $0xd0] sm:$0xf]
        %v4527 = vld [vmem:[%s272 + $0xd4] sm:$0xf]
        %v4528 = vld [vmem:[%s272 + $0xd8] sm:$0xf]
        %v4529 = vld [vmem:[%s272 + $0xdc] sm:$0xf]
        %v4530 = vld [vmem:[%s272 + $0xe0] sm:$0xf]
        %v4531 = vld [vmem:[%s272 + $0xe4] sm:$0xf]
        %v4532 = vld [vmem:[%s272 + $0xe8] sm:$0xf]
        %v4533 = vld [vmem:[%s272 + $0xec] sm:$0xf]
        %v4534 = vld [vmem:[%s272 + $0xf0] sm:$0xf]
        %v4535 = vld [vmem:[%s272 + $0xf4] sm:$0xf]
        %v4536 = vld [vmem:[%s272 + $0xf8] sm:$0xf]
        %v4537 = vld [vmem:[%s272 + $0xfc] sm:$0xf]
        %v4538 = vld [vmem:[%s272 + $0x100] sm:$0xf]
        %v4539 = vld [vmem:[%s272 + $0x104] sm:$0xf]
        %v4540 = vld [vmem:[%s272 + $0x108] sm:$0xf]
        %v4541 = vld [vmem:[%s272 + $0x10c] sm:$0xf]
        %v4542 = vld [vmem:[%s272 + $0x110] sm:$0xf]
        %v4543 = vld [vmem:[%s272 + $0x114] sm:$0xf]
        %v4544 = vld [vmem:[%s272 + $0x118] sm:$0xf]
        %v4545 = vld [vmem:[%s272 + $0x11c] sm:$0xf]
        %v4546 = vld [vmem:[%s272 + $0x120] sm:$0xf]
        %v4547 = vld [vmem:[%s272 + $0x124] sm:$0xf]
        %v4548 = vld [vmem:[%s272 + $0x128] sm:$0xf]
        %v4549 = vld [vmem:[%s272 + $0x12c] sm:$0xf]
        %v4550 = vld [vmem:[%s272 + $0x130] sm:$0xf]
        %v4551 = vld [vmem:[%s272 + $0x134] sm:$0xf]
        %v4552 = vld [vmem:[%s272 + $0x138] sm:$0xf]
        %v4553 = vld [vmem:[%s272 + $0x13c] sm:$0xf]
        %v4554 = vld [vmem:[%s272 + $0x140] sm:$0xf]
        %v4555 = vld [vmem:[%s272 + $0x144] sm:$0xf]
        %v4556 = vld [vmem:[%s272 + $0x148] sm:$0xf]
        %v4557 = vld [vmem:[%s272 + $0x14c] sm:$0xf]
        %v4558 = vld [vmem:[%s272 + $0x150] sm:$0xf]
        %v4559 = vld [vmem:[%s272 + $0x154] sm:$0xf]
        %v4560 = vld [vmem:[%s272 + $0x158] sm:$0xf]
        %v4561 = vld [vmem:[%s272 + $0x15c] sm:$0xf]
        %v4562 = vld [vmem:[%s272 + $0x160] sm:$0xf]
        %v4563 = vld [vmem:[%s272 + $0x164] sm:$0xf]
        %v4564 = vld [vmem:[%s272 + $0x168] sm:$0xf]
        %v4565 = vld [vmem:[%s272 + $0x16c] sm:$0xf]
        %v4566 = vld [vmem:[%s272 + $0x170] sm:$0xf]
        %v4567 = vld [vmem:[%s272 + $0x174] sm:$0xf]
        %v4568 = vld [vmem:[%s272 + $0x178] sm:$0xf]
        %v4569 = vld [vmem:[%s272 + $0x17c] sm:$0xf]
        %v4570 = vld [vmem:[%s272 + $0x180] sm:$0xf]
        %v4571 = vld [vmem:[%s272 + $0x184] sm:$0xf]
        %v4572 = vld [vmem:[%s272 + $0x188] sm:$0xf]
        %v4573 = vld [vmem:[%s272 + $0x18c] sm:$0xf]
        %v4574 = vld [vmem:[%s272 + $0x190] sm:$0xf]
        %v4575 = vld [vmem:[%s272 + $0x194] sm:$0xf]
        %v4576 = vld [vmem:[%s272 + $0x198] sm:$0xf]
        %v4577 = vld [vmem:[%s272 + $0x19c] sm:$0xf]
        %v4578 = vld [vmem:[%s272 + $0x1a0] sm:$0xf]
        %v4579 = vld [vmem:[%s272 + $0x1a4] sm:$0xf]
        %v4580 = vld [vmem:[%s272 + $0x1a8] sm:$0xf]
        %v4581 = vld [vmem:[%s272 + $0x1ac] sm:$0xf]
        %v4582 = vld [vmem:[%s272 + $0x1b0] sm:$0xf]
        %v4583 = vld [vmem:[%s272 + $0x1b4] sm:$0xf]
        %v4584 = vld [vmem:[%s272 + $0x1b8] sm:$0xf]
        %v4585 = vld [vmem:[%s272 + $0x1bc] sm:$0xf]
        %v4586 = vld [vmem:[%s272 + $0x1c0] sm:$0xf]
        %v4587 = vld [vmem:[%s272 + $0x1c4] sm:$0xf]
        %v4588 = vld [vmem:[%s272 + $0x1c8] sm:$0xf]
        %v4589 = vld [vmem:[%s272 + $0x1cc] sm:$0xf]
        %v4590 = vld [vmem:[%s272 + $0x1d0] sm:$0xf]
        %v4591 = vld [vmem:[%s272 + $0x1d4] sm:$0xf]
        %v4592 = vld [vmem:[%s272 + $0x1d8] sm:$0xf]
        %v4593 = vld [vmem:[%s272 + $0x1dc] sm:$0xf]
        %v4594 = vld [vmem:[%s272 + $0x1e0] sm:$0xf]
        %v4595 = vld [vmem:[%s272 + $0x1e4] sm:$0xf]
        %v4596 = vld [vmem:[%s272 + $0x1e8] sm:$0xf]
        %v4597 = vld [vmem:[%s272 + $0x1ec] sm:$0xf]
        %v4598 = vld [vmem:[%s272 + $0x1f0] sm:$0xf]
        %v4599 = vld [vmem:[%s272 + $0x1f4] sm:$0xf]
        %v4600 = vld [vmem:[%s272 + $0x1f8] sm:$0xf]
        %v4601 = vld [vmem:[%s272 + $0x1fc] sm:$0xf]
        %v4602 = vld [vmem:[%s272 + $0x200] sm:$0xf]
        %v4603 = vld [vmem:[%s272 + $0x204] sm:$0xf]
        %v4604 = vld [vmem:[%s272 + $0x208] sm:$0xf]
        %v4605 = vld [vmem:[%s272 + $0x20c] sm:$0xf]
        %v4606 = vld [vmem:[%s272 + $0x210] sm:$0xf]
        %v4607 = vld [vmem:[%s272 + $0x214] sm:$0xf]
        %v4608 = vld [vmem:[%s272 + $0x218] sm:$0xf]
        %v4609 = vld [vmem:[%s272 + $0x21c] sm:$0xf]
        %v4610 = vld [vmem:[%s272 + $0x220] sm:$0xf]
        %v4611 = vld [vmem:[%s272 + $0x224] sm:$0xf]
        %v4612 = vld [vmem:[%s272 + $0x228] sm:$0xf]
        %v4613 = vld [vmem:[%s272 + $0x22c] sm:$0xf]
        %v4614 = vld [vmem:[%s272 + $0x230] sm:$0xf]
        %v4615 = vld [vmem:[%s272 + $0x234] sm:$0xf]
        %v4616 = vld [vmem:[%s272 + $0x238] sm:$0xf]
        %v4617 = vld [vmem:[%s272 + $0x23c] sm:$0xf]
        %v4618 = vld [vmem:[%s272 + $0x240] sm:$0xf]
        %v4619 = vld [vmem:[%s272 + $0x244] sm:$0xf]
        %v4620 = vld [vmem:[%s272 + $0x248] sm:$0xf]
        %v4621 = vld [vmem:[%s272 + $0x24c] sm:$0xf]
        %v4622 = vld [vmem:[%s272 + $0x250] sm:$0xf]
        %v4623 = vld [vmem:[%s272 + $0x254] sm:$0xf]
        %v4624 = vld [vmem:[%s272 + $0x258] sm:$0xf]
        %v4625 = vld [vmem:[%s272 + $0x25c] sm:$0xf]
        %v4626 = vld [vmem:[%s272 + $0x260] sm:$0xf]
        %v4627 = vld [vmem:[%s272 + $0x264] sm:$0xf]
        %v4628 = vld [vmem:[%s272 + $0x268] sm:$0xf]
        %v4629 = vld [vmem:[%s272 + $0x26c] sm:$0xf]
        %v4630 = vld [vmem:[%s272 + $0x270] sm:$0xf]
        %v4631 = vld [vmem:[%s272 + $0x274] sm:$0xf]
        %v4632 = vld [vmem:[%s272 + $0x278] sm:$0xf]
        %v4633 = vld [vmem:[%s272 + $0x27c] sm:$0xf]
        %v4634 = vld [vmem:[%s272 + $0x280] sm:$0xf]
        %v4635 = vld [vmem:[%s272 + $0x284] sm:$0xf]
        %v4636 = vld [vmem:[%s272 + $0x288] sm:$0xf]
        %v4637 = vld [vmem:[%s272 + $0x28c] sm:$0xf]
        %v4638 = vld [vmem:[%s272 + $0x290] sm:$0xf]
        %v4639 = vld [vmem:[%s272 + $0x294] sm:$0xf]
        %v4640 = vld [vmem:[%s272 + $0x298] sm:$0xf]
        %v4641 = vld [vmem:[%s272 + $0x29c] sm:$0xf]
        %v4642 = vld [vmem:[%s272 + $0x2a0] sm:$0xf]
        %v4643 = vld [vmem:[%s272 + $0x2a4] sm:$0xf]
        %v4644 = vld [vmem:[%s272 + $0x2a8] sm:$0xf]
        %v4645 = vld [vmem:[%s272 + $0x2ac] sm:$0xf]
        %v4646 = vld [vmem:[%s272 + $0x2b0] sm:$0xf]
        %v4647 = vld [vmem:[%s272 + $0x2b4] sm:$0xf]
        %v4648 = vld [vmem:[%s272 + $0x2b8] sm:$0xf]
        %v4649 = vld [vmem:[%s272 + $0x2bc] sm:$0xf]
        %v4826 = vunpack.c.l.b16 %v4474
        %v4827 = vunpack.c.l.b16 %v4475
        %v4828 = vunpack.c.l.b16 %v4476
        %v4829 = vunpack.c.l.b16 %v4477
        %v4830 = vunpack.c.l.b16 %v4478
        %v4831 = vunpack.c.l.b16 %v4479
        %v4832 = vunpack.c.l.b16 %v4480
        %v4833 = vunpack.c.l.b16 %v4481
        %v4834 = vunpack.c.l.b16 %v4482
        %v4835 = vunpack.c.l.b16 %v4483
        %v4836 = vunpack.c.l.b16 %v4484
        %v4837 = vunpack.c.l.b16 %v4485
        %v4838 = vunpack.c.l.b16 %v4486
        %v4839 = vunpack.c.l.b16 %v4487
        %v4840 = vunpack.c.l.b16 %v4488
        %v4841 = vunpack.c.l.b16 %v4489
        %v4842 = vunpack.c.l.b16 %v4490
        %v4843 = vunpack.c.l.b16 %v4491
        %v4844 = vunpack.c.l.b16 %v4492
        %v4845 = vunpack.c.l.b16 %v4493
        %v4846 = vunpack.c.l.b16 %v4494
        %v4847 = vunpack.c.l.b16 %v4495
        %v4848 = vunpack.c.l.b16 %v4496
        %v4849 = vunpack.c.l.b16 %v4497
        %v4850 = vunpack.c.l.b16 %v4498
        %v4851 = vunpack.c.l.b16 %v4499
        %v4852 = vunpack.c.l.b16 %v4500
        %v4853 = vunpack.c.l.b16 %v4501
        %v4854 = vunpack.c.l.b16 %v4502
        %v4855 = vunpack.c.l.b16 %v4503
        %v4856 = vunpack.c.l.b16 %v4504
        %v4857 = vunpack.c.l.b16 %v4505
        %v4858 = vunpack.c.l.b16 %v4506
        %v4859 = vunpack.c.l.b16 %v4507
        %v4860 = vunpack.c.l.b16 %v4508
        %v4861 = vunpack.c.l.b16 %v4509
        %v4862 = vunpack.c.l.b16 %v4510
        %v4863 = vunpack.c.l.b16 %v4511
        %v4864 = vunpack.c.l.b16 %v4512
        %v4865 = vunpack.c.l.b16 %v4513
        %v4866 = vunpack.c.l.b16 %v4514
        %v4867 = vunpack.c.l.b16 %v4515
        %v4868 = vunpack.c.l.b16 %v4516
        %v4869 = vunpack.c.l.b16 %v4517
        %v4870 = vunpack.c.l.b16 %v4518
        %v4871 = vunpack.c.l.b16 %v4519
        %v4872 = vunpack.c.l.b16 %v4520
        %v4873 = vunpack.c.l.b16 %v4521
        %v4874 = vunpack.c.l.b16 %v4522
        %v4875 = vunpack.c.l.b16 %v4523
        %v4876 = vunpack.c.l.b16 %v4524
        %v4877 = vunpack.c.l.b16 %v4525
        %v4878 = vunpack.c.l.b16 %v4526
        %v4879 = vunpack.c.l.b16 %v4527
        %v4880 = vunpack.c.l.b16 %v4528
        %v4881 = vunpack.c.l.b16 %v4529
        %v4882 = vunpack.c.l.b16 %v4530
        %v4883 = vunpack.c.l.b16 %v4531
        %v4884 = vunpack.c.l.b16 %v4532
        %v4885 = vunpack.c.l.b16 %v4533
        %v4886 = vunpack.c.l.b16 %v4534
        %v4887 = vunpack.c.l.b16 %v4535
        %v4888 = vunpack.c.l.b16 %v4536
        %v4889 = vunpack.c.l.b16 %v4537
        %v4890 = vunpack.c.l.b16 %v4538
        %v4891 = vunpack.c.l.b16 %v4539
        %v4892 = vunpack.c.l.b16 %v4540
        %v4893 = vunpack.c.l.b16 %v4541
        %v4894 = vunpack.c.l.b16 %v4542
        %v4895 = vunpack.c.l.b16 %v4543
        %v4896 = vunpack.c.l.b16 %v4544
        %v4897 = vunpack.c.l.b16 %v4545
        %v4898 = vunpack.c.l.b16 %v4546
        %v4899 = vunpack.c.l.b16 %v4547
        %v4900 = vunpack.c.l.b16 %v4548
        %v4901 = vunpack.c.l.b16 %v4549
        %v4902 = vunpack.c.l.b16 %v4550
        %v4903 = vunpack.c.l.b16 %v4551
        %v4904 = vunpack.c.l.b16 %v4552
        %v4905 = vunpack.c.l.b16 %v4553
        %v4906 = vunpack.c.l.b16 %v4554
        %v4907 = vunpack.c.l.b16 %v4555
        %v4908 = vunpack.c.l.b16 %v4556
        %v4909 = vunpack.c.l.b16 %v4557
        %v4910 = vunpack.c.l.b16 %v4558
        %v4911 = vunpack.c.l.b16 %v4559
        %v4912 = vunpack.c.l.b16 %v4560
        %v4913 = vunpack.c.l.b16 %v4561
        %v4914 = vunpack.c.l.b16 %v4562
        %v4915 = vunpack.c.l.b16 %v4563
        %v4916 = vunpack.c.l.b16 %v4564
        %v4917 = vunpack.c.l.b16 %v4565
        %v4918 = vunpack.c.l.b16 %v4566
        %v4919 = vunpack.c.l.b16 %v4567
        %v4920 = vunpack.c.l.b16 %v4568
        %v4921 = vunpack.c.l.b16 %v4569
        %v4922 = vunpack.c.l.b16 %v4570
        %v4923 = vunpack.c.l.b16 %v4571
        %v4924 = vunpack.c.l.b16 %v4572
        %v4925 = vunpack.c.l.b16 %v4573
        %v4926 = vunpack.c.l.b16 %v4574
        %v4927 = vunpack.c.l.b16 %v4575
        %v4928 = vunpack.c.l.b16 %v4576
        %v4929 = vunpack.c.l.b16 %v4577
        %v4930 = vunpack.c.l.b16 %v4578
        %v4931 = vunpack.c.l.b16 %v4579
        %v4932 = vunpack.c.l.b16 %v4580
        %v4933 = vunpack.c.l.b16 %v4581
        %v4934 = vunpack.c.l.b16 %v4582
        %v4935 = vunpack.c.l.b16 %v4583
        %v4936 = vunpack.c.l.b16 %v4584
        %v4937 = vunpack.c.l.b16 %v4585
        %v4938 = vunpack.c.l.b16 %v4586
        %v4939 = vunpack.c.l.b16 %v4587
        %v4940 = vunpack.c.l.b16 %v4588
        %v4941 = vunpack.c.l.b16 %v4589
        %v4942 = vunpack.c.l.b16 %v4590
        %v4943 = vunpack.c.l.b16 %v4591
        %v4944 = vunpack.c.l.b16 %v4592
        %v4945 = vunpack.c.l.b16 %v4593
        %v4946 = vunpack.c.l.b16 %v4594
        %v4947 = vunpack.c.l.b16 %v4595
        %v4948 = vunpack.c.l.b16 %v4596
        %v4949 = vunpack.c.l.b16 %v4597
        %v4950 = vunpack.c.l.b16 %v4598
        %v4951 = vunpack.c.l.b16 %v4599
        %v4952 = vunpack.c.l.b16 %v4600
        %v4953 = vunpack.c.l.b16 %v4601
        %v4954 = vunpack.c.l.b16 %v4602
        %v4955 = vunpack.c.l.b16 %v4603
        %v4956 = vunpack.c.l.b16 %v4604
        %v4957 = vunpack.c.l.b16 %v4605
        %v4958 = vunpack.c.l.b16 %v4606
        %v4959 = vunpack.c.l.b16 %v4607
        %v4960 = vunpack.c.l.b16 %v4608
        %v4961 = vunpack.c.l.b16 %v4609
        %v4962 = vunpack.c.l.b16 %v4610
        %v4963 = vunpack.c.l.b16 %v4611
        %v4964 = vunpack.c.l.b16 %v4612
        %v4965 = vunpack.c.l.b16 %v4613
        %v4966 = vunpack.c.l.b16 %v4614
        %v4967 = vunpack.c.l.b16 %v4615
        %v4968 = vunpack.c.l.b16 %v4616
        %v4969 = vunpack.c.l.b16 %v4617
        %v4970 = vunpack.c.l.b16 %v4618
        %v4971 = vunpack.c.l.b16 %v4619
        %v4972 = vunpack.c.l.b16 %v4620
        %v4973 = vunpack.c.l.b16 %v4621
        %v4974 = vunpack.c.l.b16 %v4622
        %v4975 = vunpack.c.l.b16 %v4623
        %v4976 = vunpack.c.l.b16 %v4624
        %v4977 = vunpack.c.l.b16 %v4625
        %v4978 = vunpack.c.l.b16 %v4626
        %v4979 = vunpack.c.l.b16 %v4627
        %v4980 = vunpack.c.l.b16 %v4628
        %v4981 = vunpack.c.l.b16 %v4629
        %v4982 = vunpack.c.l.b16 %v4630
        %v4983 = vunpack.c.l.b16 %v4631
        %v4984 = vunpack.c.l.b16 %v4632
        %v4985 = vunpack.c.l.b16 %v4633
        %v4986 = vunpack.c.l.b16 %v4634
        %v4987 = vunpack.c.l.b16 %v4635
        %v4988 = vunpack.c.l.b16 %v4636
        %v4989 = vunpack.c.l.b16 %v4637
        %v4990 = vunpack.c.l.b16 %v4638
        %v4991 = vunpack.c.l.b16 %v4639
        %v4992 = vunpack.c.l.b16 %v4640
        %v4993 = vunpack.c.l.b16 %v4641
        %v4994 = vunpack.c.l.b16 %v4642
        %v4995 = vunpack.c.l.b16 %v4643
        %v4996 = vunpack.c.l.b16 %v4644
        %v4997 = vunpack.c.l.b16 %v4645
        %v4998 = vunpack.c.l.b16 %v4646
        %v4999 = vunpack.c.l.b16 %v4647
        %v5000 = vunpack.c.l.b16 %v4648
        %v5001 = vunpack.c.l.b16 %v4649
        %v5002 = vpack.c.b16 %v4827, %v4826
        %v5003 = vpack.c.b16 %v4829, %v4828
        %v5004 = vpack.c.b16 %v4831, %v4830
        %v5005 = vpack.c.b16 %v4833, %v4832
        %v5006 = vpack.c.b16 %v4835, %v4834
        %v5007 = vpack.c.b16 %v4837, %v4836
        %v5008 = vpack.c.b16 %v4839, %v4838
        %v5009 = vpack.c.b16 %v4841, %v4840
        %v5010 = vpack.c.b16 %v4843, %v4842
        %v5011 = vpack.c.b16 %v4845, %v4844
        %v5012 = vpack.c.b16 %v4847, %v4846
        %v5013 = vpack.c.b16 %v4849, %v4848
        %v5014 = vpack.c.b16 %v4851, %v4850
        %v5015 = vpack.c.b16 %v4853, %v4852
        %v5016 = vpack.c.b16 %v4855, %v4854
        %v5017 = vpack.c.b16 %v4857, %v4856
        %v5018 = vpack.c.b16 %v4859, %v4858
        %v5019 = vpack.c.b16 %v4861, %v4860
        %v5020 = vpack.c.b16 %v4863, %v4862
        %v5021 = vpack.c.b16 %v4865, %v4864
        %v5022 = vpack.c.b16 %v4867, %v4866
        %v5023 = vpack.c.b16 %v4869, %v4868
        %v5024 = vpack.c.b16 %v4871, %v4870
        %v5025 = vpack.c.b16 %v4873, %v4872
        %v5026 = vpack.c.b16 %v4875, %v4874
        %v5027 = vpack.c.b16 %v4877, %v4876
        %v5028 = vpack.c.b16 %v4879, %v4878
        %v5029 = vpack.c.b16 %v4881, %v4880
        %v5030 = vpack.c.b16 %v4883, %v4882
        %v5031 = vpack.c.b16 %v4885, %v4884
        %v5032 = vpack.c.b16 %v4887, %v4886
        %v5033 = vpack.c.b16 %v4889, %v4888
        %v5034 = vpack.c.b16 %v4891, %v4890
        %v5035 = vpack.c.b16 %v4893, %v4892
        %v5036 = vpack.c.b16 %v4895, %v4894
        %v5037 = vpack.c.b16 %v4897, %v4896
        %v5038 = vpack.c.b16 %v4899, %v4898
        %v5039 = vpack.c.b16 %v4901, %v4900
        %v5040 = vpack.c.b16 %v4903, %v4902
        %v5041 = vpack.c.b16 %v4905, %v4904
        %v5042 = vpack.c.b16 %v4907, %v4906
        %v5043 = vpack.c.b16 %v4909, %v4908
        %v5044 = vpack.c.b16 %v4911, %v4910
        %v5045 = vpack.c.b16 %v4913, %v4912
        %v5046 = vpack.c.b16 %v4915, %v4914
        %v5047 = vpack.c.b16 %v4917, %v4916
        %v5048 = vpack.c.b16 %v4919, %v4918
        %v5049 = vpack.c.b16 %v4921, %v4920
        %v5050 = vpack.c.b16 %v4923, %v4922
        %v5051 = vpack.c.b16 %v4925, %v4924
        %v5052 = vpack.c.b16 %v4927, %v4926
        %v5053 = vpack.c.b16 %v4929, %v4928
        %v5054 = vpack.c.b16 %v4931, %v4930
        %v5055 = vpack.c.b16 %v4933, %v4932
        %v5056 = vpack.c.b16 %v4935, %v4934
        %v5057 = vpack.c.b16 %v4937, %v4936
        %v5058 = vpack.c.b16 %v4939, %v4938
        %v5059 = vpack.c.b16 %v4941, %v4940
        %v5060 = vpack.c.b16 %v4943, %v4942
        %v5061 = vpack.c.b16 %v4945, %v4944
        %v5062 = vpack.c.b16 %v4947, %v4946
        %v5063 = vpack.c.b16 %v4949, %v4948
        %v5064 = vpack.c.b16 %v4951, %v4950
        %v5065 = vpack.c.b16 %v4953, %v4952
        %v5066 = vpack.c.b16 %v4955, %v4954
        %v5067 = vpack.c.b16 %v4957, %v4956
        %v5068 = vpack.c.b16 %v4959, %v4958
        %v5069 = vpack.c.b16 %v4961, %v4960
        %v5070 = vpack.c.b16 %v4963, %v4962
        %v5071 = vpack.c.b16 %v4965, %v4964
        %v5072 = vpack.c.b16 %v4967, %v4966
        %v5073 = vpack.c.b16 %v4969, %v4968
        %v5074 = vpack.c.b16 %v4971, %v4970
        %v5075 = vpack.c.b16 %v4973, %v4972
        %v5076 = vpack.c.b16 %v4975, %v4974
        %v5077 = vpack.c.b16 %v4977, %v4976
        %v5078 = vpack.c.b16 %v4979, %v4978
        %v5079 = vpack.c.b16 %v4981, %v4980
        %v5080 = vpack.c.b16 %v4983, %v4982
        %v5081 = vpack.c.b16 %v4985, %v4984
        %v5082 = vpack.c.b16 %v4987, %v4986
        %v5083 = vpack.c.b16 %v4989, %v4988
        %v5084 = vpack.c.b16 %v4991, %v4990
        %v5085 = vpack.c.b16 %v4993, %v4992
        %v5086 = vpack.c.b16 %v4995, %v4994
        %v5087 = vpack.c.b16 %v4997, %v4996
        %v5088 = vpack.c.b16 %v4999, %v4998
        %v5089 = vpack.c.b16 %v5001, %v5000
        %5178 = vmatpush.bf16.msra.mxu0 %v5009
        %5179 = vmatpush.bf16.msra.mxu0 %v5008
        %5180 = vmatpush.bf16.msra.mxu0 %v5007
        %5181 = vmatpush.bf16.msra.mxu0 %v5006
        %5182 = vmatpush.bf16.msra.mxu0 %v5005
        %5183 = vmatpush.bf16.msra.mxu0 %v5004
        %5184 = vmatpush.bf16.msra.mxu0 %v5003
        %5185 = vmatpush.bf16.msra.mxu0 %v5002
        %5186 = vmatmul.bf16.gmra.mxu0 %v4463
        %v5187 = vpop.f32.mrf.mxu0
        %v5188 = vadd.f32 0.0, %v5187
        %v5189 = vpop.f32.mrf.mxu0
        %5190 = vdwg.mxu0
        %5191 = vmatpush.bf16.msra.mxu0 %v5017
        %5192 = vmatpush.bf16.msra.mxu0 %v5016
        %5193 = vmatpush.bf16.msra.mxu0 %v5015
        %5194 = vmatpush.bf16.msra.mxu0 %v5014
        %5195 = vmatpush.bf16.msra.mxu0 %v5013
        %5196 = vmatpush.bf16.msra.mxu0 %v5012
        %5197 = vmatpush.bf16.msra.mxu0 %v5011
        %5198 = vmatpush.bf16.msra.mxu0 %v5010
        %5199 = vmatmul.bf16.gmra.mxu0 %v4464
        %v5200 = vpop.f32.mrf.mxu0
        %v5201 = vadd.f32 %v5188, %v5200
        %v5202 = vpop.f32.mrf.mxu0
        %5203 = vdwg.mxu0
        %5204 = vmatpush.bf16.msra.mxu0 %v5025
        %5205 = vmatpush.bf16.msra.mxu0 %v5024
        %5206 = vmatpush.bf16.msra.mxu0 %v5023
        %5207 = vmatpush.bf16.msra.mxu0 %v5022
        %5208 = vmatpush.bf16.msra.mxu0 %v5021
        %5209 = vmatpush.bf16.msra.mxu0 %v5020
        %5210 = vmatpush.bf16.msra.mxu0 %v5019
        %5211 = vmatpush.bf16.msra.mxu0 %v5018
        %5212 = vmatmul.bf16.gmra.mxu0 %v4465
        %v5213 = vpop.f32.mrf.mxu0
        %v5214 = vadd.f32 %v5201, %v5213
        %v5215 = vpop.f32.mrf.mxu0
        %5216 = vdwg.mxu0
        %5217 = vmatpush.bf16.msra.mxu0 %v5033
        %5218 = vmatpush.bf16.msra.mxu0 %v5032
        %5219 = vmatpush.bf16.msra.mxu0 %v5031
        %5220 = vmatpush.bf16.msra.mxu0 %v5030
        %5221 = vmatpush.bf16.msra.mxu0 %v5029
        %5222 = vmatpush.bf16.msra.mxu0 %v5028
        %5223 = vmatpush.bf16.msra.mxu0 %v5027
        %5224 = vmatpush.bf16.msra.mxu0 %v5026
        %5225 = vmatmul.bf16.gmra.mxu0 %v4466
        %v5226 = vpop.f32.mrf.mxu0
        %v5227 = vadd.f32 %v5214, %v5226
        %v5228 = vpop.f32.mrf.mxu0
        %5229 = vdwg.mxu0
        %5230 = vmatpush.bf16.msra.mxu0 %v5041
        %5231 = vmatpush.bf16.msra.mxu0 %v5040
        %5232 = vmatpush.bf16.msra.mxu0 %v5039
        %5233 = vmatpush.bf16.msra.mxu0 %v5038
        %5234 = vmatpush.bf16.msra.mxu0 %v5037
        %5235 = vmatpush.bf16.msra.mxu0 %v5036
        %5236 = vmatpush.bf16.msra.mxu0 %v5035
        %5237 = vmatpush.bf16.msra.mxu0 %v5034
        %5238 = vmatmul.bf16.gmra.mxu0 %v4467
        %v5239 = vpop.f32.mrf.mxu0
        %v5240 = vadd.f32 %v5227, %v5239
        %v5241 = vpop.f32.mrf.mxu0
        %5242 = vdwg.mxu0
        %5243 = vmatpush.bf16.msra.mxu0 %v5049
        %5244 = vmatpush.bf16.msra.mxu0 %v5048
        %5245 = vmatpush.bf16.msra.mxu0 %v5047
        %5246 = vmatpush.bf16.msra.mxu0 %v5046
        %5247 = vmatpush.bf16.msra.mxu0 %v5045
        %5248 = vmatpush.bf16.msra.mxu0 %v5044
        %5249 = vmatpush.bf16.msra.mxu0 %v5043
        %5250 = vmatpush.bf16.msra.mxu0 %v5042
        %5251 = vmatmul.bf16.gmra.mxu0 %v4468
        %v5252 = vpop.f32.mrf.mxu0
        %v5253 = vadd.f32 %v5240, %v5252
        %v5254 = vpop.f32.mrf.mxu0
        %5255 = vdwg.mxu0
        %5256 = vmatpush.bf16.msra.mxu0 %v5057
        %5257 = vmatpush.bf16.msra.mxu0 %v5056
        %5258 = vmatpush.bf16.msra.mxu0 %v5055
        %5259 = vmatpush.bf16.msra.mxu0 %v5054
        %5260 = vmatpush.bf16.msra.mxu0 %v5053
        %5261 = vmatpush.bf16.msra.mxu0 %v5052
        %5262 = vmatpush.bf16.msra.mxu0 %v5051
        %5263 = vmatpush.bf16.msra.mxu0 %v5050
        %5264 = vmatmul.bf16.gmra.mxu0 %v4469
        %v5265 = vpop.f32.mrf.mxu0
        %v5266 = vadd.f32 %v5253, %v5265
        %v5267 = vpop.f32.mrf.mxu0
        %5268 = vdwg.mxu0
        %5269 = vmatpush.bf16.msra.mxu0 %v5065
        %5270 = vmatpush.bf16.msra.mxu0 %v5064
        %5271 = vmatpush.bf16.msra.mxu0 %v5063
        %5272 = vmatpush.bf16.msra.mxu0 %v5062
        %5273 = vmatpush.bf16.msra.mxu0 %v5061
        %5274 = vmatpush.bf16.msra.mxu0 %v5060
        %5275 = vmatpush.bf16.msra.mxu0 %v5059
        %5276 = vmatpush.bf16.msra.mxu0 %v5058
        %5277 = vmatmul.bf16.gmra.mxu0 %v4470
        %v5278 = vpop.f32.mrf.mxu0
        %v5279 = vadd.f32 %v5266, %v5278
        %v5280 = vpop.f32.mrf.mxu0
        %5281 = vdwg.mxu0
        %5282 = vmatpush.bf16.msra.mxu0 %v5073
        %5283 = vmatpush.bf16.msra.mxu0 %v5072
        %5284 = vmatpush.bf16.msra.mxu0 %v5071
        %5285 = vmatpush.bf16.msra.mxu0 %v5070
        %5286 = vmatpush.bf16.msra.mxu0 %v5069
        %5287 = vmatpush.bf16.msra.mxu0 %v5068
        %5288 = vmatpush.bf16.msra.mxu0 %v5067
        %5289 = vmatpush.bf16.msra.mxu0 %v5066
        %5290 = vmatmul.bf16.gmra.mxu0 %v4471
        %v5291 = vpop.f32.mrf.mxu0
        %v5292 = vadd.f32 %v5279, %v5291
        %v5293 = vpop.f32.mrf.mxu0
        %5294 = vdwg.mxu0
        %5295 = vmatpush.bf16.msra.mxu0 %v5081
        %5296 = vmatpush.bf16.msra.mxu0 %v5080
        %5297 = vmatpush.bf16.msra.mxu0 %v5079
        %5298 = vmatpush.bf16.msra.mxu0 %v5078
        %5299 = vmatpush.bf16.msra.mxu0 %v5077
        %5300 = vmatpush.bf16.msra.mxu0 %v5076
        %5301 = vmatpush.bf16.msra.mxu0 %v5075
        %5302 = vmatpush.bf16.msra.mxu0 %v5074
        %5303 = vmatmul.bf16.gmra.mxu0 %v4472
        %v5304 = vpop.f32.mrf.mxu0
        %v5305 = vadd.f32 %v5292, %v5304
        %v5306 = vpop.f32.mrf.mxu0
        %5307 = vdwg.mxu0
        %5308 = vmatpush.bf16.msra.mxu0 %v5089
        %5309 = vmatpush.bf16.msra.mxu0 %v5088
        %5310 = vmatpush.bf16.msra.mxu0 %v5087
        %5311 = vmatpush.bf16.msra.mxu0 %v5086
        %5312 = vmatpush.bf16.msra.mxu0 %v5085
        %5313 = vmatpush.bf16.msra.mxu0 %v5084
        %5314 = vmatpush.bf16.msra.mxu0 %v5083
        %5315 = vmatpush.bf16.msra.mxu0 %v5082
        %5316 = vmatmul.bf16.gmra.mxu0 %v4473
        %v5317 = vpop.f32.mrf.mxu0
        %v5318 = vadd.f32 %v5305, %v5317
        %v5319 = vpop.f32.mrf.mxu0
        %5320 = vdwg.mxu0
        %v5321 = vadd.f32 %v4462, %v5318
        %5322 = vst [vmem:[%s5] sm:$0xff] %v5321
        %p5323 = scmp.eq.s32.totalorder %s19, 1
        // Predicated region
        $region49: #{text_encoder_forward.1} parent=39 // pred_check
          %p5324 = pneg %p5323
        $region50: #{text_encoder_forward.1} parent=39 // pred_check_branch
          %5326 = sbr.rel (%p5324) target = $region52
        $region51: #{text_encoder_forward.1} parent=39 // pred_region
          %v5327 = vld [vmem:[%s5] sm:$0xff]
          %v5328 = vld [vmem:[%s4] sm:$0x1]
          %v5330 = vperm.slane %v5328, 0
          %v5332 = vadd.f32 %v5327, %v5330
          %v5333 = vmax.f32 %v5332, 0.0
          %5334 = vst [vmem:[%s5] sm:$0xff] %v5333
        $region52: #{text_encoder_forward.1} parent=39 // pred_fallthru
          _
        // Predicated region
        $region53: #{text_encoder_forward.1} parent=39 // pred_check
          %p5335 = pneg %p152
        $region54: #{text_encoder_forward.1} parent=39 // pred_check_branch
          %5337 = sbr.rel (%p5335) target = $region56
        $region55: #{text_encoder_forward.1} parent=39 // pred_region
          _
        $region56: #{text_encoder_forward.1} parent=39 // pred_fallthru
          _
        // Predicated region
        $region57: #{text_encoder_forward.1} parent=39 // pred_check
          %p5338 = pneg %p152
        $region58: #{text_encoder_forward.1} parent=39 // pred_check_branch
          %5340 = sbr.rel (%p5338) target = $region60
        $region59: #{text_encoder_forward.1} parent=39 // pred_region
          _
        $region60: #{text_encoder_forward.1} parent=39 // pred_fallthru
          _
      $region40: #{text_encoder_forward.1} parent=5 // pred_fallthru
        _
      %p5341 = scmp.le.s32.totalorder 2, %s14
      // Predicated region
      $region61: #{text_encoder_forward.1} parent=5 // pred_check
        %p5342 = pneg %p5341
      $region62: #{text_encoder_forward.1} parent=5 // pred_check_branch
        %5344 = sbr.rel (%p5342) target = $region64
      $region63: #{text_encoder_forward.1} parent=5 // pred_region
        %s5345 = ssub.s32 %s14, 2
      $region64: #{text_encoder_forward.1} parent=5 // pred_fallthru
        _
    $region6: #{text_encoder_forward.1} parent=1 // loop_footer
      %s18 = sadd.s32 1, %s14
    $region7: #{text_encoder_forward.1} parent=1 // loop_footer_branch
      %13 = sbr.rel target = $region3
    $region8: #{text_encoder_forward.1} parent=1 // loop_exit
      _
    %5346 = vsyncpa [#allocation3], 1
    %s5347 = scalar_lea.sflag [#allocation3], 1
    %5348 = vsyncpa %s5347, 1

</llo_original>
